<compile_context>
chip_gen: v5e
topology: v5e:2x2
jax: 0.10.0
libtpu: 0.0.40
codegen_flags: <defaults>
</compile_context>

<pallas_src>
import functools

import jax
import jax.numpy as jnp
import numpy as np
from jax.experimental import pallas as pl
from jax.experimental.pallas import tpu as pltpu

STACK_SIZE = 5

_VMEM = pl.BlockSpec(memory_space=pltpu.MemorySpace.VMEM)


# ---------------------------------------------------------------------------
# Pallas kernels
# ---------------------------------------------------------------------------
def _conv_bn_relu_kernel(p_ref, w_ref, g_ref, b_ref, o_ref, *, m_valid, eps):
    # patches (Mp, K) bf16  @  w (K, C) bf16  ->  f32 acc, then BatchNorm (batch
    # statistics over the m_valid real rows, biased variance) + ReLU, store bf16.
    acc = jnp.dot(p_ref[...], w_ref[...], preferred_element_type=jnp.float32)
    inv_m = 1.0 / m_valid
    # Padded rows of the patch matrix are zero, so their matmul rows are exactly 0
    # and do not perturb the sum; only the centered term needs masking.
    mean = jnp.sum(acc, axis=0, keepdims=True) * inv_m
    xc = acc - mean
    if m_valid < acc.shape[0]:
        rows = jax.lax.broadcasted_iota(jnp.int32, acc.shape, 0)
        xs = jnp.where(rows < m_valid, xc, 0.0)
    else:
        xs = xc
    var = jnp.sum(xs * xs, axis=0, keepdims=True) * inv_m
    y = xc * jax.lax.rsqrt(var + eps) * g_ref[...] + b_ref[...]
    o_ref[...] = jnp.maximum(y, 0.0).astype(o_ref.dtype)


def _conv3_linear_head_kernel(p3_ref, w3_ref, b3_ref, lw_ref, lb_ref,
                              hw_ref, hb_ref, o_ref, *, n_pos):
    # p3: (P, N, K3) bf16 conv3 patches (rows grouped by output position p),
    # w3: (K3, 64) bf16, b3: (1, 64) f32,
    # lw: (P, 64, H) bf16 (lin_w rows pre-permuted to absorb the NCHW flatten),
    # lb: (1, H) f32, hw: (H, 128) bf16 (head weight, zero-padded lanes), hb: (1, 128).
    w3 = w3_ref[...]
    b3 = b3_ref[...]
    n = p3_ref.shape[1]
    hidden = lw_ref.shape[2]
    acc = jnp.zeros((n, hidden), jnp.float32)
    for p in range(n_pos):                                   # static, P = 4
        c = jnp.dot(p3_ref[p], w3, preferred_element_type=jnp.float32) + b3
        c = jnp.maximum(c, 0.0).astype(jnp.bfloat16)         # conv3 + bias + relu
        acc = acc + jnp.dot(c, lw_ref[p], preferred_element_type=jnp.float32)
    h = jnp.maximum(acc + lb_ref[...], 0.0).astype(jnp.bfloat16)   # linear + relu
    o_ref[...] = jnp.dot(h, hw_ref[...], preferred_element_type=jnp.float32) + hb_ref[...]


def conv_bn_relu(patches, w, gamma, beta, *, m_valid, eps=1e-5):
    m, _ = patches.shape
    n = w.shape[1]
    return pl.pallas_call(
        functools.partial(_conv_bn_relu_kernel, m_valid=m_valid, eps=eps),
        out_shape=jax.ShapeDtypeStruct((m, n), jnp.bfloat16),
        in_specs=[_VMEM, _VMEM, _VMEM, _VMEM],
        out_specs=_VMEM,
    )(patches, w, gamma, beta)


def conv3_linear_head(p3, w3, b3, lw, lb, hw, hb):
    n = p3.shape[1]
    n_out = hw.shape[1]
    return pl.pallas_call(
        functools.partial(_conv3_linear_head_kernel, n_pos=p3.shape[0]),
        out_shape=jax.ShapeDtypeStruct((n, n_out), jnp.float32),
        in_specs=[_VMEM] * 7,
        out_specs=_VMEM,
    )(p3, w3, b3, lw, lb, hw, hb)


# ---------------------------------------------------------------------------
# Conv lowering glue (im2col) — pure static slicing / reshapes in plain JAX.
# TODO(synk): the im2col patch gather stays as XLA slice/stack glue; doing it
# in-kernel would need strided window reads that Mosaic handles poorly at
# these tiny shapes.
# ---------------------------------------------------------------------------
def conv_out_size(size, k, s):
    return (size - (k - 1) - 1) // s + 1


def im2col(x_nhwc, k, s, *, spatial_major=False):
    N, H, W, C = x_nhwc.shape
    Ho = conv_out_size(H, k, s)
    Wo = conv_out_size(W, k, s)
    cols = []
    for i in range(k):
        for j in range(k):
            cols.append(
                jax.lax.slice(
                    x_nhwc,
                    (0, i, j, 0),
                    (N, i + s * (Ho - 1) + 1, j + s * (Wo - 1) + 1, C),
                    (1, s, s, 1),
                )  # (N, Ho, Wo, C)
            )
    patches = jnp.stack(cols, axis=3)                        # (N, Ho, Wo, k*k, C)
    if spatial_major:
        patches = jnp.transpose(patches, (1, 2, 0, 3, 4))    # (Ho, Wo, N, k*k, C)
    return patches.reshape(-1, k * k * C), Ho, Wo


# ---------------------------------------------------------------------------
# Parameters: synthetic torch-shaped init + one-time matmul-layout preparation.
# ---------------------------------------------------------------------------
def init_params(key, h, w, outputs):
    keys = jax.random.split(key, 10)

    def u(k, shape, fan_in):
        bound = 1.0 / np.sqrt(fan_in)
        return jax.random.uniform(k, shape, jnp.float32, -bound, bound)

    convw = conv_out_size(conv_out_size(conv_out_size(w, 8, 4), 4, 2), 3, 1)
    convh = conv_out_size(conv_out_size(conv_out_size(h, 8, 4), 4, 2), 3, 1)
    lin_in = convw * convh * 64

    return {
        "conv1_w": u(keys[0], (32, STACK_SIZE, 8, 8), STACK_SIZE * 8 * 8),
        "conv1_b": u(keys[1], (32,), STACK_SIZE * 8 * 8),
        "bn1_g": jnp.ones((32,), jnp.float32),
        "bn1_b": jnp.zeros((32,), jnp.float32),
        "conv2_w": u(keys[2], (64, 32, 4, 4), 32 * 4 * 4),
        "conv2_b": u(keys[3], (64,), 32 * 4 * 4),
        "bn2_g": jnp.ones((64,), jnp.float32),
        "bn2_b": jnp.zeros((64,), jnp.float32),
        "conv3_w": u(keys[4], (64, 64, 3, 3), 64 * 3 * 3),
        "conv3_b": u(keys[5], (64,), 64 * 3 * 3),
        "lin_w": u(keys[6], (512, lin_in), lin_in),
        "lin_b": u(keys[7], (512,), lin_in),
        "head_w": u(keys[8], (outputs, 512), 512),
        "head_b": u(keys[9], (outputs,), 512),
    }


def prepare_params(params):
    """One-time re-layout of weights into matmul-ready (bf16) form."""
    f32, bf16 = jnp.float32, jnp.bfloat16

    # conv1: standard im2col layout (kh, kw, cin) x cout  (fallback path)
    w1t = jnp.transpose(params["conv1_w"], (2, 3, 1, 0))          # (8, 8, 5, 32)
    w1_std = w1t.reshape(-1, 32).astype(bf16)                      # (320, 32)
    # conv1: space-to-depth layout (bi, bj, di, dj, cin) x cout  (main path)
    t = w1t.reshape(2, 4, 2, 4, STACK_SIZE, 32)                    # (bi, di, bj, dj, c, co)
    w1_s2d = jnp.transpose(t, (0, 2, 1, 3, 4, 5)).reshape(-1, 32).astype(bf16)

    w2 = jnp.transpose(params["conv2_w"], (2, 3, 1, 0)).reshape(-1, 64).astype(bf16)
    w3 = jnp.transpose(params["conv3_w"], (2, 3, 1, 0)).reshape(-1, 64).astype(bf16)
    b3 = params["conv3_b"].reshape(1, -1).astype(f32)

    # linear: permute rows so the kernel consumes the conv3 output per spatial
    # position (NHWC-style) while matching torch's NCHW flatten exactly.
    lin_w = params["lin_w"]                                        # (512, 64*P)
    hidden, lin_in = lin_w.shape
    n_pos = lin_in // 64
    lw = lin_w.T.reshape(64, n_pos, hidden)                        # rows j = c*P + p
    lw = jnp.transpose(lw, (1, 0, 2)).astype(bf16)                 # (P, 64, 512)
    lb = params["lin_b"].reshape(1, -1).astype(f32)

    # head: transpose + zero-pad output lanes to a multiple of 128 (dense stores).
    outputs = params["head_w"].shape[0]
    n_pad = ((outputs + 127) // 128) * 128
    hw = jnp.zeros((hidden, n_pad), f32).at[:, :outputs].set(params["head_w"].T).astype(bf16)
    hb = jnp.zeros((1, n_pad), f32).at[0, :outputs].set(params["head_b"])

    return {
        "w1_s2d": w1_s2d, "w1_std": w1_std,
        "g1": params["bn1_g"].reshape(1, -1).astype(f32),
        "b1": params["bn1_b"].reshape(1, -1).astype(f32),
        "w2": w2,
        "g2": params["bn2_g"].reshape(1, -1).astype(f32),
        "b2": params["bn2_b"].reshape(1, -1).astype(f32),
        "w3": w3, "b3": b3,
        "lw": lw, "lb": lb,
        "hw": hw, "hb": hb,
    }
    # Note: conv1_b / conv2_b are intentionally unused — a per-channel constant
    # added before training-mode BatchNorm is cancelled exactly by the mean
    # subtraction, so dropping it preserves the forward semantics bit-for-bit
    # (up to fp rounding).


# ---------------------------------------------------------------------------
# Forward
# ---------------------------------------------------------------------------
def _pad_rows(p, mult=16):
    m = p.shape[0]
    mp = -(-m // mult) * mult
    if mp != m:
        p = jnp.pad(p, ((0, mp - m), (0, 0)))
    return p, m


def dqn_forward(prep, x_nchw, *, outputs):
    x = jnp.transpose(x_nchw, (0, 2, 3, 1)).astype(jnp.bfloat16)   # NHWC, bf16 operands
    N, H, W, C = x.shape

    # conv1 (k=8, s=4) + bn1 + relu
    if H % 4 == 0 and W % 4 == 0:
        # space-to-depth: conv(k=8, s=4) == conv(k=2, s=1) over 4x4 pixel blocks.
        xs = x.reshape(N, H // 4, 4, W // 4, 4, C)
        xs = jnp.transpose(xs, (0, 1, 3, 2, 4, 5)).reshape(N, H // 4, W // 4, 16 * C)
        p1, Ho, Wo = im2col(xs, 2, 1)
        w1 = prep["w1_s2d"]
    else:
        p1, Ho, Wo = im2col(x, 8, 4)
        w1 = prep["w1_std"]
    p1, m1 = _pad_rows(p1)                                          # 242 -> 256 rows
    y = conv_bn_relu(p1, w1, prep["g1"], prep["b1"], m_valid=m1)
    x = y[:m1].reshape(N, Ho, Wo, 32)

    # conv2 (k=4, s=2) + bn2 + relu
    p2, Ho, Wo = im2col(x, 4, 2)
    p2, m2 = _pad_rows(p2)
    y = conv_bn_relu(p2, prep["w2"], prep["g2"], prep["b2"], m_valid=m2)
    x = y[:m2].reshape(N, Ho, Wo, 64)

    # conv3 + relu + linear + relu + head — one fused kernel, hidden stays in VMEM.
    p3, Ho, Wo = im2col(x, 3, 1, spatial_major=True)                # rows ordered (p, n)
    p3 = p3.reshape(Ho * Wo, N, -1)                                 # (P, N, 576)
    out = conv3_linear_head(p3, prep["w3"], prep["b3"],
                            prep["lw"], prep["lb"], prep["hw"], prep["hb"])
    return out[:, :outputs]


if __name__ == "__main__":
    key = jax.random.PRNGKey(0)
    kx, kp = jax.random.split(key)

    B, H, W, OUTPUTS = 2, 48, 48, 7
    x = jax.random.normal(kx, (B, STACK_SIZE, H, W), jnp.float32)   # NCHW input
    params = init_params(kp, H, W, OUTPUTS)
    prep = prepare_params(params)                                   # one-time, hoisted

    fwd = jax.jit(dqn_forward, static_argnames=("outputs",))
    out = fwd(prep, x, outputs=OUTPUTS)
    out = jax.block_until_ready(out)
    assert out.shape == (B, OUTPUTS) and out.dtype == jnp.float32
    print("KERNEL_OK")
</pallas_src>

<mosaic_0001>
module attributes {stable_mosaic.version = 11 : i64} {
  func.func @_conv_bn_relu_kernel(%arg0: memref<256x320xbf16, #tpu.memory_space<vmem>>, %arg1: memref<320x32xbf16, #tpu.memory_space<vmem>>, %arg2: memref<1x32xf32, #tpu.memory_space<vmem>>, %arg3: memref<1x32xf32, #tpu.memory_space<vmem>>, %arg4: memref<256x32xbf16, #tpu.memory_space<vmem>>) attributes {dimension_semantics = [], scalar_prefetch = 0 : i64, scratch_operands = 0 : i64, tpu.core_type = #tpu.core_type<tc>} {
    %c0 = arith.constant 0 : index
    %c0_0 = arith.constant 0 : index
    %0 = vector.load %arg0[%c0, %c0_0] : memref<256x320xbf16, #tpu.memory_space<vmem>>, vector<256x320xbf16>
    %c0_1 = arith.constant 0 : index
    %c0_2 = arith.constant 0 : index
    %1 = vector.load %arg1[%c0_1, %c0_2] : memref<320x32xbf16, #tpu.memory_space<vmem>>, vector<320x32xbf16>
    %cst = arith.constant dense<0.000000e+00> : vector<256x32xf32>
    %2 = tpu.matmul %0, %1, %cst {dimension_numbers = #tpu.dot_dimension_numbers<[1], [0], [0], [1], [0, 0, 1, 1], [], []>} : vector<256x320xbf16>, vector<320x32xbf16>, vector<256x32xf32> -> vector<256x32xf32>
    %cst_3 = arith.constant dense<0.000000e+00> : vector<32xf32>
    %3 = vector.multi_reduction <add>, %2, %cst_3 [0] : vector<256x32xf32> to vector<32xf32>
    %4 = vector.shape_cast %3 : vector<32xf32> to vector<1x32xf32>
    %cst_4 = arith.constant 0.00413223123 : f32
    %5 = vector.broadcast %cst_4 : f32 to vector<1x32xf32>
    %6 = arith.mulf %4, %5 : vector<1x32xf32>
    %7 = vector.broadcast %6 : vector<1x32xf32> to vector<256x32xf32>
    %8 = arith.subf %2, %7 : vector<256x32xf32>
    %9 = tpu.iota {dimensions = array<i32: 0>} : vector<256x32xi32>
    %c242_i32 = arith.constant 242 : i32
    %10 = vector.broadcast %c242_i32 : i32 to vector<256x32xi32>
    %11 = arith.cmpi slt, %9, %10 : vector<256x32xi32>
    %cst_5 = arith.constant 0.000000e+00 : f32
    %12 = vector.broadcast %cst_5 : f32 to vector<256x32xf32>
    %13 = arith.select %11, %8, %12 : vector<256x32xi1>, vector<256x32xf32>
    %14 = arith.mulf %13, %13 : vector<256x32xf32>
    %cst_6 = arith.constant dense<0.000000e+00> : vector<32xf32>
    %15 = vector.multi_reduction <add>, %14, %cst_6 [0] : vector<256x32xf32> to vector<32xf32>
    %16 = vector.shape_cast %15 : vector<32xf32> to vector<1x32xf32>
    %cst_7 = arith.constant 0.00413223123 : f32
    %17 = vector.broadcast %cst_7 : f32 to vector<1x32xf32>
    %18 = arith.mulf %16, %17 : vector<1x32xf32>
    %cst_8 = arith.constant 9.99999974E-6 : f32
    %19 = vector.broadcast %cst_8 : f32 to vector<1x32xf32>
    %20 = arith.addf %18, %19 : vector<1x32xf32>
    %21 = math.rsqrt %20 : vector<1x32xf32>
    %22 = vector.broadcast %21 : vector<1x32xf32> to vector<256x32xf32>
    %23 = arith.mulf %8, %22 : vector<256x32xf32>
    %c0_9 = arith.constant 0 : index
    %c0_10 = arith.constant 0 : index
    %24 = vector.load %arg2[%c0_9, %c0_10] : memref<1x32xf32, #tpu.memory_space<vmem>>, vector<1x32xf32>
    %25 = vector.broadcast %24 : vector<1x32xf32> to vector<256x32xf32>
    %26 = arith.mulf %23, %25 : vector<256x32xf32>
    %c0_11 = arith.constant 0 : index
    %c0_12 = arith.constant 0 : index
    %27 = vector.load %arg3[%c0_11, %c0_12] : memref<1x32xf32, #tpu.memory_space<vmem>>, vector<1x32xf32>
    %28 = vector.broadcast %27 : vector<1x32xf32> to vector<256x32xf32>
    %29 = arith.addf %26, %28 : vector<256x32xf32>
    %cst_13 = arith.constant 0.000000e+00 : f32
    %30 = vector.broadcast %cst_13 : f32 to vector<256x32xf32>
    %31 = arith.maximumf %29, %30 : vector<256x32xf32>
    %32 = arith.truncf %31 : vector<256x32xf32> to vector<256x32xbf16>
    %c0_14 = arith.constant 0 : index
    %c0_15 = arith.constant 0 : index
    %33 = vector.load %arg4[%c0_14, %c0_15] : memref<256x32xbf16, #tpu.memory_space<vmem>>, vector<256x32xbf16>
    tpu.vector_store %arg4[%c0_14, %c0_15], %32 {strides = array<i32>} : memref<256x32xbf16, #tpu.memory_space<vmem>>, vector<256x32xbf16>,
    return
  }
}

module attributes {stable_mosaic.version = 11 : i64} {
  func.func @_conv_bn_relu_kernel(%arg0: memref<32x512xbf16, #tpu.memory_space<vmem>>, %arg1: memref<512x64xbf16, #tpu.memory_space<vmem>>, %arg2: memref<1x64xf32, #tpu.memory_space<vmem>>, %arg3: memref<1x64xf32, #tpu.memory_space<vmem>>, %arg4: memref<32x64xbf16, #tpu.memory_space<vmem>>) attributes {dimension_semantics = [], scalar_prefetch = 0 : i64, scratch_operands = 0 : i64, tpu.core_type = #tpu.core_type<tc>} {
    %c0 = arith.constant 0 : index
    %c0_0 = arith.constant 0 : index
    %0 = vector.load %arg0[%c0, %c0_0] : memref<32x512xbf16, #tpu.memory_space<vmem>>, vector<32x512xbf16>
    %c0_1 = arith.constant 0 : index
    %c0_2 = arith.constant 0 : index
    %1 = vector.load %arg1[%c0_1, %c0_2] : memref<512x64xbf16, #tpu.memory_space<vmem>>, vector<512x64xbf16>
    %cst = arith.constant dense<0.000000e+00> : vector<32x64xf32>
    %2 = tpu.matmul %0, %1, %cst {dimension_numbers = #tpu.dot_dimension_numbers<[1], [0], [0], [1], [0, 0, 1, 1], [], []>} : vector<32x512xbf16>, vector<512x64xbf16>, vector<32x64xf32> -> vector<32x64xf32>
    %cst_3 = arith.constant dense<0.000000e+00> : vector<64xf32>
    %3 = vector.multi_reduction <add>, %2, %cst_3 [0] : vector<32x64xf32> to vector<64xf32>
    %4 = vector.shape_cast %3 : vector<64xf32> to vector<1x64xf32>
    %cst_4 = arith.constant 3.125000e-02 : f32
    %5 = vector.broadcast %cst_4 : f32 to vector<1x64xf32>
    %6 = arith.mulf %4, %5 : vector<1x64xf32>
    %7 = vector.broadcast %6 : vector<1x64xf32> to vector<32x64xf32>
    %8 = arith.subf %2, %7 : vector<32x64xf32>
    %9 = arith.mulf %8, %8 : vector<32x64xf32>
    %cst_5 = arith.constant dense<0.000000e+00> : vector<64xf32>
    %10 = vector.multi_reduction <add>, %9, %cst_5 [0] : vector<32x64xf32> to vector<64xf32>
    %11 = vector.shape_cast %10 : vector<64xf32> to vector<1x64xf32>
    %cst_6 = arith.constant 3.125000e-02 : f32
    %12 = vector.broadcast %cst_6 : f32 to vector<1x64xf32>
    %13 = arith.mulf %11, %12 : vector<1x64xf32>
    %cst_7 = arith.constant 9.99999974E-6 : f32
    %14 = vector.broadcast %cst_7 : f32 to vector<1x64xf32>
    %15 = arith.addf %13, %14 : vector<1x64xf32>
    %16 = math.rsqrt %15 : vector<1x64xf32>
    %17 = vector.broadcast %16 : vector<1x64xf32> to vector<32x64xf32>
    %18 = arith.mulf %8, %17 : vector<32x64xf32>
    %c0_8 = arith.constant 0 : index
    %c0_9 = arith.constant 0 : index
    %19 = vector.load %arg2[%c0_8, %c0_9] : memref<1x64xf32, #tpu.memory_space<vmem>>, vector<1x64xf32>
    %20 = vector.broadcast %19 : vector<1x64xf32> to vector<32x64xf32>
    %21 = arith.mulf %18, %20 : vector<32x64xf32>
    %c0_10 = arith.constant 0 : index
    %c0_11 = arith.constant 0 : index
    %22 = vector.load %arg3[%c0_10, %c0_11] : memref<1x64xf32, #tpu.memory_space<vmem>>, vector<1x64xf32>
    %23 = vector.broadcast %22 : vector<1x64xf32> to vector<32x64xf32>
    %24 = arith.addf %21, %23 : vector<32x64xf32>
    %cst_12 = arith.constant 0.000000e+00 : f32
    %25 = vector.broadcast %cst_12 : f32 to vector<32x64xf32>
    %26 = arith.maximumf %24, %25 : vector<32x64xf32>
    %27 = arith.truncf %26 : vector<32x64xf32> to vector<32x64xbf16>
    %c0_13 = arith.constant 0 : index
    %c0_14 = arith.constant 0 : index
    %28 = vector.load %arg4[%c0_13, %c0_14] : memref<32x64xbf16, #tpu.memory_space<vmem>>, vector<32x64xbf16>
    tpu.vector_store %arg4[%c0_13, %c0_14], %27 {strides = array<i32>} : memref<32x64xbf16, #tpu.memory_space<vmem>>, vector<32x64xbf16>,
    return
  }
}

module attributes {stable_mosaic.version = 11 : i64} {
  func.func @_conv3_linear_head_kernel(%arg0: memref<4x2x576xbf16, #tpu.memory_space<vmem>>, %arg1: memref<576x64xbf16, #tpu.memory_space<vmem>>, %arg2: memref<1x64xf32, #tpu.memory_space<vmem>>, %arg3: memref<4x64x512xbf16, #tpu.memory_space<vmem>>, %arg4: memref<1x512xf32, #tpu.memory_space<vmem>>, %arg5: memref<512x128xbf16, #tpu.memory_space<vmem>>, %arg6: memref<1x128xf32, #tpu.memory_space<vmem>>, %arg7: memref<2x128xf32, #tpu.memory_space<vmem>>) attributes {dimension_semantics = [], scalar_prefetch = 0 : i64, scratch_operands = 0 : i64, tpu.core_type = #tpu.core_type<tc>} {
    %c0 = arith.constant 0 : index
    %c0_0 = arith.constant 0 : index
    %0 = vector.load %arg1[%c0, %c0_0] : memref<576x64xbf16, #tpu.memory_space<vmem>>, vector<576x64xbf16>
    %c0_1 = arith.constant 0 : index
    %c0_2 = arith.constant 0 : index
    %1 = vector.load %arg2[%c0_1, %c0_2] : memref<1x64xf32, #tpu.memory_space<vmem>>, vector<1x64xf32>
    %cst = arith.constant 0.000000e+00 : f32
    %2 = vector.broadcast %cst : f32 to vector<2x512xf32>
    %c0_3 = arith.constant 0 : index
    %c0_4 = arith.constant 0 : index
    %c0_5 = arith.constant 0 : index
    %3 = vector.load %arg0[%c0_3, %c0_4, %c0_5] : memref<4x2x576xbf16, #tpu.memory_space<vmem>>, vector<1x2x576xbf16>
    %4 = vector.shape_cast %3 : vector<1x2x576xbf16> to vector<2x576xbf16>
    %cst_6 = arith.constant dense<0.000000e+00> : vector<2x64xf32>
    %5 = tpu.matmul %4, %0, %cst_6 {dimension_numbers = #tpu.dot_dimension_numbers<[1], [0], [0], [1], [0, 0, 1, 1], [], []>} : vector<2x576xbf16>, vector<576x64xbf16>, vector<2x64xf32> -> vector<2x64xf32>
    %6 = vector.broadcast %1 : vector<1x64xf32> to vector<2x64xf32>
    %7 = arith.addf %5, %6 : vector<2x64xf32>
    %cst_7 = arith.constant 0.000000e+00 : f32
    %8 = vector.broadcast %cst_7 : f32 to vector<2x64xf32>
    %9 = arith.maximumf %7, %8 : vector<2x64xf32>
    %10 = arith.truncf %9 : vector<2x64xf32> to vector<2x64xbf16>
    %c0_8 = arith.constant 0 : index
    %c0_9 = arith.constant 0 : index
    %c0_10 = arith.constant 0 : index
    %11 = vector.load %arg3[%c0_8, %c0_9, %c0_10] : memref<4x64x512xbf16, #tpu.memory_space<vmem>>, vector<1x64x512xbf16>
    %12 = vector.shape_cast %11 : vector<1x64x512xbf16> to vector<64x512xbf16>
    %cst_11 = arith.constant dense<0.000000e+00> : vector<2x512xf32>
    %13 = tpu.matmul %10, %12, %cst_11 {dimension_numbers = #tpu.dot_dimension_numbers<[1], [0], [0], [1], [0, 0, 1, 1], [], []>} : vector<2x64xbf16>, vector<64x512xbf16>, vector<2x512xf32> -> vector<2x512xf32>
    %14 = arith.addf %2, %13 : vector<2x512xf32>
    %c1 = arith.constant 1 : index
    %c0_12 = arith.constant 0 : index
    %c0_13 = arith.constant 0 : index
    %15 = vector.load %arg0[%c1, %c0_12, %c0_13] : memref<4x2x576xbf16, #tpu.memory_space<vmem>>, vector<1x2x576xbf16>
    %16 = vector.shape_cast %15 : vector<1x2x576xbf16> to vector<2x576xbf16>
    %cst_14 = arith.constant dense<0.000000e+00> : vector<2x64xf32>
    %17 = tpu.matmul %16, %0, %cst_14 {dimension_numbers = #tpu.dot_dimension_numbers<[1], [0], [0], [1], [0, 0, 1, 1], [], []>} : vector<2x576xbf16>, vector<576x64xbf16>, vector<2x64xf32> -> vector<2x64xf32>
    %18 = vector.broadcast %1 : vector<1x64xf32> to vector<2x64xf32>
    %19 = arith.addf %17, %18 : vector<2x64xf32>
    %cst_15 = arith.constant 0.000000e+00 : f32
    %20 = vector.broadcast %cst_15 : f32 to vector<2x64xf32>
    %21 = arith.maximumf %19, %20 : vector<2x64xf32>
    %22 = arith.truncf %21 : vector<2x64xf32> to vector<2x64xbf16>
    %c1_16 = arith.constant 1 : index
    %c0_17 = arith.constant 0 : index
    %c0_18 = arith.constant 0 : index
    %23 = vector.load %arg3[%c1_16, %c0_17, %c0_18] : memref<4x64x512xbf16, #tpu.memory_space<vmem>>, vector<1x64x512xbf16>
    %24 = vector.shape_cast %23 : vector<1x64x512xbf16> to vector<64x512xbf16>
    %cst_19 = arith.constant dense<0.000000e+00> : vector<2x512xf32>
    %25 = tpu.matmul %22, %24, %cst_19 {dimension_numbers = #tpu.dot_dimension_numbers<[1], [0], [0], [1], [0, 0, 1, 1], [], []>} : vector<2x64xbf16>, vector<64x512xbf16>, vector<2x512xf32> -> vector<2x512xf32>
    %26 = arith.addf %14, %25 : vector<2x512xf32>
    %c2 = arith.constant 2 : index
    %c0_20 = arith.constant 0 : index
    %c0_21 = arith.constant 0 : index
    %27 = vector.load %arg0[%c2, %c0_20, %c0_21] : memref<4x2x576xbf16, #tpu.memory_space<vmem>>, vector<1x2x576xbf16>
    %28 = vector.shape_cast %27 : vector<1x2x576xbf16> to vector<2x576xbf16>
    %cst_22 = arith.constant dense<0.000000e+00> : vector<2x64xf32>
    %29 = tpu.matmul %28, %0, %cst_22 {dimension_numbers = #tpu.dot_dimension_numbers<[1], [0], [0], [1], [0, 0, 1, 1], [], []>} : vector<2x576xbf16>, vector<576x64xbf16>, vector<2x64xf32> -> vector<2x64xf32>
    %30 = vector.broadcast %1 : vector<1x64xf32> to vector<2x64xf32>
    %31 = arith.addf %29, %30 : vector<2x64xf32>
    %cst_23 = arith.constant 0.000000e+00 : f32
    %32 = vector.broadcast %cst_23 : f32 to vector<2x64xf32>
    %33 = arith.maximumf %31, %32 : vector<2x64xf32>
    %34 = arith.truncf %33 : vector<2x64xf32> to vector<2x64xbf16>
    %c2_24 = arith.constant 2 : index
    %c0_25 = arith.constant 0 : index
    %c0_26 = arith.constant 0 : index
    %35 = vector.load %arg3[%c2_24, %c0_25, %c0_26] : memref<4x64x512xbf16, #tpu.memory_space<vmem>>, vector<1x64x512xbf16>
    %36 = vector.shape_cast %35 : vector<1x64x512xbf16> to vector<64x512xbf16>
    %cst_27 = arith.constant dense<0.000000e+00> : vector<2x512xf32>
    %37 = tpu.matmul %34, %36, %cst_27 {dimension_numbers = #tpu.dot_dimension_numbers<[1], [0], [0], [1], [0, 0, 1, 1], [], []>} : vector<2x64xbf16>, vector<64x512xbf16>, vector<2x512xf32> -> vector<2x512xf32>
    %38 = arith.addf %26, %37 : vector<2x512xf32>
    %c3 = arith.constant 3 : index
    %c0_28 = arith.constant 0 : index
    %c0_29 = arith.constant 0 : index
    %39 = vector.load %arg0[%c3, %c0_28, %c0_29] : memref<4x2x576xbf16, #tpu.memory_space<vmem>>, vector<1x2x576xbf16>
    %40 = vector.shape_cast %39 : vector<1x2x576xbf16> to vector<2x576xbf16>
    %cst_30 = arith.constant dense<0.000000e+00> : vector<2x64xf32>
    %41 = tpu.matmul %40, %0, %cst_30 {dimension_numbers = #tpu.dot_dimension_numbers<[1], [0], [0], [1], [0, 0, 1, 1], [], []>} : vector<2x576xbf16>, vector<576x64xbf16>, vector<2x64xf32> -> vector<2x64xf32>
    %42 = vector.broadcast %1 : vector<1x64xf32> to vector<2x64xf32>
    %43 = arith.addf %41, %42 : vector<2x64xf32>
    %cst_31 = arith.constant 0.000000e+00 : f32
    %44 = vector.broadcast %cst_31 : f32 to vector<2x64xf32>
    %45 = arith.maximumf %43, %44 : vector<2x64xf32>
    %46 = arith.truncf %45 : vector<2x64xf32> to vector<2x64xbf16>
    %c3_32 = arith.constant 3 : index
    %c0_33 = arith.constant 0 : index
    %c0_34 = arith.constant 0 : index
    %47 = vector.load %arg3[%c3_32, %c0_33, %c0_34] : memref<4x64x512xbf16, #tpu.memory_space<vmem>>, vector<1x64x512xbf16>
    %48 = vector.shape_cast %47 : vector<1x64x512xbf16> to vector<64x512xbf16>
    %cst_35 = arith.constant dense<0.000000e+00> : vector<2x512xf32>
    %49 = tpu.matmul %46, %48, %cst_35 {dimension_numbers = #tpu.dot_dimension_numbers<[1], [0], [0], [1], [0, 0, 1, 1], [], []>} : vector<2x64xbf16>, vector<64x512xbf16>, vector<2x512xf32> -> vector<2x512xf32>
    %50 = arith.addf %38, %49 : vector<2x512xf32>
    %c0_36 = arith.constant 0 : index
    %c0_37 = arith.constant 0 : index
    %51 = vector.load %arg4[%c0_36, %c0_37] : memref<1x512xf32, #tpu.memory_space<vmem>>, vector<1x512xf32>
    %52 = vector.broadcast %51 : vector<1x512xf32> to vector<2x512xf32>
    %53 = arith.addf %50, %52 : vector<2x512xf32>
    %cst_38 = arith.constant 0.000000e+00 : f32
    %54 = vector.broadcast %cst_38 : f32 to vector<2x512xf32>
    %55 = arith.maximumf %53, %54 : vector<2x512xf32>
    %56 = arith.truncf %55 : vector<2x512xf32> to vector<2x512xbf16>
    %c0_39 = arith.constant 0 : index
    %c0_40 = arith.constant 0 : index
    %57 = vector.load %arg5[%c0_39, %c0_40] : memref<512x128xbf16, #tpu.memory_space<vmem>>, vector<512x128xbf16>
    %cst_41 = arith.constant dense<0.000000e+00> : vector<2x128xf32>
    %58 = tpu.matmul %56, %57, %cst_41 {dimension_numbers = #tpu.dot_dimension_numbers<[1], [0], [0], [1], [0, 0, 1, 1], [], []>} : vector<2x512xbf16>, vector<512x128xbf16>, vector<2x128xf32> -> vector<2x128xf32>
    %c0_42 = arith.constant 0 : index
    %c0_43 = arith.constant 0 : index
    %59 = vector.load %arg6[%c0_42, %c0_43] : memref<1x128xf32, #tpu.memory_space<vmem>>, vector<1x128xf32>
    %60 = vector.broadcast %59 : vector<1x128xf32> to vector<2x128xf32>
    %61 = arith.addf %58, %60 : vector<2x128xf32>
    %c0_44 = arith.constant 0 : index
    %c0_45 = arith.constant 0 : index
    %62 = vector.load %arg7[%c0_44, %c0_45] : memref<2x128xf32, #tpu.memory_space<vmem>>, vector<2x128xf32>
    tpu.vector_store %arg7[%c0_44, %c0_45], %61 {strides = array<i32>} : memref<2x128xf32, #tpu.memory_space<vmem>>, vector<2x128xf32>,
    return
  }
}

</mosaic_0001>

<llo_original>
// kernel: dqn_forward.3
$region0: #{dqn_forward.3}
  #allocation0 [shape = 'u32[]', space=smem, size = 0x4, offset = 0x4, fixed_abs, tag = 'smem constant byte address 0x4 - core index']
  #allocation1 [shape = 'u32[72,128]{1,0:T(1,128)}', space=vmem, size = 0x9000, scoped, tag = 'internal scratch']
  %s0 = inlined_call_operand.vmem [shape: bf16[256,320], index: 0, kind: input, shape index: {}]
  %s1 = inlined_call_operand.vmem [shape: bf16[320,32], index: 1, kind: input, shape index: {}]
  %s2 = inlined_call_operand.vmem [shape: f32[1,32], index: 2, kind: input, shape index: {}]
  %s3 = inlined_call_operand.vmem [shape: f32[1,32], index: 3, kind: input, shape index: {}]
  %s4 = inlined_call_operand.vmem [shape: bf16[256,32], index: 4, kind: output, shape index: {}]
  %s5 = sld [smem:[#allocation0]]
  $region26: #{dqn_forward.3} parent=0
    _
  %s7 = ssub.s32 1, %s5
  %s8 = scalar_select 0, %s7, %s5
  // Predicated region
  $region2: #{dqn_forward.3} parent=0 // pred_check
    _
  $region3: #{dqn_forward.3} parent=0 // pred_check_branch
    %10 = sbr.rel (0) target = $region5
  $region4: #{dqn_forward.3} parent=0 // pred_region
    _
  $region5: #{dqn_forward.3} parent=0 // pred_fallthru
    _
  // Predicated region
  $region6: #{dqn_forward.3} parent=0 // pred_check
    _
  $region7: #{dqn_forward.3} parent=0 // pred_check_branch
    %12 = sbr.rel (0) target = $region9
  $region8: #{dqn_forward.3} parent=0 // pred_region
    _
  $region9: #{dqn_forward.3} parent=0 // pred_fallthru
    _
  // Predicated region
  $region10: #{dqn_forward.3} parent=0 // pred_check
    _
  $region11: #{dqn_forward.3} parent=0 // pred_check_branch
    %14 = sbr.rel (0) target = $region13
  $region12: #{dqn_forward.3} parent=0 // pred_region
    _
  $region13: #{dqn_forward.3} parent=0 // pred_fallthru
    _
  // Predicated region
  $region14: #{dqn_forward.3} parent=0 // pred_check
    _
  $region15: #{dqn_forward.3} parent=0 // pred_check_branch
    %16 = sbr.rel (0) target = $region17
  $region16: #{dqn_forward.3} parent=0 // pred_region
    _
  $region17: #{dqn_forward.3} parent=0 // pred_fallthru
    _
  %v18 = vld [vmem:[%s0] sm:$0xff]
  %v19 = vld [vmem:[%s0 + $0x8] sm:$0xf]
  %v20 = vld [vmem:[%s0 + $0xc] sm:$0xff]
  %v21 = vld [vmem:[%s0 + $0x14] sm:$0xf]
  %v22 = vld [vmem:[%s0 + $0x18] sm:$0xff]
  %v23 = vld [vmem:[%s0 + $0x20] sm:$0xf]
  %v24 = vld [vmem:[%s0 + $0x24] sm:$0xff]
  %v25 = vld [vmem:[%s0 + $0x2c] sm:$0xf]
  %v26 = vld [vmem:[%s0 + $0x30] sm:$0xff]
  %v27 = vld [vmem:[%s0 + $0x38] sm:$0xf]
  %v28 = vld [vmem:[%s0 + $0x3c] sm:$0xff]
  %v29 = vld [vmem:[%s0 + $0x44] sm:$0xf]
  %v30 = vld [vmem:[%s0 + $0x48] sm:$0xff]
  %v31 = vld [vmem:[%s0 + $0x50] sm:$0xf]
  %v32 = vld [vmem:[%s0 + $0x54] sm:$0xff]
  %v33 = vld [vmem:[%s0 + $0x5c] sm:$0xf]
  %v34 = vld [vmem:[%s0 + $0x60] sm:$0xff]
  %v35 = vld [vmem:[%s0 + $0x68] sm:$0xf]
  %v36 = vld [vmem:[%s0 + $0x6c] sm:$0xff]
  %v37 = vld [vmem:[%s0 + $0x74] sm:$0xf]
  %v38 = vld [vmem:[%s0 + $0x78] sm:$0xff]
  %v39 = vld [vmem:[%s0 + $0x80] sm:$0xf]
  %v40 = vld [vmem:[%s0 + $0x84] sm:$0xff]
  %v41 = vld [vmem:[%s0 + $0x8c] sm:$0xf]
  %v42 = vld [vmem:[%s0 + $0x90] sm:$0xff]
  %v43 = vld [vmem:[%s0 + $0x98] sm:$0xf]
  %v44 = vld [vmem:[%s0 + $0x9c] sm:$0xff]
  %v45 = vld [vmem:[%s0 + $0xa4] sm:$0xf]
  %v46 = vld [vmem:[%s0 + $0xa8] sm:$0xff]
  %v47 = vld [vmem:[%s0 + $0xb0] sm:$0xf]
  %v48 = vld [vmem:[%s0 + $0xb4] sm:$0xff]
  %v49 = vld [vmem:[%s0 + $0xbc] sm:$0xf]
  %v50 = vld [vmem:[%s0 + $0xc0] sm:$0xff]
  %v51 = vld [vmem:[%s0 + $0xc8] sm:$0xf]
  %v52 = vld [vmem:[%s0 + $0xcc] sm:$0xff]
  %v53 = vld [vmem:[%s0 + $0xd4] sm:$0xf]
  %v54 = vld [vmem:[%s0 + $0xd8] sm:$0xff]
  %v55 = vld [vmem:[%s0 + $0xe0] sm:$0xf]
  %v56 = vld [vmem:[%s0 + $0xe4] sm:$0xff]
  %v57 = vld [vmem:[%s0 + $0xec] sm:$0xf]
  %v58 = vld [vmem:[%s0 + $0xf0] sm:$0xff]
  %v59 = vld [vmem:[%s0 + $0xf8] sm:$0xf]
  %v60 = vld [vmem:[%s0 + $0xfc] sm:$0xff]
  %v61 = vld [vmem:[%s0 + $0x104] sm:$0xf]
  %v62 = vld [vmem:[%s0 + $0x108] sm:$0xff]
  %v63 = vld [vmem:[%s0 + $0x110] sm:$0xf]
  %v64 = vld [vmem:[%s0 + $0x114] sm:$0xff]
  %v65 = vld [vmem:[%s0 + $0x11c] sm:$0xf]
  %v66 = vld [vmem:[%s0 + $0x120] sm:$0xff]
  %v67 = vld [vmem:[%s0 + $0x128] sm:$0xf]
  %v68 = vld [vmem:[%s0 + $0x12c] sm:$0xff]
  %v69 = vld [vmem:[%s0 + $0x134] sm:$0xf]
  %v70 = vld [vmem:[%s0 + $0x138] sm:$0xff]
  %v71 = vld [vmem:[%s0 + $0x140] sm:$0xf]
  %v72 = vld [vmem:[%s0 + $0x144] sm:$0xff]
  %v73 = vld [vmem:[%s0 + $0x14c] sm:$0xf]
  %v74 = vld [vmem:[%s0 + $0x150] sm:$0xff]
  %v75 = vld [vmem:[%s0 + $0x158] sm:$0xf]
  %v76 = vld [vmem:[%s0 + $0x15c] sm:$0xff]
  %v77 = vld [vmem:[%s0 + $0x164] sm:$0xf]
  %v78 = vld [vmem:[%s0 + $0x168] sm:$0xff]
  %v79 = vld [vmem:[%s0 + $0x170] sm:$0xf]
  %v80 = vld [vmem:[%s0 + $0x174] sm:$0xff]
  %v81 = vld [vmem:[%s0 + $0x17c] sm:$0xf]
  %v82 = vld [vmem:[%s1] sm:$0xf]
  %v83 = vld [vmem:[%s1 + $0x4] sm:$0xf]
  %v84 = vld [vmem:[%s1 + $0x8] sm:$0xf]
  %v85 = vld [vmem:[%s1 + $0xc] sm:$0xf]
  %v86 = vld [vmem:[%s1 + $0x10] sm:$0xf]
  %v87 = vld [vmem:[%s1 + $0x14] sm:$0xf]
  %v88 = vld [vmem:[%s1 + $0x18] sm:$0xf]
  %v89 = vld [vmem:[%s1 + $0x1c] sm:$0xf]
  %v90 = vld [vmem:[%s1 + $0x20] sm:$0xf]
  %v91 = vld [vmem:[%s1 + $0x24] sm:$0xf]
  %v92 = vld [vmem:[%s1 + $0x28] sm:$0xf]
  %v93 = vld [vmem:[%s1 + $0x2c] sm:$0xf]
  %v94 = vld [vmem:[%s1 + $0x30] sm:$0xf]
  %v95 = vld [vmem:[%s1 + $0x34] sm:$0xf]
  %v96 = vld [vmem:[%s1 + $0x38] sm:$0xf]
  %v97 = vld [vmem:[%s1 + $0x3c] sm:$0xf]
  %v98 = vld [vmem:[%s1 + $0x40] sm:$0xf]
  %v99 = vld [vmem:[%s1 + $0x44] sm:$0xf]
  %v100 = vld [vmem:[%s1 + $0x48] sm:$0xf]
  %v101 = vld [vmem:[%s1 + $0x4c] sm:$0xf]
  %v102 = vld [vmem:[%s1 + $0x50] sm:$0xf]
  %v103 = vld [vmem:[%s1 + $0x54] sm:$0xf]
  %v104 = vld [vmem:[%s1 + $0x58] sm:$0xf]
  %v105 = vld [vmem:[%s1 + $0x5c] sm:$0xf]
  %v106 = vld [vmem:[%s1 + $0x60] sm:$0xf]
  %v107 = vld [vmem:[%s1 + $0x64] sm:$0xf]
  %v108 = vld [vmem:[%s1 + $0x68] sm:$0xf]
  %v109 = vld [vmem:[%s1 + $0x6c] sm:$0xf]
  %v110 = vld [vmem:[%s1 + $0x70] sm:$0xf]
  %v111 = vld [vmem:[%s1 + $0x74] sm:$0xf]
  %v112 = vld [vmem:[%s1 + $0x78] sm:$0xf]
  %v113 = vld [vmem:[%s1 + $0x7c] sm:$0xf]
  %v114 = vld [vmem:[%s1 + $0x80] sm:$0xf]
  %v115 = vld [vmem:[%s1 + $0x84] sm:$0xf]
  %v116 = vld [vmem:[%s1 + $0x88] sm:$0xf]
  %v117 = vld [vmem:[%s1 + $0x8c] sm:$0xf]
  %v118 = vld [vmem:[%s1 + $0x90] sm:$0xf]
  %v119 = vld [vmem:[%s1 + $0x94] sm:$0xf]
  %v120 = vld [vmem:[%s1 + $0x98] sm:$0xf]
  %v121 = vld [vmem:[%s1 + $0x9c] sm:$0xf]
  %v186 = vunpack.c.l.b16 %v18
  %v187 = vunpack.c.h.b16 %v18
  %v188 = vunpack.c.l.b16 %v19
  %v189 = vunpack.c.l.b16 %v20
  %v190 = vunpack.c.h.b16 %v20
  %v191 = vunpack.c.l.b16 %v21
  %v192 = vunpack.c.l.b16 %v22
  %v193 = vunpack.c.h.b16 %v22
  %v194 = vunpack.c.l.b16 %v23
  %v195 = vunpack.c.l.b16 %v24
  %v196 = vunpack.c.h.b16 %v24
  %v197 = vunpack.c.l.b16 %v25
  %v198 = vunpack.c.l.b16 %v26
  %v199 = vunpack.c.h.b16 %v26
  %v200 = vunpack.c.l.b16 %v27
  %v201 = vunpack.c.l.b16 %v28
  %v202 = vunpack.c.h.b16 %v28
  %v203 = vunpack.c.l.b16 %v29
  %v204 = vunpack.c.l.b16 %v30
  %v205 = vunpack.c.h.b16 %v30
  %v206 = vunpack.c.l.b16 %v31
  %v207 = vunpack.c.l.b16 %v32
  %v208 = vunpack.c.h.b16 %v32
  %v209 = vunpack.c.l.b16 %v33
  %v210 = vunpack.c.l.b16 %v34
  %v211 = vunpack.c.h.b16 %v34
  %v212 = vunpack.c.l.b16 %v35
  %v213 = vunpack.c.l.b16 %v36
  %v214 = vunpack.c.h.b16 %v36
  %v215 = vunpack.c.l.b16 %v37
  %v216 = vunpack.c.l.b16 %v38
  %v217 = vunpack.c.h.b16 %v38
  %v218 = vunpack.c.l.b16 %v39
  %v219 = vunpack.c.l.b16 %v40
  %v220 = vunpack.c.h.b16 %v40
  %v221 = vunpack.c.l.b16 %v41
  %v222 = vunpack.c.l.b16 %v42
  %v223 = vunpack.c.h.b16 %v42
  %v224 = vunpack.c.l.b16 %v43
  %v225 = vunpack.c.l.b16 %v44
  %v226 = vunpack.c.h.b16 %v44
  %v227 = vunpack.c.l.b16 %v45
  %v228 = vunpack.c.l.b16 %v46
  %v229 = vunpack.c.h.b16 %v46
  %v230 = vunpack.c.l.b16 %v47
  %v231 = vunpack.c.l.b16 %v48
  %v232 = vunpack.c.h.b16 %v48
  %v233 = vunpack.c.l.b16 %v49
  %v234 = vunpack.c.l.b16 %v50
  %v235 = vunpack.c.h.b16 %v50
  %v236 = vunpack.c.l.b16 %v51
  %v237 = vunpack.c.l.b16 %v52
  %v238 = vunpack.c.h.b16 %v52
  %v239 = vunpack.c.l.b16 %v53
  %v240 = vunpack.c.l.b16 %v54
  %v241 = vunpack.c.h.b16 %v54
  %v242 = vunpack.c.l.b16 %v55
  %v243 = vunpack.c.l.b16 %v56
  %v244 = vunpack.c.h.b16 %v56
  %v245 = vunpack.c.l.b16 %v57
  %v246 = vunpack.c.l.b16 %v58
  %v247 = vunpack.c.h.b16 %v58
  %v248 = vunpack.c.l.b16 %v59
  %v249 = vunpack.c.l.b16 %v60
  %v250 = vunpack.c.h.b16 %v60
  %v251 = vunpack.c.l.b16 %v61
  %v252 = vunpack.c.l.b16 %v62
  %v253 = vunpack.c.h.b16 %v62
  %v254 = vunpack.c.l.b16 %v63
  %v255 = vunpack.c.l.b16 %v64
  %v256 = vunpack.c.h.b16 %v64
  %v257 = vunpack.c.l.b16 %v65
  %v258 = vunpack.c.l.b16 %v66
  %v259 = vunpack.c.h.b16 %v66
  %v260 = vunpack.c.l.b16 %v67
  %v261 = vunpack.c.l.b16 %v68
  %v262 = vunpack.c.h.b16 %v68
  %v263 = vunpack.c.l.b16 %v69
  %v264 = vunpack.c.l.b16 %v70
  %v265 = vunpack.c.h.b16 %v70
  %v266 = vunpack.c.l.b16 %v71
  %v267 = vunpack.c.l.b16 %v72
  %v268 = vunpack.c.h.b16 %v72
  %v269 = vunpack.c.l.b16 %v73
  %v270 = vunpack.c.l.b16 %v74
  %v271 = vunpack.c.h.b16 %v74
  %v272 = vunpack.c.l.b16 %v75
  %v273 = vunpack.c.l.b16 %v76
  %v274 = vunpack.c.h.b16 %v76
  %v275 = vunpack.c.l.b16 %v77
  %v276 = vunpack.c.l.b16 %v78
  %v277 = vunpack.c.h.b16 %v78
  %v278 = vunpack.c.l.b16 %v79
  %v279 = vunpack.c.l.b16 %v80
  %v280 = vunpack.c.h.b16 %v80
  %v281 = vunpack.c.l.b16 %v81
  %v282 = vpack.c.b16 %v189, %v186
  %v283 = vpack.c.b16 %v190, %v187
  %v284 = vpack.c.b16 %v191, %v188
  %v285 = vpack.c.b16 %v195, %v192
  %v286 = vpack.c.b16 %v196, %v193
  %v287 = vpack.c.b16 %v197, %v194
  %v288 = vpack.c.b16 %v201, %v198
  %v289 = vpack.c.b16 %v202, %v199
  %v290 = vpack.c.b16 %v203, %v200
  %v291 = vpack.c.b16 %v207, %v204
  %v292 = vpack.c.b16 %v208, %v205
  %v293 = vpack.c.b16 %v209, %v206
  %v294 = vpack.c.b16 %v213, %v210
  %v295 = vpack.c.b16 %v214, %v211
  %v296 = vpack.c.b16 %v215, %v212
  %v297 = vpack.c.b16 %v219, %v216
  %v298 = vpack.c.b16 %v220, %v217
  %v299 = vpack.c.b16 %v221, %v218
  %v300 = vpack.c.b16 %v225, %v222
  %v301 = vpack.c.b16 %v226, %v223
  %v302 = vpack.c.b16 %v227, %v224
  %v303 = vpack.c.b16 %v231, %v228
  %v304 = vpack.c.b16 %v232, %v229
  %v305 = vpack.c.b16 %v233, %v230
  %v306 = vpack.c.b16 %v237, %v234
  %v307 = vpack.c.b16 %v238, %v235
  %v308 = vpack.c.b16 %v239, %v236
  %v309 = vpack.c.b16 %v243, %v240
  %v310 = vpack.c.b16 %v244, %v241
  %v311 = vpack.c.b16 %v245, %v242
  %v312 = vpack.c.b16 %v249, %v246
  %v313 = vpack.c.b16 %v250, %v247
  %v314 = vpack.c.b16 %v251, %v248
  %v315 = vpack.c.b16 %v255, %v252
  %v316 = vpack.c.b16 %v256, %v253
  %v317 = vpack.c.b16 %v257, %v254
  %v318 = vpack.c.b16 %v261, %v258
  %v319 = vpack.c.b16 %v262, %v259
  %v320 = vpack.c.b16 %v263, %v260
  %v321 = vpack.c.b16 %v267, %v264
  %v322 = vpack.c.b16 %v268, %v265
  %v323 = vpack.c.b16 %v269, %v266
  %v324 = vpack.c.b16 %v273, %v270
  %v325 = vpack.c.b16 %v274, %v271
  %v326 = vpack.c.b16 %v275, %v272
  %v327 = vpack.c.b16 %v279, %v276
  %v328 = vpack.c.b16 %v280, %v277
  %v329 = vpack.c.b16 %v281, %v278
  %v402 = vunpack.c.l.b16 %v82
  %v403 = vunpack.c.l.b16 %v83
  %v404 = vunpack.c.l.b16 %v84
  %v405 = vunpack.c.l.b16 %v85
  %v406 = vunpack.c.l.b16 %v86
  %v407 = vunpack.c.l.b16 %v87
  %v408 = vunpack.c.l.b16 %v88
  %v409 = vunpack.c.l.b16 %v89
  %v410 = vunpack.c.l.b16 %v90
  %v411 = vunpack.c.l.b16 %v91
  %v412 = vunpack.c.l.b16 %v92
  %v413 = vunpack.c.l.b16 %v93
  %v414 = vunpack.c.l.b16 %v94
  %v415 = vunpack.c.l.b16 %v95
  %v416 = vunpack.c.l.b16 %v96
  %v417 = vunpack.c.l.b16 %v97
  %v418 = vunpack.c.l.b16 %v98
  %v419 = vunpack.c.l.b16 %v99
  %v420 = vunpack.c.l.b16 %v100
  %v421 = vunpack.c.l.b16 %v101
  %v422 = vunpack.c.l.b16 %v102
  %v423 = vunpack.c.l.b16 %v103
  %v424 = vunpack.c.l.b16 %v104
  %v425 = vunpack.c.l.b16 %v105
  %v426 = vunpack.c.l.b16 %v106
  %v427 = vunpack.c.l.b16 %v107
  %v428 = vunpack.c.l.b16 %v108
  %v429 = vunpack.c.l.b16 %v109
  %v430 = vunpack.c.l.b16 %v110
  %v431 = vunpack.c.l.b16 %v111
  %v432 = vunpack.c.l.b16 %v112
  %v433 = vunpack.c.l.b16 %v113
  %v434 = vunpack.c.l.b16 %v114
  %v435 = vunpack.c.l.b16 %v115
  %v436 = vunpack.c.l.b16 %v116
  %v437 = vunpack.c.l.b16 %v117
  %v438 = vunpack.c.l.b16 %v118
  %v439 = vunpack.c.l.b16 %v119
  %v440 = vunpack.c.l.b16 %v120
  %v441 = vunpack.c.l.b16 %v121
  %v442 = vpack.c.b16 %v403, %v402
  %v443 = vpack.c.b16 %v405, %v404
  %v444 = vpack.c.b16 %v407, %v406
  %v445 = vpack.c.b16 %v409, %v408
  %v446 = vpack.c.b16 %v411, %v410
  %v447 = vpack.c.b16 %v413, %v412
  %v448 = vpack.c.b16 %v415, %v414
  %v449 = vpack.c.b16 %v417, %v416
  %v450 = vpack.c.b16 %v419, %v418
  %v451 = vpack.c.b16 %v421, %v420
  %v452 = vpack.c.b16 %v423, %v422
  %v453 = vpack.c.b16 %v425, %v424
  %v454 = vpack.c.b16 %v427, %v426
  %v455 = vpack.c.b16 %v429, %v428
  %v456 = vpack.c.b16 %v431, %v430
  %v457 = vpack.c.b16 %v433, %v432
  %v458 = vpack.c.b16 %v435, %v434
  %v459 = vpack.c.b16 %v437, %v436
  %v460 = vpack.c.b16 %v439, %v438
  %v461 = vpack.c.b16 %v441, %v440
  %vm482 = vcmask 523264
  %v484 = vsel %vm482, %v284, 0
  %v487 = vsel %vm482, %v287, 0
  %v490 = vsel %vm482, %v290, 0
  %v493 = vsel %vm482, %v293, 0
  %v496 = vsel %vm482, %v296, 0
  %v499 = vsel %vm482, %v299, 0
  %v502 = vsel %vm482, %v302, 0
  %v505 = vsel %vm482, %v305, 0
  %v508 = vsel %vm482, %v308, 0
  %v511 = vsel %vm482, %v311, 0
  %v514 = vsel %vm482, %v314, 0
  %v517 = vsel %vm482, %v317, 0
  %v520 = vsel %vm482, %v320, 0
  %v523 = vsel %vm482, %v323, 0
  %v526 = vsel %vm482, %v326, 0
  %v529 = vsel %vm482, %v329, 0
  %531 = vmatpush.bf16.msra.mxu0 %v449
  %532 = vmatpush.bf16.msra.mxu0 %v448
  %533 = vmatpush.bf16.msra.mxu0 %v447
  %534 = vmatpush.bf16.msra.mxu0 %v446
  %535 = vmatpush.bf16.msra.mxu0 %v445
  %536 = vmatpush.bf16.msra.mxu0 %v444
  %537 = vmatpush.bf16.msra.mxu0 %v443
  %538 = vmatpush.bf16.msra.mxu0 %v442
  %539 = vmatmul.bf16.gmra.mxu0 %v282
  %v540 = vpop.f32.mrf.mxu0
  %v541 = vadd.f32 0.0, %v540
  %v542 = vpop.f32.mrf.mxu0
  %v543 = vadd.f32 0.0, %v542
  %544 = vmatmul.bf16.gmra.mxu0 %v285
  %v545 = vpop.f32.mrf.mxu0
  %v546 = vadd.f32 0.0, %v545
  %v547 = vpop.f32.mrf.mxu0
  %v548 = vadd.f32 0.0, %v547
  %549 = vmatmul.bf16.gmra.mxu0 %v288
  %v550 = vpop.f32.mrf.mxu0
  %v551 = vadd.f32 0.0, %v550
  %v552 = vpop.f32.mrf.mxu0
  %v553 = vadd.f32 0.0, %v552
  %554 = vmatmul.bf16.gmra.mxu0 %v291
  %v555 = vpop.f32.mrf.mxu0
  %v556 = vadd.f32 0.0, %v555
  %v557 = vpop.f32.mrf.mxu0
  %v558 = vadd.f32 0.0, %v557
  %559 = vmatmul.bf16.gmra.mxu0 %v294
  %v560 = vpop.f32.mrf.mxu0
  %v561 = vadd.f32 0.0, %v560
  %v562 = vpop.f32.mrf.mxu0
  %v563 = vadd.f32 0.0, %v562
  %564 = vmatmul.bf16.gmra.mxu0 %v297
  %v565 = vpop.f32.mrf.mxu0
  %v566 = vadd.f32 0.0, %v565
  %v567 = vpop.f32.mrf.mxu0
  %v568 = vadd.f32 0.0, %v567
  %569 = vmatmul.bf16.gmra.mxu0 %v300
  %v570 = vpop.f32.mrf.mxu0
  %v571 = vadd.f32 0.0, %v570
  %v572 = vpop.f32.mrf.mxu0
  %v573 = vadd.f32 0.0, %v572
  %574 = vmatmul.bf16.gmra.mxu0 %v303
  %v575 = vpop.f32.mrf.mxu0
  %v576 = vadd.f32 0.0, %v575
  %v577 = vpop.f32.mrf.mxu0
  %v578 = vadd.f32 0.0, %v577
  %579 = vmatmul.bf16.gmra.mxu0 %v306
  %v580 = vpop.f32.mrf.mxu0
  %v581 = vadd.f32 0.0, %v580
  %v582 = vpop.f32.mrf.mxu0
  %v583 = vadd.f32 0.0, %v582
  %584 = vmatmul.bf16.gmra.mxu0 %v309
  %v585 = vpop.f32.mrf.mxu0
  %v586 = vadd.f32 0.0, %v585
  %v587 = vpop.f32.mrf.mxu0
  %v588 = vadd.f32 0.0, %v587
  %589 = vmatmul.bf16.gmra.mxu0 %v312
  %v590 = vpop.f32.mrf.mxu0
  %v591 = vadd.f32 0.0, %v590
  %v592 = vpop.f32.mrf.mxu0
  %v593 = vadd.f32 0.0, %v592
  %594 = vmatmul.bf16.gmra.mxu0 %v315
  %v595 = vpop.f32.mrf.mxu0
  %v596 = vadd.f32 0.0, %v595
  %v597 = vpop.f32.mrf.mxu0
  %v598 = vadd.f32 0.0, %v597
  %599 = vmatmul.bf16.gmra.mxu0 %v318
  %v600 = vpop.f32.mrf.mxu0
  %v601 = vadd.f32 0.0, %v600
  %v602 = vpop.f32.mrf.mxu0
  %v603 = vadd.f32 0.0, %v602
  %604 = vmatmul.bf16.gmra.mxu0 %v321
  %v605 = vpop.f32.mrf.mxu0
  %v606 = vadd.f32 0.0, %v605
  %v607 = vpop.f32.mrf.mxu0
  %v608 = vadd.f32 0.0, %v607
  %609 = vmatmul.bf16.gmra.mxu0 %v324
  %v610 = vpop.f32.mrf.mxu0
  %v611 = vadd.f32 0.0, %v610
  %v612 = vpop.f32.mrf.mxu0
  %v613 = vadd.f32 0.0, %v612
  %614 = vmatmul.bf16.gmra.mxu0 %v327
  %v615 = vpop.f32.mrf.mxu0
  %v616 = vadd.f32 0.0, %v615
  %v617 = vpop.f32.mrf.mxu0
  %v618 = vadd.f32 0.0, %v617
  %619 = vdwg.mxu0
  %620 = vmatpush.bf16.msra.mxu0 %v457
  %621 = vmatpush.bf16.msra.mxu0 %v456
  %622 = vmatpush.bf16.msra.mxu0 %v455
  %623 = vmatpush.bf16.msra.mxu0 %v454
  %624 = vmatpush.bf16.msra.mxu0 %v453
  %625 = vmatpush.bf16.msra.mxu0 %v452
  %626 = vmatpush.bf16.msra.mxu0 %v451
  %627 = vmatpush.bf16.msra.mxu0 %v450
  %628 = vmatmul.bf16.gmra.mxu0 %v283
  %v629 = vpop.f32.mrf.mxu0
  %v630 = vadd.f32 %v541, %v629
  %v631 = vpop.f32.mrf.mxu0
  %v632 = vadd.f32 %v543, %v631
  %633 = vmatmul.bf16.gmra.mxu0 %v286
  %v634 = vpop.f32.mrf.mxu0
  %v635 = vadd.f32 %v546, %v634
  %v636 = vpop.f32.mrf.mxu0
  %v637 = vadd.f32 %v548, %v636
  %638 = vmatmul.bf16.gmra.mxu0 %v289
  %v639 = vpop.f32.mrf.mxu0
  %v640 = vadd.f32 %v551, %v639
  %v641 = vpop.f32.mrf.mxu0
  %v642 = vadd.f32 %v553, %v641
  %643 = vmatmul.bf16.gmra.mxu0 %v292
  %v644 = vpop.f32.mrf.mxu0
  %v645 = vadd.f32 %v556, %v644
  %v646 = vpop.f32.mrf.mxu0
  %v647 = vadd.f32 %v558, %v646
  %648 = vmatmul.bf16.gmra.mxu0 %v295
  %v649 = vpop.f32.mrf.mxu0
  %v650 = vadd.f32 %v561, %v649
  %v651 = vpop.f32.mrf.mxu0
  %v652 = vadd.f32 %v563, %v651
  %653 = vmatmul.bf16.gmra.mxu0 %v298
  %v654 = vpop.f32.mrf.mxu0
  %v655 = vadd.f32 %v566, %v654
  %v656 = vpop.f32.mrf.mxu0
  %v657 = vadd.f32 %v568, %v656
  %658 = vmatmul.bf16.gmra.mxu0 %v301
  %v659 = vpop.f32.mrf.mxu0
  %v660 = vadd.f32 %v571, %v659
  %v661 = vpop.f32.mrf.mxu0
  %v662 = vadd.f32 %v573, %v661
  %663 = vmatmul.bf16.gmra.mxu0 %v304
  %v664 = vpop.f32.mrf.mxu0
  %v665 = vadd.f32 %v576, %v664
  %v666 = vpop.f32.mrf.mxu0
  %v667 = vadd.f32 %v578, %v666
  %668 = vmatmul.bf16.gmra.mxu0 %v307
  %v669 = vpop.f32.mrf.mxu0
  %v670 = vadd.f32 %v581, %v669
  %v671 = vpop.f32.mrf.mxu0
  %v672 = vadd.f32 %v583, %v671
  %673 = vmatmul.bf16.gmra.mxu0 %v310
  %v674 = vpop.f32.mrf.mxu0
  %v675 = vadd.f32 %v586, %v674
  %v676 = vpop.f32.mrf.mxu0
  %v677 = vadd.f32 %v588, %v676
  %678 = vmatmul.bf16.gmra.mxu0 %v313
  %v679 = vpop.f32.mrf.mxu0
  %v680 = vadd.f32 %v591, %v679
  %v681 = vpop.f32.mrf.mxu0
  %v682 = vadd.f32 %v593, %v681
  %683 = vmatmul.bf16.gmra.mxu0 %v316
  %v684 = vpop.f32.mrf.mxu0
  %v685 = vadd.f32 %v596, %v684
  %v686 = vpop.f32.mrf.mxu0
  %v687 = vadd.f32 %v598, %v686
  %688 = vmatmul.bf16.gmra.mxu0 %v319
  %v689 = vpop.f32.mrf.mxu0
  %v690 = vadd.f32 %v601, %v689
  %v691 = vpop.f32.mrf.mxu0
  %v692 = vadd.f32 %v603, %v691
  %693 = vmatmul.bf16.gmra.mxu0 %v322
  %v694 = vpop.f32.mrf.mxu0
  %v695 = vadd.f32 %v606, %v694
  %v696 = vpop.f32.mrf.mxu0
  %v697 = vadd.f32 %v608, %v696
  %698 = vmatmul.bf16.gmra.mxu0 %v325
  %v699 = vpop.f32.mrf.mxu0
  %v700 = vadd.f32 %v611, %v699
  %v701 = vpop.f32.mrf.mxu0
  %v702 = vadd.f32 %v613, %v701
  %703 = vmatmul.bf16.gmra.mxu0 %v328
  %v704 = vpop.f32.mrf.mxu0
  %v705 = vadd.f32 %v616, %v704
  %v706 = vpop.f32.mrf.mxu0
  %v707 = vadd.f32 %v618, %v706
  %708 = vdwg.mxu0
  %709 = vmatpush.bf16.msra.mxu0 0
  %710 = vmatpush.bf16.msra.mxu0 0
  %711 = vmatpush.bf16.msra.mxu0 0
  %712 = vmatpush.bf16.msra.mxu0 0
  %713 = vmatpush.bf16.msra.mxu0 %v461
  %714 = vmatpush.bf16.msra.mxu0 %v460
  %715 = vmatpush.bf16.msra.mxu0 %v459
  %716 = vmatpush.bf16.msra.mxu0 %v458
  %717 = vmatmul.bf16.gmra.mxu0 %v484
  %v718 = vpop.f32.mrf.mxu0
  %v719 = vadd.f32 %v630, %v718
  %v720 = vpop.f32.mrf.mxu0
  %v721 = vadd.f32 %v632, %v720
  %722 = vmatmul.bf16.gmra.mxu0 %v487
  %v723 = vpop.f32.mrf.mxu0
  %v724 = vadd.f32 %v635, %v723
  %v725 = vpop.f32.mrf.mxu0
  %v726 = vadd.f32 %v637, %v725
  %727 = vmatmul.bf16.gmra.mxu0 %v490
  %v728 = vpop.f32.mrf.mxu0
  %v729 = vadd.f32 %v640, %v728
  %v730 = vpop.f32.mrf.mxu0
  %v731 = vadd.f32 %v642, %v730
  %732 = vmatmul.bf16.gmra.mxu0 %v493
  %v733 = vpop.f32.mrf.mxu0
  %v734 = vadd.f32 %v645, %v733
  %v735 = vpop.f32.mrf.mxu0
  %v736 = vadd.f32 %v647, %v735
  %737 = vmatmul.bf16.gmra.mxu0 %v496
  %v738 = vpop.f32.mrf.mxu0
  %v739 = vadd.f32 %v650, %v738
  %v740 = vpop.f32.mrf.mxu0
  %v741 = vadd.f32 %v652, %v740
  %742 = vmatmul.bf16.gmra.mxu0 %v499
  %v743 = vpop.f32.mrf.mxu0
  %v744 = vadd.f32 %v655, %v743
  %v745 = vpop.f32.mrf.mxu0
  %v746 = vadd.f32 %v657, %v745
  %747 = vmatmul.bf16.gmra.mxu0 %v502
  %v748 = vpop.f32.mrf.mxu0
  %v749 = vadd.f32 %v660, %v748
  %v750 = vpop.f32.mrf.mxu0
  %v751 = vadd.f32 %v662, %v750
  %752 = vmatmul.bf16.gmra.mxu0 %v505
  %v753 = vpop.f32.mrf.mxu0
  %v754 = vadd.f32 %v665, %v753
  %v755 = vpop.f32.mrf.mxu0
  %v756 = vadd.f32 %v667, %v755
  %757 = vmatmul.bf16.gmra.mxu0 %v508
  %v758 = vpop.f32.mrf.mxu0
  %v759 = vadd.f32 %v670, %v758
  %v760 = vpop.f32.mrf.mxu0
  %v761 = vadd.f32 %v672, %v760
  %762 = vmatmul.bf16.gmra.mxu0 %v511
  %v763 = vpop.f32.mrf.mxu0
  %v764 = vadd.f32 %v675, %v763
  %v765 = vpop.f32.mrf.mxu0
  %v766 = vadd.f32 %v677, %v765
  %767 = vmatmul.bf16.gmra.mxu0 %v514
  %v768 = vpop.f32.mrf.mxu0
  %v769 = vadd.f32 %v680, %v768
  %v770 = vpop.f32.mrf.mxu0
  %v771 = vadd.f32 %v682, %v770
  %772 = vmatmul.bf16.gmra.mxu0 %v517
  %v773 = vpop.f32.mrf.mxu0
  %v774 = vadd.f32 %v685, %v773
  %v775 = vpop.f32.mrf.mxu0
  %v776 = vadd.f32 %v687, %v775
  %777 = vmatmul.bf16.gmra.mxu0 %v520
  %v778 = vpop.f32.mrf.mxu0
  %v779 = vadd.f32 %v690, %v778
  %v780 = vpop.f32.mrf.mxu0
  %v781 = vadd.f32 %v692, %v780
  %782 = vmatmul.bf16.gmra.mxu0 %v523
  %v783 = vpop.f32.mrf.mxu0
  %v784 = vadd.f32 %v695, %v783
  %v785 = vpop.f32.mrf.mxu0
  %v786 = vadd.f32 %v697, %v785
  %787 = vmatmul.bf16.gmra.mxu0 %v526
  %v788 = vpop.f32.mrf.mxu0
  %v789 = vadd.f32 %v700, %v788
  %v790 = vpop.f32.mrf.mxu0
  %v791 = vadd.f32 %v702, %v790
  %792 = vmatmul.bf16.gmra.mxu0 %v529
  %v793 = vpop.f32.mrf.mxu0
  %v794 = vadd.f32 %v705, %v793
  %v795 = vpop.f32.mrf.mxu0
  %v796 = vadd.f32 %v707, %v795
  %797 = vdwg.mxu0
  %vm798 = vcmask 261120
  %v799 = vsel %vm798, %v719, 0.0
  %v800 = vsel %vm798, %v721, 0.0
  %v801 = vadd.f32 %v799, %v800
  %v802 = vsel %vm798, %v724, 0.0
  %v803 = vadd.f32 %v801, %v802
  %v804 = vsel %vm798, %v726, 0.0
  %v805 = vadd.f32 %v803, %v804
  %v806 = vsel %vm798, %v729, 0.0
  %v807 = vadd.f32 %v805, %v806
  %v808 = vsel %vm798, %v731, 0.0
  %v809 = vadd.f32 %v807, %v808
  %v810 = vsel %vm798, %v734, 0.0
  %v811 = vadd.f32 %v809, %v810
  %v812 = vsel %vm798, %v736, 0.0
  %v813 = vadd.f32 %v811, %v812
  %v814 = vsel %vm798, %v739, 0.0
  %v815 = vadd.f32 %v813, %v814
  %v816 = vsel %vm798, %v741, 0.0
  %v817 = vadd.f32 %v815, %v816
  %v818 = vsel %vm798, %v744, 0.0
  %v819 = vadd.f32 %v817, %v818
  %v820 = vsel %vm798, %v746, 0.0
  %v821 = vadd.f32 %v819, %v820
  %v822 = vsel %vm798, %v749, 0.0
  %v823 = vadd.f32 %v821, %v822
  %v824 = vsel %vm798, %v751, 0.0
  %v825 = vadd.f32 %v823, %v824
  %v826 = vsel %vm798, %v754, 0.0
  %v827 = vadd.f32 %v825, %v826
  %v828 = vsel %vm798, %v756, 0.0
  %v829 = vadd.f32 %v827, %v828
  %v830 = vsel %vm798, %v759, 0.0
  %v831 = vadd.f32 %v829, %v830
  %v832 = vsel %vm798, %v761, 0.0
  %v833 = vadd.f32 %v831, %v832
  %v834 = vsel %vm798, %v764, 0.0
  %v835 = vadd.f32 %v833, %v834
  %v836 = vsel %vm798, %v766, 0.0
  %v837 = vadd.f32 %v835, %v836
  %v838 = vsel %vm798, %v769, 0.0
  %v839 = vadd.f32 %v837, %v838
  %v840 = vsel %vm798, %v771, 0.0
  %v841 = vadd.f32 %v839, %v840
  %v842 = vsel %vm798, %v774, 0.0
  %v843 = vadd.f32 %v841, %v842
  %v844 = vsel %vm798, %v776, 0.0
  %v845 = vadd.f32 %v843, %v844
  %v846 = vsel %vm798, %v779, 0.0
  %v847 = vadd.f32 %v845, %v846
  %v848 = vsel %vm798, %v781, 0.0
  %v849 = vadd.f32 %v847, %v848
  %v850 = vsel %vm798, %v784, 0.0
  %v851 = vadd.f32 %v849, %v850
  %v852 = vsel %vm798, %v786, 0.0
  %v853 = vadd.f32 %v851, %v852
  %v854 = vsel %vm798, %v789, 0.0
  %v855 = vadd.f32 %v853, %v854
  %v856 = vsel %vm798, %v791, 0.0
  %v857 = vadd.f32 %v855, %v856
  %v858 = vsel %vm798, %v794, 0.0
  %v859 = vadd.f32 %v857, %v858
  %v860 = vsel %vm798, %v796, 0.0
  %v861 = vadd.f32 %v859, %v860
  %v862 = vrot.slane %v861, 4
  %v863 = vadd.f32 %v861, %v862
  %v864 = vrot.slane %v863, 2
  %v865 = vadd.f32 %v863, %v864
  %v866 = vrot.slane %v865, 1
  %v867 = vadd.f32 %v865, %v866
  %v868 = vmul.f32 %v867, 0.004132231
  %v869 = vsub.f32 %v719, %v868
  %v870 = vsub.f32 %v721, %v868
  %v871 = vsub.f32 %v724, %v868
  %v872 = vsub.f32 %v726, %v868
  %v873 = vsub.f32 %v729, %v868
  %v874 = vsub.f32 %v731, %v868
  %v875 = vsub.f32 %v734, %v868
  %v876 = vsub.f32 %v736, %v868
  %v877 = vsub.f32 %v739, %v868
  %v878 = vsub.f32 %v741, %v868
  %v879 = vsub.f32 %v744, %v868
  %v880 = vsub.f32 %v746, %v868
  %v881 = vsub.f32 %v749, %v868
  %v882 = vsub.f32 %v751, %v868
  %v883 = vsub.f32 %v754, %v868
  %v884 = vsub.f32 %v756, %v868
  %v885 = vsub.f32 %v759, %v868
  %v886 = vsub.f32 %v761, %v868
  %v887 = vsub.f32 %v764, %v868
  %v888 = vsub.f32 %v766, %v868
  %v889 = vsub.f32 %v769, %v868
  %v890 = vsub.f32 %v771, %v868
  %v891 = vsub.f32 %v774, %v868
  %v892 = vsub.f32 %v776, %v868
  %v893 = vsub.f32 %v779, %v868
  %v894 = vsub.f32 %v781, %v868
  %v895 = vsub.f32 %v784, %v868
  %v896 = vsub.f32 %v786, %v868
  %v897 = vsub.f32 %v789, %v868
  %v898 = vsub.f32 %v791, %v868
  %v899 = vsub.f32 %v794, %v868
  %v900 = vsub.f32 %v796, %v868
  %v901 = vlaneseq
  %v902 = vshrl.u32 %v901, 7
  %v903 = vadd.s32 %v902, 8
  %v904 = vadd.s32 %v902, 16
  %v905 = vadd.s32 %v902, 24
  %v906 = vadd.s32 %v902, 32
  %v907 = vadd.s32 %v902, 40
  %v908 = vadd.s32 %v902, 48
  %v909 = vadd.s32 %v902, 56
  %v910 = vadd.s32 %v902, 64
  %v911 = vadd.s32 %v902, 72
  %v912 = vadd.s32 %v902, 80
  %v913 = vadd.s32 %v902, 88
  %v914 = vadd.s32 %v902, 96
  %v915 = vadd.s32 %v902, 104
  %v916 = vadd.s32 %v902, 112
  %v917 = vadd.s32 %v902, 120
  %v918 = vadd.s32 %v902, 128
  %v919 = vadd.s32 %v902, 136
  %v920 = vadd.s32 %v902, 144
  %v921 = vadd.s32 %v902, 152
  %v922 = vadd.s32 %v902, 160
  %v923 = vadd.s32 %v902, 168
  %v924 = vadd.s32 %v902, 176
  %v925 = vadd.s32 %v902, 184
  %v926 = vadd.s32 %v902, 192
  %v927 = vadd.s32 %v902, 200
  %v928 = vadd.s32 %v902, 208
  %v929 = vadd.s32 %v902, 216
  %v930 = vadd.s32 %v902, 224
  %v931 = vadd.s32 %v902, 232
  %v932 = vadd.s32 %v902, 240
  %v933 = vadd.s32 %v902, 248
  %vm934 = vcmp.lt.s32.totalorder %v902, 242
  %vm935 = vcmp.lt.s32.totalorder %v903, 242
  %vm936 = vcmp.lt.s32.totalorder %v904, 242
  %vm937 = vcmp.lt.s32.totalorder %v905, 242
  %vm938 = vcmp.lt.s32.totalorder %v906, 242
  %vm939 = vcmp.lt.s32.totalorder %v907, 242
  %vm940 = vcmp.lt.s32.totalorder %v908, 242
  %vm941 = vcmp.lt.s32.totalorder %v909, 242
  %vm942 = vcmp.lt.s32.totalorder %v910, 242
  %vm943 = vcmp.lt.s32.totalorder %v911, 242
  %vm944 = vcmp.lt.s32.totalorder %v912, 242
  %vm945 = vcmp.lt.s32.totalorder %v913, 242
  %vm946 = vcmp.lt.s32.totalorder %v914, 242
  %vm947 = vcmp.lt.s32.totalorder %v915, 242
  %vm948 = vcmp.lt.s32.totalorder %v916, 242
  %vm949 = vcmp.lt.s32.totalorder %v917, 242
  %vm950 = vcmp.lt.s32.totalorder %v918, 242
  %vm951 = vcmp.lt.s32.totalorder %v919, 242
  %vm952 = vcmp.lt.s32.totalorder %v920, 242
  %vm953 = vcmp.lt.s32.totalorder %v921, 242
  %vm954 = vcmp.lt.s32.totalorder %v922, 242
  %vm955 = vcmp.lt.s32.totalorder %v923, 242
  %vm956 = vcmp.lt.s32.totalorder %v924, 242
  %vm957 = vcmp.lt.s32.totalorder %v925, 242
  %vm958 = vcmp.lt.s32.totalorder %v926, 242
  %vm959 = vcmp.lt.s32.totalorder %v927, 242
  %vm960 = vcmp.lt.s32.totalorder %v928, 242
  %vm961 = vcmp.lt.s32.totalorder %v929, 242
  %vm962 = vcmp.lt.s32.totalorder %v930, 242
  %vm963 = vcmp.lt.s32.totalorder %v931, 242
  %vm964 = vcmp.lt.s32.totalorder %v932, 242
  %vm965 = vcmp.lt.s32.totalorder %v933, 242
  %v966 = vsel %vm934, %v869, 0.0
  %v967 = vsel %vm935, %v870, 0.0
  %v968 = vsel %vm936, %v871, 0.0
  %v969 = vsel %vm937, %v872, 0.0
  %v970 = vsel %vm938, %v873, 0.0
  %v971 = vsel %vm939, %v874, 0.0
  %v972 = vsel %vm940, %v875, 0.0
  %v973 = vsel %vm941, %v876, 0.0
  %v974 = vsel %vm942, %v877, 0.0
  %v975 = vsel %vm943, %v878, 0.0
  %v976 = vsel %vm944, %v879, 0.0
  %v977 = vsel %vm945, %v880, 0.0
  %v978 = vsel %vm946, %v881, 0.0
  %v979 = vsel %vm947, %v882, 0.0
  %v980 = vsel %vm948, %v883, 0.0
  %v981 = vsel %vm949, %v884, 0.0
  %v982 = vsel %vm950, %v885, 0.0
  %v983 = vsel %vm951, %v886, 0.0
  %v984 = vsel %vm952, %v887, 0.0
  %v985 = vsel %vm953, %v888, 0.0
  %v986 = vsel %vm954, %v889, 0.0
  %v987 = vsel %vm955, %v890, 0.0
  %v988 = vsel %vm956, %v891, 0.0
  %v989 = vsel %vm957, %v892, 0.0
  %v990 = vsel %vm958, %v893, 0.0
  %v991 = vsel %vm959, %v894, 0.0
  %v992 = vsel %vm960, %v895, 0.0
  %v993 = vsel %vm961, %v896, 0.0
  %v994 = vsel %vm962, %v897, 0.0
  %v995 = vsel %vm963, %v898, 0.0
  %v996 = vsel %vm964, %v899, 0.0
  %v997 = vsel %vm965, %v900, 0.0
  %v998 = vmul.f32 %v966, %v966
  %v999 = vmul.f32 %v967, %v967
  %v1000 = vmul.f32 %v968, %v968
  %v1001 = vmul.f32 %v969, %v969
  %v1002 = vmul.f32 %v970, %v970
  %v1003 = vmul.f32 %v971, %v971
  %v1004 = vmul.f32 %v972, %v972
  %v1005 = vmul.f32 %v973, %v973
  %v1006 = vmul.f32 %v974, %v974
  %v1007 = vmul.f32 %v975, %v975
  %v1008 = vmul.f32 %v976, %v976
  %v1009 = vmul.f32 %v977, %v977
  %v1010 = vmul.f32 %v978, %v978
  %v1011 = vmul.f32 %v979, %v979
  %v1012 = vmul.f32 %v980, %v980
  %v1013 = vmul.f32 %v981, %v981
  %v1014 = vmul.f32 %v982, %v982
  %v1015 = vmul.f32 %v983, %v983
  %v1016 = vmul.f32 %v984, %v984
  %v1017 = vmul.f32 %v985, %v985
  %v1018 = vmul.f32 %v986, %v986
  %v1019 = vmul.f32 %v987, %v987
  %v1020 = vmul.f32 %v988, %v988
  %v1021 = vmul.f32 %v989, %v989
  %v1022 = vmul.f32 %v990, %v990
  %v1023 = vmul.f32 %v991, %v991
  %v1024 = vmul.f32 %v992, %v992
  %v1025 = vmul.f32 %v993, %v993
  %v1026 = vmul.f32 %v994, %v994
  %v1027 = vmul.f32 %v995, %v995
  %v1028 = vmul.f32 %v996, %v996
  %v1029 = vmul.f32 %v997, %v997
  %v1030 = vsel %vm798, %v998, 0.0
  %v1031 = vsel %vm798, %v999, 0.0
  %v1032 = vadd.f32 %v1030, %v1031
  %v1033 = vsel %vm798, %v1000, 0.0
  %v1034 = vadd.f32 %v1032, %v1033
  %v1035 = vsel %vm798, %v1001, 0.0
  %v1036 = vadd.f32 %v1034, %v1035
  %v1037 = vsel %vm798, %v1002, 0.0
  %v1038 = vadd.f32 %v1036, %v1037
  %v1039 = vsel %vm798, %v1003, 0.0
  %v1040 = vadd.f32 %v1038, %v1039
  %v1041 = vsel %vm798, %v1004, 0.0
  %v1042 = vadd.f32 %v1040, %v1041
  %v1043 = vsel %vm798, %v1005, 0.0
  %v1044 = vadd.f32 %v1042, %v1043
  %v1045 = vsel %vm798, %v1006, 0.0
  %v1046 = vadd.f32 %v1044, %v1045
  %v1047 = vsel %vm798, %v1007, 0.0
  %v1048 = vadd.f32 %v1046, %v1047
  %v1049 = vsel %vm798, %v1008, 0.0
  %v1050 = vadd.f32 %v1048, %v1049
  %v1051 = vsel %vm798, %v1009, 0.0
  %v1052 = vadd.f32 %v1050, %v1051
  %v1053 = vsel %vm798, %v1010, 0.0
  %v1054 = vadd.f32 %v1052, %v1053
  %v1055 = vsel %vm798, %v1011, 0.0
  %v1056 = vadd.f32 %v1054, %v1055
  %v1057 = vsel %vm798, %v1012, 0.0
  %v1058 = vadd.f32 %v1056, %v1057
  %v1059 = vsel %vm798, %v1013, 0.0
  %v1060 = vadd.f32 %v1058, %v1059
  %v1061 = vsel %vm798, %v1014, 0.0
  %v1062 = vadd.f32 %v1060, %v1061
  %v1063 = vsel %vm798, %v1015, 0.0
  %v1064 = vadd.f32 %v1062, %v1063
  %v1065 = vsel %vm798, %v1016, 0.0
  %v1066 = vadd.f32 %v1064, %v1065
  %v1067 = vsel %vm798, %v1017, 0.0
  %v1068 = vadd.f32 %v1066, %v1067
  %v1069 = vsel %vm798, %v1018, 0.0
  %v1070 = vadd.f32 %v1068, %v1069
  %v1071 = vsel %vm798, %v1019, 0.0
  %v1072 = vadd.f32 %v1070, %v1071
  %v1073 = vsel %vm798, %v1020, 0.0
  %v1074 = vadd.f32 %v1072, %v1073
  %v1075 = vsel %vm798, %v1021, 0.0
  %v1076 = vadd.f32 %v1074, %v1075
  %v1077 = vsel %vm798, %v1022, 0.0
  %v1078 = vadd.f32 %v1076, %v1077
  %v1079 = vsel %vm798, %v1023, 0.0
  %v1080 = vadd.f32 %v1078, %v1079
  %v1081 = vsel %vm798, %v1024, 0.0
  %v1082 = vadd.f32 %v1080, %v1081
  %v1083 = vsel %vm798, %v1025, 0.0
  %v1084 = vadd.f32 %v1082, %v1083
  %v1085 = vsel %vm798, %v1026, 0.0
  %v1086 = vadd.f32 %v1084, %v1085
  %v1087 = vsel %vm798, %v1027, 0.0
  %v1088 = vadd.f32 %v1086, %v1087
  %v1089 = vsel %vm798, %v1028, 0.0
  %v1090 = vadd.f32 %v1088, %v1089
  %v1091 = vsel %vm798, %v1029, 0.0
  %v1092 = vadd.f32 %v1090, %v1091
  %v1093 = vrot.slane %v1092, 4
  %v1094 = vadd.f32 %v1092, %v1093
  %v1095 = vrot.slane %v1094, 2
  %v1096 = vadd.f32 %v1094, %v1095
  %v1097 = vrot.slane %v1096, 1
  %v1098 = vadd.f32 %v1096, %v1097
  %v1099 = vmul.f32 %v1098, 0.004132231
  %v1100 = vadd.f32 %v1099, 1e-05
  %v1101 = vrsqrt.pop %v1100
  %v1102 = vmul.f32 %v1101, %v1100
  %v1103 = vmul.f32 %v1102, %v1101
  %v1104 = vmul.f32 0.5, %v1103
  %v1105 = vsub.f32 1.5, %v1104
  %v1106 = vmul.f32 %v1101, %v1105
  %vm1107 = vweird.f32 %v1100
  %vm1108 = vweird.f32 %v1101
  %vm1109 = vmor %vm1107, %vm1108
  %v1110 = vsel %vm1109, %v1101, %v1106
  %v1111 = vmul.f32 %v869, %v1110
  %v1112 = vmul.f32 %v870, %v1110
  %v1113 = vmul.f32 %v871, %v1110
  %v1114 = vmul.f32 %v872, %v1110
  %v1115 = vmul.f32 %v873, %v1110
  %v1116 = vmul.f32 %v874, %v1110
  %v1117 = vmul.f32 %v875, %v1110
  %v1118 = vmul.f32 %v876, %v1110
  %v1119 = vmul.f32 %v877, %v1110
  %v1120 = vmul.f32 %v878, %v1110
  %v1121 = vmul.f32 %v879, %v1110
  %v1122 = vmul.f32 %v880, %v1110
  %v1123 = vmul.f32 %v881, %v1110
  %v1124 = vmul.f32 %v882, %v1110
  %v1125 = vmul.f32 %v883, %v1110
  %v1126 = vmul.f32 %v884, %v1110
  %v1127 = vmul.f32 %v885, %v1110
  %v1128 = vmul.f32 %v886, %v1110
  %v1129 = vmul.f32 %v887, %v1110
  %v1130 = vmul.f32 %v888, %v1110
  %v1131 = vmul.f32 %v889, %v1110
  %v1132 = vmul.f32 %v890, %v1110
  %v1133 = vmul.f32 %v891, %v1110
  %v1134 = vmul.f32 %v892, %v1110
  %v1135 = vmul.f32 %v893, %v1110
  %v1136 = vmul.f32 %v894, %v1110
  %v1137 = vmul.f32 %v895, %v1110
  %v1138 = vmul.f32 %v896, %v1110
  %v1139 = vmul.f32 %v897, %v1110
  %v1140 = vmul.f32 %v898, %v1110
  %v1141 = vmul.f32 %v899, %v1110
  %v1142 = vmul.f32 %v900, %v1110
  %v1143 = vld [vmem:[%s2] sm:$0x1]
  %v1145 = vperm.slane %v1143, 0
  %v1147 = vmul.f32 %v1111, %v1145
  %v1148 = vmul.f32 %v1112, %v1145
  %v1149 = vmul.f32 %v1113, %v1145
  %v1150 = vmul.f32 %v1114, %v1145
  %v1151 = vmul.f32 %v1115, %v1145
  %v1152 = vmul.f32 %v1116, %v1145
  %v1153 = vmul.f32 %v1117, %v1145
  %v1154 = vmul.f32 %v1118, %v1145
  %v1155 = vmul.f32 %v1119, %v1145
  %v1156 = vmul.f32 %v1120, %v1145
  %v1157 = vmul.f32 %v1121, %v1145
  %v1158 = vmul.f32 %v1122, %v1145
  %v1159 = vmul.f32 %v1123, %v1145
  %v1160 = vmul.f32 %v1124, %v1145
  %v1161 = vmul.f32 %v1125, %v1145
  %v1162 = vmul.f32 %v1126, %v1145
  %v1163 = vmul.f32 %v1127, %v1145
  %v1164 = vmul.f32 %v1128, %v1145
  %v1165 = vmul.f32 %v1129, %v1145
  %v1166 = vmul.f32 %v1130, %v1145
  %v1167 = vmul.f32 %v1131, %v1145
  %v1168 = vmul.f32 %v1132, %v1145
  %v1169 = vmul.f32 %v1133, %v1145
  %v1170 = vmul.f32 %v1134, %v1145
  %v1171 = vmul.f32 %v1135, %v1145
  %v1172 = vmul.f32 %v1136, %v1145
  %v1173 = vmul.f32 %v1137, %v1145
  %v1174 = vmul.f32 %v1138, %v1145
  %v1175 = vmul.f32 %v1139, %v1145
  %v1176 = vmul.f32 %v1140, %v1145
  %v1177 = vmul.f32 %v1141, %v1145
  %v1178 = vmul.f32 %v1142, %v1145
  %v1179 = vld [vmem:[%s3] sm:$0x1]
  %v1181 = vperm.slane %v1179, 0
  %v1183 = vadd.f32 %v1147, %v1181
  %v1184 = vadd.f32 %v1148, %v1181
  %v1185 = vadd.f32 %v1149, %v1181
  %v1186 = vadd.f32 %v1150, %v1181
  %v1187 = vadd.f32 %v1151, %v1181
  %v1188 = vadd.f32 %v1152, %v1181
  %v1189 = vadd.f32 %v1153, %v1181
  %v1190 = vadd.f32 %v1154, %v1181
  %v1191 = vadd.f32 %v1155, %v1181
  %v1192 = vadd.f32 %v1156, %v1181
  %v1193 = vadd.f32 %v1157, %v1181
  %v1194 = vadd.f32 %v1158, %v1181
  %v1195 = vadd.f32 %v1159, %v1181
  %v1196 = vadd.f32 %v1160, %v1181
  %v1197 = vadd.f32 %v1161, %v1181
  %v1198 = vadd.f32 %v1162, %v1181
  %v1199 = vadd.f32 %v1163, %v1181
  %v1200 = vadd.f32 %v1164, %v1181
  %v1201 = vadd.f32 %v1165, %v1181
  %v1202 = vadd.f32 %v1166, %v1181
  %v1203 = vadd.f32 %v1167, %v1181
  %v1204 = vadd.f32 %v1168, %v1181
  %v1205 = vadd.f32 %v1169, %v1181
  %v1206 = vadd.f32 %v1170, %v1181
  %v1207 = vadd.f32 %v1171, %v1181
  %v1208 = vadd.f32 %v1172, %v1181
  %v1209 = vadd.f32 %v1173, %v1181
  %v1210 = vadd.f32 %v1174, %v1181
  %v1211 = vadd.f32 %v1175, %v1181
  %v1212 = vadd.f32 %v1176, %v1181
  %v1213 = vadd.f32 %v1177, %v1181
  %v1214 = vadd.f32 %v1178, %v1181
  %v1215 = vmax.f32 %v1183, 0.0
  %v1216 = vmax.f32 %v1184, 0.0
  %v1217 = vmax.f32 %v1185, 0.0
  %v1218 = vmax.f32 %v1186, 0.0
  %v1219 = vmax.f32 %v1187, 0.0
  %v1220 = vmax.f32 %v1188, 0.0
  %v1221 = vmax.f32 %v1189, 0.0
  %v1222 = vmax.f32 %v1190, 0.0
  %v1223 = vmax.f32 %v1191, 0.0
  %v1224 = vmax.f32 %v1192, 0.0
  %v1225 = vmax.f32 %v1193, 0.0
  %v1226 = vmax.f32 %v1194, 0.0
  %v1227 = vmax.f32 %v1195, 0.0
  %v1228 = vmax.f32 %v1196, 0.0
  %v1229 = vmax.f32 %v1197, 0.0
  %v1230 = vmax.f32 %v1198, 0.0
  %v1231 = vmax.f32 %v1199, 0.0
  %v1232 = vmax.f32 %v1200, 0.0
  %v1233 = vmax.f32 %v1201, 0.0
  %v1234 = vmax.f32 %v1202, 0.0
  %v1235 = vmax.f32 %v1203, 0.0
  %v1236 = vmax.f32 %v1204, 0.0
  %v1237 = vmax.f32 %v1205, 0.0
  %v1238 = vmax.f32 %v1206, 0.0
  %v1239 = vmax.f32 %v1207, 0.0
  %v1240 = vmax.f32 %v1208, 0.0
  %v1241 = vmax.f32 %v1209, 0.0
  %v1242 = vmax.f32 %v1210, 0.0
  %v1243 = vmax.f32 %v1211, 0.0
  %v1244 = vmax.f32 %v1212, 0.0
  %v1245 = vmax.f32 %v1213, 0.0
  %v1246 = vmax.f32 %v1214, 0.0
  %v1247 = vpack.c.bf16 %v1215, %v1215
  %v1248 = vpack.c.bf16 %v1216, %v1216
  %v1249 = vpack.c.bf16 %v1217, %v1217
  %v1250 = vpack.c.bf16 %v1218, %v1218
  %v1251 = vpack.c.bf16 %v1219, %v1219
  %v1252 = vpack.c.bf16 %v1220, %v1220
  %v1253 = vpack.c.bf16 %v1221, %v1221
  %v1254 = vpack.c.bf16 %v1222, %v1222
  %v1255 = vpack.c.bf16 %v1223, %v1223
  %v1256 = vpack.c.bf16 %v1224, %v1224
  %v1257 = vpack.c.bf16 %v1225, %v1225
  %v1258 = vpack.c.bf16 %v1226, %v1226
  %v1259 = vpack.c.bf16 %v1227, %v1227
  %v1260 = vpack.c.bf16 %v1228, %v1228
  %v1261 = vpack.c.bf16 %v1229, %v1229
  %v1262 = vpack.c.bf16 %v1230, %v1230
  %v1263 = vpack.c.bf16 %v1231, %v1231
  %v1264 = vpack.c.bf16 %v1232, %v1232
  %v1265 = vpack.c.bf16 %v1233, %v1233
  %v1266 = vpack.c.bf16 %v1234, %v1234
  %v1267 = vpack.c.bf16 %v1235, %v1235
  %v1268 = vpack.c.bf16 %v1236, %v1236
  %v1269 = vpack.c.bf16 %v1237, %v1237
  %v1270 = vpack.c.bf16 %v1238, %v1238
  %v1271 = vpack.c.bf16 %v1239, %v1239
  %v1272 = vpack.c.bf16 %v1240, %v1240
  %v1273 = vpack.c.bf16 %v1241, %v1241
  %v1274 = vpack.c.bf16 %v1242, %v1242
  %v1275 = vpack.c.bf16 %v1243, %v1243
  %v1276 = vpack.c.bf16 %v1244, %v1244
  %v1277 = vpack.c.bf16 %v1245, %v1245
  %v1278 = vpack.c.bf16 %v1246, %v1246
  %vm1279 = vcmask 257024
  %1280 = vst.msk [vmem:[%s4] sm:$0xf] %vm1279, %v1247
  %1281 = vst.msk [vmem:[%s4 + $0x4] sm:$0xf] %vm1279, %v1248
  %1282 = vst.msk [vmem:[%s4 + $0x8] sm:$0xf] %vm1279, %v1249
  %1283 = vst.msk [vmem:[%s4 + $0xc] sm:$0xf] %vm1279, %v1250
  %1284 = vst.msk [vmem:[%s4 + $0x10] sm:$0xf] %vm1279, %v1251
  %1285 = vst.msk [vmem:[%s4 + $0x14] sm:$0xf] %vm1279, %v1252
  %1286 = vst.msk [vmem:[%s4 + $0x18] sm:$0xf] %vm1279, %v1253
  %1287 = vst.msk [vmem:[%s4 + $0x1c] sm:$0xf] %vm1279, %v1254
  %1288 = vst.msk [vmem:[%s4 + $0x20] sm:$0xf] %vm1279, %v1255
  %1289 = vst.msk [vmem:[%s4 + $0x24] sm:$0xf] %vm1279, %v1256
  %1290 = vst.msk [vmem:[%s4 + $0x28] sm:$0xf] %vm1279, %v1257
  %1291 = vst.msk [vmem:[%s4 + $0x2c] sm:$0xf] %vm1279, %v1258
  %1292 = vst.msk [vmem:[%s4 + $0x30] sm:$0xf] %vm1279, %v1259
  %1293 = vst.msk [vmem:[%s4 + $0x34] sm:$0xf] %vm1279, %v1260
  %1294 = vst.msk [vmem:[%s4 + $0x38] sm:$0xf] %vm1279, %v1261
  %1295 = vst.msk [vmem:[%s4 + $0x3c] sm:$0xf] %vm1279, %v1262
  %1296 = vst.msk [vmem:[%s4 + $0x40] sm:$0xf] %vm1279, %v1263
  %1297 = vst.msk [vmem:[%s4 + $0x44] sm:$0xf] %vm1279, %v1264
  %1298 = vst.msk [vmem:[%s4 + $0x48] sm:$0xf] %vm1279, %v1265
  %1299 = vst.msk [vmem:[%s4 + $0x4c] sm:$0xf] %vm1279, %v1266
  %1300 = vst.msk [vmem:[%s4 + $0x50] sm:$0xf] %vm1279, %v1267
  %1301 = vst.msk [vmem:[%s4 + $0x54] sm:$0xf] %vm1279, %v1268
  %1302 = vst.msk [vmem:[%s4 + $0x58] sm:$0xf] %vm1279, %v1269
  %1303 = vst.msk [vmem:[%s4 + $0x5c] sm:$0xf] %vm1279, %v1270
  %1304 = vst.msk [vmem:[%s4 + $0x60] sm:$0xf] %vm1279, %v1271
  %1305 = vst.msk [vmem:[%s4 + $0x64] sm:$0xf] %vm1279, %v1272
  %1306 = vst.msk [vmem:[%s4 + $0x68] sm:$0xf] %vm1279, %v1273
  %1307 = vst.msk [vmem:[%s4 + $0x6c] sm:$0xf] %vm1279, %v1274
  %1308 = vst.msk [vmem:[%s4 + $0x70] sm:$0xf] %vm1279, %v1275
  %1309 = vst.msk [vmem:[%s4 + $0x74] sm:$0xf] %vm1279, %v1276
  %1310 = vst.msk [vmem:[%s4 + $0x78] sm:$0xf] %vm1279, %v1277
  %1311 = vst.msk [vmem:[%s4 + $0x7c] sm:$0xf] %vm1279, %v1278
  // Predicated region
  $region18: #{dqn_forward.3} parent=0 // pred_check
    _
  $region19: #{dqn_forward.3} parent=0 // pred_check_branch
    %1313 = sbr.rel (0) target = $region21
  $region20: #{dqn_forward.3} parent=0 // pred_region
    _
  $region21: #{dqn_forward.3} parent=0 // pred_fallthru
    _
  // Predicated region
  $region22: #{dqn_forward.3} parent=0 // pred_check
    _
  $region23: #{dqn_forward.3} parent=0 // pred_check_branch
    %1315 = sbr.rel (0) target = $region25
  $region24: #{dqn_forward.3} parent=0 // pred_region
    _
  $region25: #{dqn_forward.3} parent=0 // pred_fallthru
    _

// kernel: dqn_forward.4
$region0: #{dqn_forward.4}
  #allocation0 [shape = 'u32[]', space=smem, size = 0x4, offset = 0x4, fixed_abs, tag = 'smem constant byte address 0x4 - core index']
  #allocation1 [shape = 'u32[72,128]{1,0:T(1,128)}', space=vmem, size = 0x9000, scoped, tag = 'internal scratch']
  %s0 = inlined_call_operand.vmem [shape: bf16[32,512], index: 0, kind: input, shape index: {}]
  %s1 = inlined_call_operand.vmem [shape: bf16[512,64], index: 1, kind: input, shape index: {}]
  %s2 = inlined_call_operand.vmem [shape: f32[1,64], index: 2, kind: input, shape index: {}]
  %s3 = inlined_call_operand.vmem [shape: f32[1,64], index: 3, kind: input, shape index: {}]
  %s4 = inlined_call_operand.vmem [shape: bf16[32,64], index: 4, kind: output, shape index: {}]
  %s5 = sld [smem:[#allocation0]]
  $region26: #{dqn_forward.4} parent=0
    _
  %s7 = ssub.s32 1, %s5
  %s8 = scalar_select 0, %s7, %s5
  // Predicated region
  $region2: #{dqn_forward.4} parent=0 // pred_check
    _
  $region3: #{dqn_forward.4} parent=0 // pred_check_branch
    %10 = sbr.rel (0) target = $region5
  $region4: #{dqn_forward.4} parent=0 // pred_region
    _
  $region5: #{dqn_forward.4} parent=0 // pred_fallthru
    _
  // Predicated region
  $region6: #{dqn_forward.4} parent=0 // pred_check
    _
  $region7: #{dqn_forward.4} parent=0 // pred_check_branch
    %12 = sbr.rel (0) target = $region9
  $region8: #{dqn_forward.4} parent=0 // pred_region
    _
  $region9: #{dqn_forward.4} parent=0 // pred_fallthru
    _
  // Predicated region
  $region10: #{dqn_forward.4} parent=0 // pred_check
    _
  $region11: #{dqn_forward.4} parent=0 // pred_check_branch
    %14 = sbr.rel (0) target = $region13
  $region12: #{dqn_forward.4} parent=0 // pred_region
    _
  $region13: #{dqn_forward.4} parent=0 // pred_fallthru
    _
  // Predicated region
  $region14: #{dqn_forward.4} parent=0 // pred_check
    _
  $region15: #{dqn_forward.4} parent=0 // pred_check_branch
    %16 = sbr.rel (0) target = $region17
  $region16: #{dqn_forward.4} parent=0 // pred_region
    _
  $region17: #{dqn_forward.4} parent=0 // pred_fallthru
    _
  %v17 = vld [vmem:[%s0] sm:$0xff]
  %v18 = vld [vmem:[%s0 + $0x8] sm:$0xff]
  %v19 = vld [vmem:[%s0 + $0x10] sm:$0xff]
  %v20 = vld [vmem:[%s0 + $0x18] sm:$0xff]
  %v21 = vld [vmem:[%s0 + $0x20] sm:$0xff]
  %v22 = vld [vmem:[%s0 + $0x28] sm:$0xff]
  %v23 = vld [vmem:[%s0 + $0x30] sm:$0xff]
  %v24 = vld [vmem:[%s0 + $0x38] sm:$0xff]
  %v25 = vld [vmem:[%s1] sm:$0xf]
  %v26 = vld [vmem:[%s1 + $0x4] sm:$0xf]
  %v27 = vld [vmem:[%s1 + $0x8] sm:$0xf]
  %v28 = vld [vmem:[%s1 + $0xc] sm:$0xf]
  %v29 = vld [vmem:[%s1 + $0x10] sm:$0xf]
  %v30 = vld [vmem:[%s1 + $0x14] sm:$0xf]
  %v31 = vld [vmem:[%s1 + $0x18] sm:$0xf]
  %v32 = vld [vmem:[%s1 + $0x1c] sm:$0xf]
  %v33 = vld [vmem:[%s1 + $0x20] sm:$0xf]
  %v34 = vld [vmem:[%s1 + $0x24] sm:$0xf]
  %v35 = vld [vmem:[%s1 + $0x28] sm:$0xf]
  %v36 = vld [vmem:[%s1 + $0x2c] sm:$0xf]
  %v37 = vld [vmem:[%s1 + $0x30] sm:$0xf]
  %v38 = vld [vmem:[%s1 + $0x34] sm:$0xf]
  %v39 = vld [vmem:[%s1 + $0x38] sm:$0xf]
  %v40 = vld [vmem:[%s1 + $0x3c] sm:$0xf]
  %v41 = vld [vmem:[%s1 + $0x40] sm:$0xf]
  %v42 = vld [vmem:[%s1 + $0x44] sm:$0xf]
  %v43 = vld [vmem:[%s1 + $0x48] sm:$0xf]
  %v44 = vld [vmem:[%s1 + $0x4c] sm:$0xf]
  %v45 = vld [vmem:[%s1 + $0x50] sm:$0xf]
  %v46 = vld [vmem:[%s1 + $0x54] sm:$0xf]
  %v47 = vld [vmem:[%s1 + $0x58] sm:$0xf]
  %v48 = vld [vmem:[%s1 + $0x5c] sm:$0xf]
  %v49 = vld [vmem:[%s1 + $0x60] sm:$0xf]
  %v50 = vld [vmem:[%s1 + $0x64] sm:$0xf]
  %v51 = vld [vmem:[%s1 + $0x68] sm:$0xf]
  %v52 = vld [vmem:[%s1 + $0x6c] sm:$0xf]
  %v53 = vld [vmem:[%s1 + $0x70] sm:$0xf]
  %v54 = vld [vmem:[%s1 + $0x74] sm:$0xf]
  %v55 = vld [vmem:[%s1 + $0x78] sm:$0xf]
  %v56 = vld [vmem:[%s1 + $0x7c] sm:$0xf]
  %v57 = vld [vmem:[%s1 + $0x80] sm:$0xf]
  %v58 = vld [vmem:[%s1 + $0x84] sm:$0xf]
  %v59 = vld [vmem:[%s1 + $0x88] sm:$0xf]
  %v60 = vld [vmem:[%s1 + $0x8c] sm:$0xf]
  %v61 = vld [vmem:[%s1 + $0x90] sm:$0xf]
  %v62 = vld [vmem:[%s1 + $0x94] sm:$0xf]
  %v63 = vld [vmem:[%s1 + $0x98] sm:$0xf]
  %v64 = vld [vmem:[%s1 + $0x9c] sm:$0xf]
  %v65 = vld [vmem:[%s1 + $0xa0] sm:$0xf]
  %v66 = vld [vmem:[%s1 + $0xa4] sm:$0xf]
  %v67 = vld [vmem:[%s1 + $0xa8] sm:$0xf]
  %v68 = vld [vmem:[%s1 + $0xac] sm:$0xf]
  %v69 = vld [vmem:[%s1 + $0xb0] sm:$0xf]
  %v70 = vld [vmem:[%s1 + $0xb4] sm:$0xf]
  %v71 = vld [vmem:[%s1 + $0xb8] sm:$0xf]
  %v72 = vld [vmem:[%s1 + $0xbc] sm:$0xf]
  %v73 = vld [vmem:[%s1 + $0xc0] sm:$0xf]
  %v74 = vld [vmem:[%s1 + $0xc4] sm:$0xf]
  %v75 = vld [vmem:[%s1 + $0xc8] sm:$0xf]
  %v76 = vld [vmem:[%s1 + $0xcc] sm:$0xf]
  %v77 = vld [vmem:[%s1 + $0xd0] sm:$0xf]
  %v78 = vld [vmem:[%s1 + $0xd4] sm:$0xf]
  %v79 = vld [vmem:[%s1 + $0xd8] sm:$0xf]
  %v80 = vld [vmem:[%s1 + $0xdc] sm:$0xf]
  %v81 = vld [vmem:[%s1 + $0xe0] sm:$0xf]
  %v82 = vld [vmem:[%s1 + $0xe4] sm:$0xf]
  %v83 = vld [vmem:[%s1 + $0xe8] sm:$0xf]
  %v84 = vld [vmem:[%s1 + $0xec] sm:$0xf]
  %v85 = vld [vmem:[%s1 + $0xf0] sm:$0xf]
  %v86 = vld [vmem:[%s1 + $0xf4] sm:$0xf]
  %v87 = vld [vmem:[%s1 + $0xf8] sm:$0xf]
  %v88 = vld [vmem:[%s1 + $0xfc] sm:$0xf]
  %v97 = vunpack.c.l.b16 %v17
  %v98 = vunpack.c.h.b16 %v17
  %v99 = vunpack.c.l.b16 %v18
  %v100 = vunpack.c.h.b16 %v18
  %v101 = vunpack.c.l.b16 %v19
  %v102 = vunpack.c.h.b16 %v19
  %v103 = vunpack.c.l.b16 %v20
  %v104 = vunpack.c.h.b16 %v20
  %v105 = vunpack.c.l.b16 %v21
  %v106 = vunpack.c.h.b16 %v21
  %v107 = vunpack.c.l.b16 %v22
  %v108 = vunpack.c.h.b16 %v22
  %v109 = vunpack.c.l.b16 %v23
  %v110 = vunpack.c.h.b16 %v23
  %v111 = vunpack.c.l.b16 %v24
  %v112 = vunpack.c.h.b16 %v24
  %v113 = vpack.c.b16 %v101, %v97
  %v114 = vpack.c.b16 %v102, %v98
  %v115 = vpack.c.b16 %v103, %v99
  %v116 = vpack.c.b16 %v104, %v100
  %v117 = vpack.c.b16 %v109, %v105
  %v118 = vpack.c.b16 %v110, %v106
  %v119 = vpack.c.b16 %v111, %v107
  %v120 = vpack.c.b16 %v112, %v108
  %v193 = vunpack.c.l.b16 %v25
  %v194 = vunpack.c.l.b16 %v26
  %v195 = vunpack.c.l.b16 %v27
  %v196 = vunpack.c.l.b16 %v28
  %v197 = vunpack.c.l.b16 %v29
  %v198 = vunpack.c.l.b16 %v30
  %v199 = vunpack.c.l.b16 %v31
  %v200 = vunpack.c.l.b16 %v32
  %v201 = vunpack.c.l.b16 %v33
  %v202 = vunpack.c.l.b16 %v34
  %v203 = vunpack.c.l.b16 %v35
  %v204 = vunpack.c.l.b16 %v36
  %v205 = vunpack.c.l.b16 %v37
  %v206 = vunpack.c.l.b16 %v38
  %v207 = vunpack.c.l.b16 %v39
  %v208 = vunpack.c.l.b16 %v40
  %v209 = vunpack.c.l.b16 %v41
  %v210 = vunpack.c.l.b16 %v42
  %v211 = vunpack.c.l.b16 %v43
  %v212 = vunpack.c.l.b16 %v44
  %v213 = vunpack.c.l.b16 %v45
  %v214 = vunpack.c.l.b16 %v46
  %v215 = vunpack.c.l.b16 %v47
  %v216 = vunpack.c.l.b16 %v48
  %v217 = vunpack.c.l.b16 %v49
  %v218 = vunpack.c.l.b16 %v50
  %v219 = vunpack.c.l.b16 %v51
  %v220 = vunpack.c.l.b16 %v52
  %v221 = vunpack.c.l.b16 %v53
  %v222 = vunpack.c.l.b16 %v54
  %v223 = vunpack.c.l.b16 %v55
  %v224 = vunpack.c.l.b16 %v56
  %v225 = vunpack.c.l.b16 %v57
  %v226 = vunpack.c.l.b16 %v58
  %v227 = vunpack.c.l.b16 %v59
  %v228 = vunpack.c.l.b16 %v60
  %v229 = vunpack.c.l.b16 %v61
  %v230 = vunpack.c.l.b16 %v62
  %v231 = vunpack.c.l.b16 %v63
  %v232 = vunpack.c.l.b16 %v64
  %v233 = vunpack.c.l.b16 %v65
  %v234 = vunpack.c.l.b16 %v66
  %v235 = vunpack.c.l.b16 %v67
  %v236 = vunpack.c.l.b16 %v68
  %v237 = vunpack.c.l.b16 %v69
  %v238 = vunpack.c.l.b16 %v70
  %v239 = vunpack.c.l.b16 %v71
  %v240 = vunpack.c.l.b16 %v72
  %v241 = vunpack.c.l.b16 %v73
  %v242 = vunpack.c.l.b16 %v74
  %v243 = vunpack.c.l.b16 %v75
  %v244 = vunpack.c.l.b16 %v76
  %v245 = vunpack.c.l.b16 %v77
  %v246 = vunpack.c.l.b16 %v78
  %v247 = vunpack.c.l.b16 %v79
  %v248 = vunpack.c.l.b16 %v80
  %v249 = vunpack.c.l.b16 %v81
  %v250 = vunpack.c.l.b16 %v82
  %v251 = vunpack.c.l.b16 %v83
  %v252 = vunpack.c.l.b16 %v84
  %v253 = vunpack.c.l.b16 %v85
  %v254 = vunpack.c.l.b16 %v86
  %v255 = vunpack.c.l.b16 %v87
  %v256 = vunpack.c.l.b16 %v88
  %v257 = vpack.c.b16 %v194, %v193
  %v258 = vpack.c.b16 %v196, %v195
  %v259 = vpack.c.b16 %v198, %v197
  %v260 = vpack.c.b16 %v200, %v199
  %v261 = vpack.c.b16 %v202, %v201
  %v262 = vpack.c.b16 %v204, %v203
  %v263 = vpack.c.b16 %v206, %v205
  %v264 = vpack.c.b16 %v208, %v207
  %v265 = vpack.c.b16 %v210, %v209
  %v266 = vpack.c.b16 %v212, %v211
  %v267 = vpack.c.b16 %v214, %v213
  %v268 = vpack.c.b16 %v216, %v215
  %v269 = vpack.c.b16 %v218, %v217
  %v270 = vpack.c.b16 %v220, %v219
  %v271 = vpack.c.b16 %v222, %v221
  %v272 = vpack.c.b16 %v224, %v223
  %v273 = vpack.c.b16 %v226, %v225
  %v274 = vpack.c.b16 %v228, %v227
  %v275 = vpack.c.b16 %v230, %v229
  %v276 = vpack.c.b16 %v232, %v231
  %v277 = vpack.c.b16 %v234, %v233
  %v278 = vpack.c.b16 %v236, %v235
  %v279 = vpack.c.b16 %v238, %v237
  %v280 = vpack.c.b16 %v240, %v239
  %v281 = vpack.c.b16 %v242, %v241
  %v282 = vpack.c.b16 %v244, %v243
  %v283 = vpack.c.b16 %v246, %v245
  %v284 = vpack.c.b16 %v248, %v247
  %v285 = vpack.c.b16 %v250, %v249
  %v286 = vpack.c.b16 %v252, %v251
  %v287 = vpack.c.b16 %v254, %v253
  %v288 = vpack.c.b16 %v256, %v255
  %321 = vmatpush.bf16.msra.mxu0 %v264
  %322 = vmatpush.bf16.msra.mxu0 %v263
  %323 = vmatpush.bf16.msra.mxu0 %v262
  %324 = vmatpush.bf16.msra.mxu0 %v261
  %325 = vmatpush.bf16.msra.mxu0 %v260
  %326 = vmatpush.bf16.msra.mxu0 %v259
  %327 = vmatpush.bf16.msra.mxu0 %v258
  %328 = vmatpush.bf16.msra.mxu0 %v257
  %329 = vmatmul.bf16.gmra.mxu0 %v113
  %v330 = vpop.f32.mrf.mxu0
  %v331 = vadd.f32 0.0, %v330
  %v332 = vpop.f32.mrf.mxu0
  %v333 = vadd.f32 0.0, %v332
  %334 = vmatmul.bf16.gmra.mxu0 %v117
  %v335 = vpop.f32.mrf.mxu0
  %v336 = vadd.f32 0.0, %v335
  %v337 = vpop.f32.mrf.mxu0
  %v338 = vadd.f32 0.0, %v337
  %339 = vdwg.mxu0
  %340 = vmatpush.bf16.msra.mxu0 %v272
  %341 = vmatpush.bf16.msra.mxu0 %v271
  %342 = vmatpush.bf16.msra.mxu0 %v270
  %343 = vmatpush.bf16.msra.mxu0 %v269
  %344 = vmatpush.bf16.msra.mxu0 %v268
  %345 = vmatpush.bf16.msra.mxu0 %v267
  %346 = vmatpush.bf16.msra.mxu0 %v266
  %347 = vmatpush.bf16.msra.mxu0 %v265
  %348 = vmatmul.bf16.gmra.mxu0 %v114
  %v349 = vpop.f32.mrf.mxu0
  %v350 = vadd.f32 %v331, %v349
  %v351 = vpop.f32.mrf.mxu0
  %v352 = vadd.f32 %v333, %v351
  %353 = vmatmul.bf16.gmra.mxu0 %v118
  %v354 = vpop.f32.mrf.mxu0
  %v355 = vadd.f32 %v336, %v354
  %v356 = vpop.f32.mrf.mxu0
  %v357 = vadd.f32 %v338, %v356
  %358 = vdwg.mxu0
  %359 = vmatpush.bf16.msra.mxu0 %v280
  %360 = vmatpush.bf16.msra.mxu0 %v279
  %361 = vmatpush.bf16.msra.mxu0 %v278
  %362 = vmatpush.bf16.msra.mxu0 %v277
  %363 = vmatpush.bf16.msra.mxu0 %v276
  %364 = vmatpush.bf16.msra.mxu0 %v275
  %365 = vmatpush.bf16.msra.mxu0 %v274
  %366 = vmatpush.bf16.msra.mxu0 %v273
  %367 = vmatmul.bf16.gmra.mxu0 %v115
  %v368 = vpop.f32.mrf.mxu0
  %v369 = vadd.f32 %v350, %v368
  %v370 = vpop.f32.mrf.mxu0
  %v371 = vadd.f32 %v352, %v370
  %372 = vmatmul.bf16.gmra.mxu0 %v119
  %v373 = vpop.f32.mrf.mxu0
  %v374 = vadd.f32 %v355, %v373
  %v375 = vpop.f32.mrf.mxu0
  %v376 = vadd.f32 %v357, %v375
  %377 = vdwg.mxu0
  %378 = vmatpush.bf16.msra.mxu0 %v288
  %379 = vmatpush.bf16.msra.mxu0 %v287
  %380 = vmatpush.bf16.msra.mxu0 %v286
  %381 = vmatpush.bf16.msra.mxu0 %v285
  %382 = vmatpush.bf16.msra.mxu0 %v284
  %383 = vmatpush.bf16.msra.mxu0 %v283
  %384 = vmatpush.bf16.msra.mxu0 %v282
  %385 = vmatpush.bf16.msra.mxu0 %v281
  %386 = vmatmul.bf16.gmra.mxu0 %v116
  %v387 = vpop.f32.mrf.mxu0
  %v388 = vadd.f32 %v369, %v387
  %v389 = vpop.f32.mrf.mxu0
  %v390 = vadd.f32 %v371, %v389
  %391 = vmatmul.bf16.gmra.mxu0 %v120
  %v392 = vpop.f32.mrf.mxu0
  %v393 = vadd.f32 %v374, %v392
  %v394 = vpop.f32.mrf.mxu0
  %v395 = vadd.f32 %v376, %v394
  %396 = vdwg.mxu0
  %vm397 = vcmask 523264
  %v398 = vsel %vm397, %v388, 0.0
  %v399 = vsel %vm397, %v390, 0.0
  %v400 = vadd.f32 %v398, %v399
  %v401 = vsel %vm397, %v393, 0.0
  %v402 = vadd.f32 %v400, %v401
  %v403 = vsel %vm397, %v395, 0.0
  %v404 = vadd.f32 %v402, %v403
  %v405 = vrot.slane %v404, 4
  %v406 = vadd.f32 %v404, %v405
  %v407 = vrot.slane %v406, 2
  %v408 = vadd.f32 %v406, %v407
  %v409 = vrot.slane %v408, 1
  %v410 = vadd.f32 %v408, %v409
  %v411 = vmul.f32 %v410, 0.03125
  %v412 = vsub.f32 %v388, %v411
  %v413 = vsub.f32 %v390, %v411
  %v414 = vsub.f32 %v393, %v411
  %v415 = vsub.f32 %v395, %v411
  %v416 = vmul.f32 %v412, %v412
  %v417 = vmul.f32 %v413, %v413
  %v418 = vmul.f32 %v414, %v414
  %v419 = vmul.f32 %v415, %v415
  %v420 = vsel %vm397, %v416, 0.0
  %v421 = vsel %vm397, %v417, 0.0
  %v422 = vadd.f32 %v420, %v421
  %v423 = vsel %vm397, %v418, 0.0
  %v424 = vadd.f32 %v422, %v423
  %v425 = vsel %vm397, %v419, 0.0
  %v426 = vadd.f32 %v424, %v425
  %v427 = vrot.slane %v426, 4
  %v428 = vadd.f32 %v426, %v427
  %v429 = vrot.slane %v428, 2
  %v430 = vadd.f32 %v428, %v429
  %v431 = vrot.slane %v430, 1
  %v432 = vadd.f32 %v430, %v431
  %v433 = vmul.f32 %v432, 0.03125
  %v434 = vadd.f32 %v433, 1e-05
  %v435 = vrsqrt.pop %v434
  %v436 = vmul.f32 %v435, %v434
  %v437 = vmul.f32 %v436, %v435
  %v438 = vmul.f32 0.5, %v437
  %v439 = vsub.f32 1.5, %v438
  %v440 = vmul.f32 %v435, %v439
  %vm441 = vweird.f32 %v434
  %vm442 = vweird.f32 %v435
  %vm443 = vmor %vm441, %vm442
  %v444 = vsel %vm443, %v435, %v440
  %v445 = vmul.f32 %v412, %v444
  %v446 = vmul.f32 %v413, %v444
  %v447 = vmul.f32 %v414, %v444
  %v448 = vmul.f32 %v415, %v444
  %v449 = vld [vmem:[%s2] sm:$0x1]
  %v451 = vperm.slane %v449, 0
  %v453 = vmul.f32 %v445, %v451
  %v454 = vmul.f32 %v446, %v451
  %v455 = vmul.f32 %v447, %v451
  %v456 = vmul.f32 %v448, %v451
  %v457 = vld [vmem:[%s3] sm:$0x1]
  %v459 = vperm.slane %v457, 0
  %v461 = vadd.f32 %v453, %v459
  %v462 = vadd.f32 %v454, %v459
  %v463 = vadd.f32 %v455, %v459
  %v464 = vadd.f32 %v456, %v459
  %v465 = vmax.f32 %v461, 0.0
  %v466 = vmax.f32 %v462, 0.0
  %v467 = vmax.f32 %v463, 0.0
  %v468 = vmax.f32 %v464, 0.0
  %v469 = vpack.c.bf16 %v465, %v465
  %v470 = vpack.c.bf16 %v466, %v466
  %v471 = vpack.c.bf16 %v467, %v467
  %v472 = vpack.c.bf16 %v468, %v468
  %vm473 = vcmask 519168
  %474 = vst.msk [vmem:[%s4] sm:$0xf] %vm473, %v469
  %475 = vst.msk [vmem:[%s4 + $0x4] sm:$0xf] %vm473, %v470
  %476 = vst.msk [vmem:[%s4 + $0x8] sm:$0xf] %vm473, %v471
  %477 = vst.msk [vmem:[%s4 + $0xc] sm:$0xf] %vm473, %v472
  // Predicated region
  $region18: #{dqn_forward.4} parent=0 // pred_check
    _
  $region19: #{dqn_forward.4} parent=0 // pred_check_branch
    %479 = sbr.rel (0) target = $region21
  $region20: #{dqn_forward.4} parent=0 // pred_region
    _
  $region21: #{dqn_forward.4} parent=0 // pred_fallthru
    _
  // Predicated region
  $region22: #{dqn_forward.4} parent=0 // pred_check
    _
  $region23: #{dqn_forward.4} parent=0 // pred_check_branch
    %481 = sbr.rel (0) target = $region25
  $region24: #{dqn_forward.4} parent=0 // pred_region
    _
  $region25: #{dqn_forward.4} parent=0 // pred_fallthru
    _

// kernel: dqn_forward.5
$region0: #{dqn_forward.5}
  #allocation0 [shape = 'u32[]', space=smem, size = 0x4, offset = 0x4, fixed_abs, tag = 'smem constant byte address 0x4 - core index']
  #allocation1 [shape = 'u32[72,128]{1,0:T(1,128)}', space=vmem, size = 0x9000, scoped, tag = 'internal scratch']
  %s0 = inlined_call_operand.vmem [shape: bf16[4,2,576], index: 0, kind: input, shape index: {}]
  %s1 = inlined_call_operand.vmem [shape: bf16[576,64], index: 1, kind: input, shape index: {}]
  %s2 = inlined_call_operand.vmem [shape: f32[1,64], index: 2, kind: input, shape index: {}]
  %s3 = inlined_call_operand.vmem [shape: bf16[4,64,512], index: 3, kind: input, shape index: {}]
  %s4 = inlined_call_operand.vmem [shape: f32[1,512], index: 4, kind: input, shape index: {}]
  %s5 = inlined_call_operand.vmem [shape: bf16[512,128], index: 5, kind: input, shape index: {}]
  %s6 = inlined_call_operand.vmem [shape: f32[1,128], index: 6, kind: input, shape index: {}]
  %s7 = inlined_call_operand.hbm [shape: f32[2,128], index: 7, kind: output, shape index: {}]
  %s8 = sld [smem:[#allocation0]]
  $region38: #{dqn_forward.5} parent=0
    _
  %s10 = ssub.s32 1, %s8
  %s11 = scalar_select 0, %s10, %s8
  $region1: #{dqn_forward.5} parent=0
    #allocation2 [shape = 'u8[1024]{0}', space=vmem, size = 0x400, scoped, tag = 'output window, operand 0, single buffered']
    #allocation3 [shape = 's32[1]{0}', space=sflag, size = 0x4, scoped, tag = 'scoped memory for dqn_forward.5']
    %12 = vsyncpa [#allocation3], 0
    // Predicated region
    $region2: #{dqn_forward.5} parent=1 // pred_check
      _
    $region3: #{dqn_forward.5} parent=1 // pred_check_branch
      %14 = sbr.rel (0) target = $region5
    $region4: #{dqn_forward.5} parent=1 // pred_region
      _
    $region5: #{dqn_forward.5} parent=1 // pred_fallthru
      _
    // Predicated region
    $region6: #{dqn_forward.5} parent=1 // pred_check
      _
    $region7: #{dqn_forward.5} parent=1 // pred_check_branch
      %16 = sbr.rel (0) target = $region9
    $region8: #{dqn_forward.5} parent=1 // pred_region
      _
    $region9: #{dqn_forward.5} parent=1 // pred_fallthru
      _
    // Predicated region
    $region10: #{dqn_forward.5} parent=1 // pred_check
      _
    $region11: #{dqn_forward.5} parent=1 // pred_check_branch
      %18 = sbr.rel (0) target = $region13
    $region12: #{dqn_forward.5} parent=1 // pred_region
      _
    $region13: #{dqn_forward.5} parent=1 // pred_fallthru
      _
    // Predicated region
    $region14: #{dqn_forward.5} parent=1 // pred_check
      _
    $region15: #{dqn_forward.5} parent=1 // pred_check_branch
      %20 = sbr.rel (0) target = $region17
    $region16: #{dqn_forward.5} parent=1 // pred_region
      _
    $region17: #{dqn_forward.5} parent=1 // pred_fallthru
      _
    // Predicated region
    $region18: #{dqn_forward.5} parent=1 // pred_check
      _
    $region19: #{dqn_forward.5} parent=1 // pred_check_branch
      %22 = sbr.rel (0) target = $region21
    $region20: #{dqn_forward.5} parent=1 // pred_region
      _
    $region21: #{dqn_forward.5} parent=1 // pred_fallthru
      _
    // Predicated region
    $region22: #{dqn_forward.5} parent=1 // pred_check
      _
    $region23: #{dqn_forward.5} parent=1 // pred_check_branch
      %24 = sbr.rel (0) target = $region25
    $region24: #{dqn_forward.5} parent=1 // pred_region
      _
    $region25: #{dqn_forward.5} parent=1 // pred_fallthru
      _
    // Predicated region
    $region26: #{dqn_forward.5} parent=1 // pred_check
      _
    $region27: #{dqn_forward.5} parent=1 // pred_check_branch
      %26 = sbr.rel (0) target = $region29
    $region28: #{dqn_forward.5} parent=1 // pred_region
      _
    $region29: #{dqn_forward.5} parent=1 // pred_fallthru
      _
    %v28 = vld [vmem:[%s1] sm:$0xf]
    %v29 = vld [vmem:[%s1 + $0x4] sm:$0xf]
    %v30 = vld [vmem:[%s1 + $0x8] sm:$0xf]
    %v31 = vld [vmem:[%s1 + $0xc] sm:$0xf]
    %v32 = vld [vmem:[%s1 + $0x10] sm:$0xf]
    %v33 = vld [vmem:[%s1 + $0x14] sm:$0xf]
    %v34 = vld [vmem:[%s1 + $0x18] sm:$0xf]
    %v35 = vld [vmem:[%s1 + $0x1c] sm:$0xf]
    %v36 = vld [vmem:[%s1 + $0x20] sm:$0xf]
    %v37 = vld [vmem:[%s1 + $0x24] sm:$0xf]
    %v38 = vld [vmem:[%s1 + $0x28] sm:$0xf]
    %v39 = vld [vmem:[%s1 + $0x2c] sm:$0xf]
    %v40 = vld [vmem:[%s1 + $0x30] sm:$0xf]
    %v41 = vld [vmem:[%s1 + $0x34] sm:$0xf]
    %v42 = vld [vmem:[%s1 + $0x38] sm:$0xf]
    %v43 = vld [vmem:[%s1 + $0x3c] sm:$0xf]
    %v44 = vld [vmem:[%s1 + $0x40] sm:$0xf]
    %v45 = vld [vmem:[%s1 + $0x44] sm:$0xf]
    %v46 = vld [vmem:[%s1 + $0x48] sm:$0xf]
    %v47 = vld [vmem:[%s1 + $0x4c] sm:$0xf]
    %v48 = vld [vmem:[%s1 + $0x50] sm:$0xf]
    %v49 = vld [vmem:[%s1 + $0x54] sm:$0xf]
    %v50 = vld [vmem:[%s1 + $0x58] sm:$0xf]
    %v51 = vld [vmem:[%s1 + $0x5c] sm:$0xf]
    %v52 = vld [vmem:[%s1 + $0x60] sm:$0xf]
    %v53 = vld [vmem:[%s1 + $0x64] sm:$0xf]
    %v54 = vld [vmem:[%s1 + $0x68] sm:$0xf]
    %v55 = vld [vmem:[%s1 + $0x6c] sm:$0xf]
    %v56 = vld [vmem:[%s1 + $0x70] sm:$0xf]
    %v57 = vld [vmem:[%s1 + $0x74] sm:$0xf]
    %v58 = vld [vmem:[%s1 + $0x78] sm:$0xf]
    %v59 = vld [vmem:[%s1 + $0x7c] sm:$0xf]
    %v60 = vld [vmem:[%s1 + $0x80] sm:$0xf]
    %v61 = vld [vmem:[%s1 + $0x84] sm:$0xf]
    %v62 = vld [vmem:[%s1 + $0x88] sm:$0xf]
    %v63 = vld [vmem:[%s1 + $0x8c] sm:$0xf]
    %v64 = vld [vmem:[%s1 + $0x90] sm:$0xf]
    %v65 = vld [vmem:[%s1 + $0x94] sm:$0xf]
    %v66 = vld [vmem:[%s1 + $0x98] sm:$0xf]
    %v67 = vld [vmem:[%s1 + $0x9c] sm:$0xf]
    %v68 = vld [vmem:[%s1 + $0xa0] sm:$0xf]
    %v69 = vld [vmem:[%s1 + $0xa4] sm:$0xf]
    %v70 = vld [vmem:[%s1 + $0xa8] sm:$0xf]
    %v71 = vld [vmem:[%s1 + $0xac] sm:$0xf]
    %v72 = vld [vmem:[%s1 + $0xb0] sm:$0xf]
    %v73 = vld [vmem:[%s1 + $0xb4] sm:$0xf]
    %v74 = vld [vmem:[%s1 + $0xb8] sm:$0xf]
    %v75 = vld [vmem:[%s1 + $0xbc] sm:$0xf]
    %v76 = vld [vmem:[%s1 + $0xc0] sm:$0xf]
    %v77 = vld [vmem:[%s1 + $0xc4] sm:$0xf]
    %v78 = vld [vmem:[%s1 + $0xc8] sm:$0xf]
    %v79 = vld [vmem:[%s1 + $0xcc] sm:$0xf]
    %v80 = vld [vmem:[%s1 + $0xd0] sm:$0xf]
    %v81 = vld [vmem:[%s1 + $0xd4] sm:$0xf]
    %v82 = vld [vmem:[%s1 + $0xd8] sm:$0xf]
    %v83 = vld [vmem:[%s1 + $0xdc] sm:$0xf]
    %v84 = vld [vmem:[%s1 + $0xe0] sm:$0xf]
    %v85 = vld [vmem:[%s1 + $0xe4] sm:$0xf]
    %v86 = vld [vmem:[%s1 + $0xe8] sm:$0xf]
    %v87 = vld [vmem:[%s1 + $0xec] sm:$0xf]
    %v88 = vld [vmem:[%s1 + $0xf0] sm:$0xf]
    %v89 = vld [vmem:[%s1 + $0xf4] sm:$0xf]
    %v90 = vld [vmem:[%s1 + $0xf8] sm:$0xf]
    %v91 = vld [vmem:[%s1 + $0xfc] sm:$0xf]
    %v92 = vld [vmem:[%s1 + $0x100] sm:$0xf]
    %v93 = vld [vmem:[%s1 + $0x104] sm:$0xf]
    %v94 = vld [vmem:[%s1 + $0x108] sm:$0xf]
    %v95 = vld [vmem:[%s1 + $0x10c] sm:$0xf]
    %v96 = vld [vmem:[%s1 + $0x110] sm:$0xf]
    %v97 = vld [vmem:[%s1 + $0x114] sm:$0xf]
    %v98 = vld [vmem:[%s1 + $0x118] sm:$0xf]
    %v99 = vld [vmem:[%s1 + $0x11c] sm:$0xf]
    %v100 = vld [vmem:[%s2] sm:$0x1]
    %v101 = vld [vmem:[%s0] sm:$0x1f]
    %v103 = vperm.slane %v100, 0
    %106 = vst [vmem:[#allocation1] ss:$9 sm:$0xff] %v101
    %v107 = vld [vmem:[#allocation1] sm:$0xff]
    %v108 = vld [vmem:[#allocation1 + $0x9] sm:$0xff]
    %v109 = vld [vmem:[#allocation1 + $0x12] sm:$0xff]
    %v110 = vld [vmem:[#allocation1 + $0x1b] sm:$0xff]
    %v111 = vld [vmem:[#allocation1 + $0x24] sm:$0xff]
    %v188 = vunpack.c.l.b16 %v28
    %v189 = vunpack.c.l.b16 %v29
    %v190 = vunpack.c.l.b16 %v30
    %v191 = vunpack.c.l.b16 %v31
    %v192 = vunpack.c.l.b16 %v32
    %v193 = vunpack.c.l.b16 %v33
    %v194 = vunpack.c.l.b16 %v34
    %v195 = vunpack.c.l.b16 %v35
    %v196 = vunpack.c.l.b16 %v36
    %v197 = vunpack.c.l.b16 %v37
    %v198 = vunpack.c.l.b16 %v38
    %v199 = vunpack.c.l.b16 %v39
    %v200 = vunpack.c.l.b16 %v40
    %v201 = vunpack.c.l.b16 %v41
    %v202 = vunpack.c.l.b16 %v42
    %v203 = vunpack.c.l.b16 %v43
    %v204 = vunpack.c.l.b16 %v44
    %v205 = vunpack.c.l.b16 %v45
    %v206 = vunpack.c.l.b16 %v46
    %v207 = vunpack.c.l.b16 %v47
    %v208 = vunpack.c.l.b16 %v48
    %v209 = vunpack.c.l.b16 %v49
    %v210 = vunpack.c.l.b16 %v50
    %v211 = vunpack.c.l.b16 %v51
    %v212 = vunpack.c.l.b16 %v52
    %v213 = vunpack.c.l.b16 %v53
    %v214 = vunpack.c.l.b16 %v54
    %v215 = vunpack.c.l.b16 %v55
    %v216 = vunpack.c.l.b16 %v56
    %v217 = vunpack.c.l.b16 %v57
    %v218 = vunpack.c.l.b16 %v58
    %v219 = vunpack.c.l.b16 %v59
    %v220 = vunpack.c.l.b16 %v60
    %v221 = vunpack.c.l.b16 %v61
    %v222 = vunpack.c.l.b16 %v62
    %v223 = vunpack.c.l.b16 %v63
    %v224 = vunpack.c.l.b16 %v64
    %v225 = vunpack.c.l.b16 %v65
    %v226 = vunpack.c.l.b16 %v66
    %v227 = vunpack.c.l.b16 %v67
    %v228 = vunpack.c.l.b16 %v68
    %v229 = vunpack.c.l.b16 %v69
    %v230 = vunpack.c.l.b16 %v70
    %v231 = vunpack.c.l.b16 %v71
    %v232 = vunpack.c.l.b16 %v72
    %v233 = vunpack.c.l.b16 %v73
    %v234 = vunpack.c.l.b16 %v74
    %v235 = vunpack.c.l.b16 %v75
    %v236 = vunpack.c.l.b16 %v76
    %v237 = vunpack.c.l.b16 %v77
    %v238 = vunpack.c.l.b16 %v78
    %v239 = vunpack.c.l.b16 %v79
    %v240 = vunpack.c.l.b16 %v80
    %v241 = vunpack.c.l.b16 %v81
    %v242 = vunpack.c.l.b16 %v82
    %v243 = vunpack.c.l.b16 %v83
    %v244 = vunpack.c.l.b16 %v84
    %v245 = vunpack.c.l.b16 %v85
    %v246 = vunpack.c.l.b16 %v86
    %v247 = vunpack.c.l.b16 %v87
    %v248 = vunpack.c.l.b16 %v88
    %v249 = vunpack.c.l.b16 %v89
    %v250 = vunpack.c.l.b16 %v90
    %v251 = vunpack.c.l.b16 %v91
    %v252 = vunpack.c.l.b16 %v92
    %v253 = vunpack.c.l.b16 %v93
    %v254 = vunpack.c.l.b16 %v94
    %v255 = vunpack.c.l.b16 %v95
    %v256 = vunpack.c.l.b16 %v96
    %v257 = vunpack.c.l.b16 %v97
    %v258 = vunpack.c.l.b16 %v98
    %v259 = vunpack.c.l.b16 %v99
    %v260 = vpack.c.b16 %v189, %v188
    %v261 = vpack.c.b16 %v191, %v190
    %v262 = vpack.c.b16 %v193, %v192
    %v263 = vpack.c.b16 %v195, %v194
    %v264 = vpack.c.b16 %v197, %v196
    %v265 = vpack.c.b16 %v199, %v198
    %v266 = vpack.c.b16 %v201, %v200
    %v267 = vpack.c.b16 %v203, %v202
    %v268 = vpack.c.b16 %v205, %v204
    %v269 = vpack.c.b16 %v207, %v206
    %v270 = vpack.c.b16 %v209, %v208
    %v271 = vpack.c.b16 %v211, %v210
    %v272 = vpack.c.b16 %v213, %v212
    %v273 = vpack.c.b16 %v215, %v214
    %v274 = vpack.c.b16 %v217, %v216
    %v275 = vpack.c.b16 %v219, %v218
    %v276 = vpack.c.b16 %v221, %v220
    %v277 = vpack.c.b16 %v223, %v222
    %v278 = vpack.c.b16 %v225, %v224
    %v279 = vpack.c.b16 %v227, %v226
    %v280 = vpack.c.b16 %v229, %v228
    %v281 = vpack.c.b16 %v231, %v230
    %v282 = vpack.c.b16 %v233, %v232
    %v283 = vpack.c.b16 %v235, %v234
    %v284 = vpack.c.b16 %v237, %v236
    %v285 = vpack.c.b16 %v239, %v238
    %v286 = vpack.c.b16 %v241, %v240
    %v287 = vpack.c.b16 %v243, %v242
    %v288 = vpack.c.b16 %v245, %v244
    %v289 = vpack.c.b16 %v247, %v246
    %v290 = vpack.c.b16 %v249, %v248
    %v291 = vpack.c.b16 %v251, %v250
    %v292 = vpack.c.b16 %v253, %v252
    %v293 = vpack.c.b16 %v255, %v254
    %v294 = vpack.c.b16 %v257, %v256
    %v295 = vpack.c.b16 %v259, %v258
    %vm332 = vcmask 523264
    %v333 = vsel %vm332, %v111, 0
    %335 = vmatpush.bf16.msra.mxu0 %v267
    %336 = vmatpush.bf16.msra.mxu0 %v266
    %337 = vmatpush.bf16.msra.mxu0 %v265
    %338 = vmatpush.bf16.msra.mxu0 %v264
    %339 = vmatpush.bf16.msra.mxu0 %v263
    %340 = vmatpush.bf16.msra.mxu0 %v262
    %341 = vmatpush.bf16.msra.mxu0 %v261
    %342 = vmatpush.bf16.msra.mxu0 %v260
    %343 = vmatmul.bf16.gmra.mxu0 %v107
    %v344 = vpop.f32.mrf.mxu0
    %v345 = vadd.f32 %v103, %v344
    %v346 = vpop.f32.mrf.mxu0
    %347 = vdwg.mxu0
    %348 = vmatpush.bf16.msra.mxu0 %v275
    %349 = vmatpush.bf16.msra.mxu0 %v274
    %350 = vmatpush.bf16.msra.mxu0 %v273
    %351 = vmatpush.bf16.msra.mxu0 %v272
    %352 = vmatpush.bf16.msra.mxu0 %v271
    %353 = vmatpush.bf16.msra.mxu0 %v270
    %354 = vmatpush.bf16.msra.mxu0 %v269
    %355 = vmatpush.bf16.msra.mxu0 %v268
    %356 = vmatmul.bf16.gmra.mxu0 %v108
    %v357 = vpop.f32.mrf.mxu0
    %v358 = vadd.f32 %v345, %v357
    %v359 = vpop.f32.mrf.mxu0
    %360 = vdwg.mxu0
    %361 = vmatpush.bf16.msra.mxu0 %v283
    %362 = vmatpush.bf16.msra.mxu0 %v282
    %363 = vmatpush.bf16.msra.mxu0 %v281
    %364 = vmatpush.bf16.msra.mxu0 %v280
    %365 = vmatpush.bf16.msra.mxu0 %v279
    %366 = vmatpush.bf16.msra.mxu0 %v278
    %367 = vmatpush.bf16.msra.mxu0 %v277
    %368 = vmatpush.bf16.msra.mxu0 %v276
    %369 = vmatmul.bf16.gmra.mxu0 %v109
    %v370 = vpop.f32.mrf.mxu0
    %v371 = vadd.f32 %v358, %v370
    %v372 = vpop.f32.mrf.mxu0
    %373 = vdwg.mxu0
    %374 = vmatpush.bf16.msra.mxu0 %v291
    %375 = vmatpush.bf16.msra.mxu0 %v290
    %376 = vmatpush.bf16.msra.mxu0 %v289
    %377 = vmatpush.bf16.msra.mxu0 %v288
    %378 = vmatpush.bf16.msra.mxu0 %v287
    %379 = vmatpush.bf16.msra.mxu0 %v286
    %380 = vmatpush.bf16.msra.mxu0 %v285
    %381 = vmatpush.bf16.msra.mxu0 %v284
    %382 = vmatmul.bf16.gmra.mxu0 %v110
    %v383 = vpop.f32.mrf.mxu0
    %v384 = vadd.f32 %v371, %v383
    %v385 = vpop.f32.mrf.mxu0
    %386 = vdwg.mxu0
    %387 = vmatpush.bf16.msra.mxu0 0
    %388 = vmatpush.bf16.msra.mxu0 0
    %389 = vmatpush.bf16.msra.mxu0 0
    %390 = vmatpush.bf16.msra.mxu0 0
    %391 = vmatpush.bf16.msra.mxu0 %v295
    %392 = vmatpush.bf16.msra.mxu0 %v294
    %393 = vmatpush.bf16.msra.mxu0 %v293
    %394 = vmatpush.bf16.msra.mxu0 %v292
    %395 = vmatmul.bf16.gmra.mxu0 %v333
    %v396 = vpop.f32.mrf.mxu0
    %v397 = vadd.f32 %v384, %v396
    %v398 = vpop.f32.mrf.mxu0
    %399 = vdwg.mxu0
    %v400 = vmax.f32 %v397, 0.0
    %v401 = vpack.c.bf16 %v400, %v400
    %v402 = vld [vmem:[%s3] sm:$0xff]
    %v403 = vld [vmem:[%s3 + $0x8] sm:$0xff]
    %v404 = vld [vmem:[%s3 + $0x10] sm:$0xff]
    %v405 = vld [vmem:[%s3 + $0x18] sm:$0xff]
    %v406 = vld [vmem:[%s3 + $0x20] sm:$0xff]
    %v407 = vld [vmem:[%s3 + $0x28] sm:$0xff]
    %v408 = vld [vmem:[%s3 + $0x30] sm:$0xff]
    %v409 = vld [vmem:[%s3 + $0x38] sm:$0xff]
    %v410 = vld [vmem:[%s3 + $0x40] sm:$0xff]
    %v411 = vld [vmem:[%s3 + $0x48] sm:$0xff]
    %v412 = vld [vmem:[%s3 + $0x50] sm:$0xff]
    %v413 = vld [vmem:[%s3 + $0x58] sm:$0xff]
    %v414 = vld [vmem:[%s3 + $0x60] sm:$0xff]
    %v415 = vld [vmem:[%s3 + $0x68] sm:$0xff]
    %v416 = vld [vmem:[%s3 + $0x70] sm:$0xff]
    %v417 = vld [vmem:[%s3 + $0x78] sm:$0xff]
    %s418 = scalar_lea.vmem %s0, 5
    %v419 = vld [vmem:[%s418] sm:$0x1f]
    %421 = vst [vmem:[#allocation1] ss:$9 sm:$0xff] %v419
    %v422 = vld [vmem:[#allocation1] sm:$0xff]
    %v423 = vld [vmem:[#allocation1 + $0x9] sm:$0xff]
    %v424 = vld [vmem:[#allocation1 + $0x12] sm:$0xff]
    %v425 = vld [vmem:[#allocation1 + $0x1b] sm:$0xff]
    %v426 = vld [vmem:[#allocation1 + $0x24] sm:$0xff]
    %v431 = vsel %vm332, %v426, 0
    %433 = vmatpush.bf16.msra.mxu0 %v267
    %434 = vmatpush.bf16.msra.mxu0 %v266
    %435 = vmatpush.bf16.msra.mxu0 %v265
    %436 = vmatpush.bf16.msra.mxu0 %v264
    %437 = vmatpush.bf16.msra.mxu0 %v263
    %438 = vmatpush.bf16.msra.mxu0 %v262
    %439 = vmatpush.bf16.msra.mxu0 %v261
    %440 = vmatpush.bf16.msra.mxu0 %v260
    %441 = vmatmul.bf16.gmra.mxu0 %v422
    %v442 = vpop.f32.mrf.mxu0
    %v443 = vadd.f32 %v103, %v442
    %v444 = vpop.f32.mrf.mxu0
    %445 = vdwg.mxu0
    %446 = vmatpush.bf16.msra.mxu0 %v275
    %447 = vmatpush.bf16.msra.mxu0 %v274
    %448 = vmatpush.bf16.msra.mxu0 %v273
    %449 = vmatpush.bf16.msra.mxu0 %v272
    %450 = vmatpush.bf16.msra.mxu0 %v271
    %451 = vmatpush.bf16.msra.mxu0 %v270
    %452 = vmatpush.bf16.msra.mxu0 %v269
    %453 = vmatpush.bf16.msra.mxu0 %v268
    %454 = vmatmul.bf16.gmra.mxu0 %v423
    %v455 = vpop.f32.mrf.mxu0
    %v456 = vadd.f32 %v443, %v455
    %v457 = vpop.f32.mrf.mxu0
    %458 = vdwg.mxu0
    %459 = vmatpush.bf16.msra.mxu0 %v283
    %460 = vmatpush.bf16.msra.mxu0 %v282
    %461 = vmatpush.bf16.msra.mxu0 %v281
    %462 = vmatpush.bf16.msra.mxu0 %v280
    %463 = vmatpush.bf16.msra.mxu0 %v279
    %464 = vmatpush.bf16.msra.mxu0 %v278
    %465 = vmatpush.bf16.msra.mxu0 %v277
    %466 = vmatpush.bf16.msra.mxu0 %v276
    %467 = vmatmul.bf16.gmra.mxu0 %v424
    %v468 = vpop.f32.mrf.mxu0
    %v469 = vadd.f32 %v456, %v468
    %v470 = vpop.f32.mrf.mxu0
    %471 = vdwg.mxu0
    %472 = vmatpush.bf16.msra.mxu0 %v291
    %473 = vmatpush.bf16.msra.mxu0 %v290
    %474 = vmatpush.bf16.msra.mxu0 %v289
    %475 = vmatpush.bf16.msra.mxu0 %v288
    %476 = vmatpush.bf16.msra.mxu0 %v287
    %477 = vmatpush.bf16.msra.mxu0 %v286
    %478 = vmatpush.bf16.msra.mxu0 %v285
    %479 = vmatpush.bf16.msra.mxu0 %v284
    %480 = vmatmul.bf16.gmra.mxu0 %v425
    %v481 = vpop.f32.mrf.mxu0
    %v482 = vadd.f32 %v469, %v481
    %v483 = vpop.f32.mrf.mxu0
    %484 = vdwg.mxu0
    %485 = vmatpush.bf16.msra.mxu0 0
    %486 = vmatpush.bf16.msra.mxu0 0
    %487 = vmatpush.bf16.msra.mxu0 0
    %488 = vmatpush.bf16.msra.mxu0 0
    %489 = vmatpush.bf16.msra.mxu0 %v295
    %490 = vmatpush.bf16.msra.mxu0 %v294
    %491 = vmatpush.bf16.msra.mxu0 %v293
    %492 = vmatpush.bf16.msra.mxu0 %v292
    %493 = vmatmul.bf16.gmra.mxu0 %v431
    %v494 = vpop.f32.mrf.mxu0
    %v495 = vadd.f32 %v482, %v494
    %v496 = vpop.f32.mrf.mxu0
    %497 = vdwg.mxu0
    %v498 = vmax.f32 %v495, 0.0
    %v499 = vpack.c.bf16 %v498, %v498
    %s500 = scalar_lea.vmem %s3, 128
    %v501 = vld [vmem:[%s500] sm:$0xff]
    %v502 = vld [vmem:[%s500 + $0x8] sm:$0xff]
    %v503 = vld [vmem:[%s500 + $0x10] sm:$0xff]
    %v504 = vld [vmem:[%s500 + $0x18] sm:$0xff]
    %v505 = vld [vmem:[%s500 + $0x20] sm:$0xff]
    %v506 = vld [vmem:[%s500 + $0x28] sm:$0xff]
    %v507 = vld [vmem:[%s500 + $0x30] sm:$0xff]
    %v508 = vld [vmem:[%s500 + $0x38] sm:$0xff]
    %v509 = vld [vmem:[%s500 + $0x40] sm:$0xff]
    %v510 = vld [vmem:[%s500 + $0x48] sm:$0xff]
    %v511 = vld [vmem:[%s500 + $0x50] sm:$0xff]
    %v512 = vld [vmem:[%s500 + $0x58] sm:$0xff]
    %v513 = vld [vmem:[%s500 + $0x60] sm:$0xff]
    %v514 = vld [vmem:[%s500 + $0x68] sm:$0xff]
    %v515 = vld [vmem:[%s500 + $0x70] sm:$0xff]
    %v516 = vld [vmem:[%s500 + $0x78] sm:$0xff]
    %v533 = vunpack.c.l.b16 %v501
    %v534 = vunpack.c.h.b16 %v501
    %v535 = vunpack.c.l.b16 %v502
    %v536 = vunpack.c.h.b16 %v502
    %v537 = vunpack.c.l.b16 %v503
    %v538 = vunpack.c.h.b16 %v503
    %v539 = vunpack.c.l.b16 %v504
    %v540 = vunpack.c.h.b16 %v504
    %v541 = vunpack.c.l.b16 %v505
    %v542 = vunpack.c.h.b16 %v505
    %v543 = vunpack.c.l.b16 %v506
    %v544 = vunpack.c.h.b16 %v506
    %v545 = vunpack.c.l.b16 %v507
    %v546 = vunpack.c.h.b16 %v507
    %v547 = vunpack.c.l.b16 %v508
    %v548 = vunpack.c.h.b16 %v508
    %v549 = vunpack.c.l.b16 %v509
    %v550 = vunpack.c.h.b16 %v509
    %v551 = vunpack.c.l.b16 %v510
    %v552 = vunpack.c.h.b16 %v510
    %v553 = vunpack.c.l.b16 %v511
    %v554 = vunpack.c.h.b16 %v511
    %v555 = vunpack.c.l.b16 %v512
    %v556 = vunpack.c.h.b16 %v512
    %v557 = vunpack.c.l.b16 %v513
    %v558 = vunpack.c.h.b16 %v513
    %v559 = vunpack.c.l.b16 %v514
    %v560 = vunpack.c.h.b16 %v514
    %v561 = vunpack.c.l.b16 %v515
    %v562 = vunpack.c.h.b16 %v515
    %v563 = vunpack.c.l.b16 %v516
    %v564 = vunpack.c.h.b16 %v516
    %v565 = vpack.c.b16 %v537, %v533
    %v566 = vpack.c.b16 %v538, %v534
    %v567 = vpack.c.b16 %v539, %v535
    %v568 = vpack.c.b16 %v540, %v536
    %v569 = vpack.c.b16 %v545, %v541
    %v570 = vpack.c.b16 %v546, %v542
    %v571 = vpack.c.b16 %v547, %v543
    %v572 = vpack.c.b16 %v548, %v544
    %v573 = vpack.c.b16 %v553, %v549
    %v574 = vpack.c.b16 %v554, %v550
    %v575 = vpack.c.b16 %v555, %v551
    %v576 = vpack.c.b16 %v556, %v552
    %v577 = vpack.c.b16 %v561, %v557
    %v578 = vpack.c.b16 %v562, %v558
    %v579 = vpack.c.b16 %v563, %v559
    %v580 = vpack.c.b16 %v564, %v560
    %v598 = vsel %vm332, %v499, 0
    %600 = vmatpush.bf16.msra.mxu0 0
    %601 = vmatpush.bf16.msra.mxu0 0
    %602 = vmatpush.bf16.msra.mxu0 0
    %603 = vmatpush.bf16.msra.mxu0 0
    %604 = vmatpush.bf16.msra.mxu0 %v577
    %605 = vmatpush.bf16.msra.mxu0 %v573
    %606 = vmatpush.bf16.msra.mxu0 %v569
    %607 = vmatpush.bf16.msra.mxu0 %v565
    %608 = vmatmul.bf16.gmra.mxu0 %v598
    %v609 = vpop.f32.mrf.mxu0
    %v610 = vadd.f32 0.0, %v609
    %v611 = vpop.f32.mrf.mxu0
    %612 = vdwg.mxu0
    %613 = vmatpush.bf16.msra.mxu0 0
    %614 = vmatpush.bf16.msra.mxu0 0
    %615 = vmatpush.bf16.msra.mxu0 0
    %616 = vmatpush.bf16.msra.mxu0 0
    %617 = vmatpush.bf16.msra.mxu0 %v578
    %618 = vmatpush.bf16.msra.mxu0 %v574
    %619 = vmatpush.bf16.msra.mxu0 %v570
    %620 = vmatpush.bf16.msra.mxu0 %v566
    %621 = vmatmul.bf16.gmra.mxu0 %v598
    %v622 = vpop.f32.mrf.mxu0
    %v623 = vadd.f32 0.0, %v622
    %v624 = vpop.f32.mrf.mxu0
    %625 = vdwg.mxu0
    %626 = vmatpush.bf16.msra.mxu0 0
    %627 = vmatpush.bf16.msra.mxu0 0
    %628 = vmatpush.bf16.msra.mxu0 0
    %629 = vmatpush.bf16.msra.mxu0 0
    %630 = vmatpush.bf16.msra.mxu0 %v579
    %631 = vmatpush.bf16.msra.mxu0 %v575
    %632 = vmatpush.bf16.msra.mxu0 %v571
    %633 = vmatpush.bf16.msra.mxu0 %v567
    %634 = vmatmul.bf16.gmra.mxu0 %v598
    %v635 = vpop.f32.mrf.mxu0
    %v636 = vadd.f32 0.0, %v635
    %v637 = vpop.f32.mrf.mxu0
    %638 = vdwg.mxu0
    %639 = vmatpush.bf16.msra.mxu0 0
    %640 = vmatpush.bf16.msra.mxu0 0
    %641 = vmatpush.bf16.msra.mxu0 0
    %642 = vmatpush.bf16.msra.mxu0 0
    %643 = vmatpush.bf16.msra.mxu0 %v580
    %644 = vmatpush.bf16.msra.mxu0 %v576
    %645 = vmatpush.bf16.msra.mxu0 %v572
    %646 = vmatpush.bf16.msra.mxu0 %v568
    %647 = vmatmul.bf16.gmra.mxu0 %v598
    %v648 = vpop.f32.mrf.mxu0
    %v649 = vadd.f32 0.0, %v648
    %v650 = vpop.f32.mrf.mxu0
    %651 = vdwg.mxu0
    %v668 = vunpack.c.l.b16 %v402
    %v669 = vunpack.c.h.b16 %v402
    %v670 = vunpack.c.l.b16 %v403
    %v671 = vunpack.c.h.b16 %v403
    %v672 = vunpack.c.l.b16 %v404
    %v673 = vunpack.c.h.b16 %v404
    %v674 = vunpack.c.l.b16 %v405
    %v675 = vunpack.c.h.b16 %v405
    %v676 = vunpack.c.l.b16 %v406
    %v677 = vunpack.c.h.b16 %v406
    %v678 = vunpack.c.l.b16 %v407
    %v679 = vunpack.c.h.b16 %v407
    %v680 = vunpack.c.l.b16 %v408
    %v681 = vunpack.c.h.b16 %v408
    %v682 = vunpack.c.l.b16 %v409
    %v683 = vunpack.c.h.b16 %v409
    %v684 = vunpack.c.l.b16 %v410
    %v685 = vunpack.c.h.b16 %v410
    %v686 = vunpack.c.l.b16 %v411
    %v687 = vunpack.c.h.b16 %v411
    %v688 = vunpack.c.l.b16 %v412
    %v689 = vunpack.c.h.b16 %v412
    %v690 = vunpack.c.l.b16 %v413
    %v691 = vunpack.c.h.b16 %v413
    %v692 = vunpack.c.l.b16 %v414
    %v693 = vunpack.c.h.b16 %v414
    %v694 = vunpack.c.l.b16 %v415
    %v695 = vunpack.c.h.b16 %v415
    %v696 = vunpack.c.l.b16 %v416
    %v697 = vunpack.c.h.b16 %v416
    %v698 = vunpack.c.l.b16 %v417
    %v699 = vunpack.c.h.b16 %v417
    %v700 = vpack.c.b16 %v672, %v668
    %v701 = vpack.c.b16 %v673, %v669
    %v702 = vpack.c.b16 %v674, %v670
    %v703 = vpack.c.b16 %v675, %v671
    %v704 = vpack.c.b16 %v680, %v676
    %v705 = vpack.c.b16 %v681, %v677
    %v706 = vpack.c.b16 %v682, %v678
    %v707 = vpack.c.b16 %v683, %v679
    %v708 = vpack.c.b16 %v688, %v684
    %v709 = vpack.c.b16 %v689, %v685
    %v710 = vpack.c.b16 %v690, %v686
    %v711 = vpack.c.b16 %v691, %v687
    %v712 = vpack.c.b16 %v696, %v692
    %v713 = vpack.c.b16 %v697, %v693
    %v714 = vpack.c.b16 %v698, %v694
    %v715 = vpack.c.b16 %v699, %v695
    %v733 = vsel %vm332, %v401, 0
    %735 = vmatpush.bf16.msra.mxu0 0
    %736 = vmatpush.bf16.msra.mxu0 0
    %737 = vmatpush.bf16.msra.mxu0 0
    %738 = vmatpush.bf16.msra.mxu0 0
    %739 = vmatpush.bf16.msra.mxu0 %v712
    %740 = vmatpush.bf16.msra.mxu0 %v708
    %741 = vmatpush.bf16.msra.mxu0 %v704
    %742 = vmatpush.bf16.msra.mxu0 %v700
    %743 = vmatmul.bf16.gmra.mxu0 %v733
    %v744 = vpop.f32.mrf.mxu0
    %v745 = vadd.f32 %v610, %v744
    %v746 = vpop.f32.mrf.mxu0
    %747 = vdwg.mxu0
    %748 = vmatpush.bf16.msra.mxu0 0
    %749 = vmatpush.bf16.msra.mxu0 0
    %750 = vmatpush.bf16.msra.mxu0 0
    %751 = vmatpush.bf16.msra.mxu0 0
    %752 = vmatpush.bf16.msra.mxu0 %v713
    %753 = vmatpush.bf16.msra.mxu0 %v709
    %754 = vmatpush.bf16.msra.mxu0 %v705
    %755 = vmatpush.bf16.msra.mxu0 %v701
    %756 = vmatmul.bf16.gmra.mxu0 %v733
    %v757 = vpop.f32.mrf.mxu0
    %v758 = vadd.f32 %v623, %v757
    %v759 = vpop.f32.mrf.mxu0
    %760 = vdwg.mxu0
    %761 = vmatpush.bf16.msra.mxu0 0
    %762 = vmatpush.bf16.msra.mxu0 0
    %763 = vmatpush.bf16.msra.mxu0 0
    %764 = vmatpush.bf16.msra.mxu0 0
    %765 = vmatpush.bf16.msra.mxu0 %v714
    %766 = vmatpush.bf16.msra.mxu0 %v710
    %767 = vmatpush.bf16.msra.mxu0 %v706
    %768 = vmatpush.bf16.msra.mxu0 %v702
    %769 = vmatmul.bf16.gmra.mxu0 %v733
    %v770 = vpop.f32.mrf.mxu0
    %v771 = vadd.f32 %v636, %v770
    %v772 = vpop.f32.mrf.mxu0
    %773 = vdwg.mxu0
    %774 = vmatpush.bf16.msra.mxu0 0
    %775 = vmatpush.bf16.msra.mxu0 0
    %776 = vmatpush.bf16.msra.mxu0 0
    %777 = vmatpush.bf16.msra.mxu0 0
    %778 = vmatpush.bf16.msra.mxu0 %v715
    %779 = vmatpush.bf16.msra.mxu0 %v711
    %780 = vmatpush.bf16.msra.mxu0 %v707
    %781 = vmatpush.bf16.msra.mxu0 %v703
    %782 = vmatmul.bf16.gmra.mxu0 %v733
    %v783 = vpop.f32.mrf.mxu0
    %v784 = vadd.f32 %v649, %v783
    %v785 = vpop.f32.mrf.mxu0
    %786 = vdwg.mxu0
    %s787 = scalar_lea.vmem %s0, 10
    %v788 = vld [vmem:[%s787] sm:$0x1f]
    %790 = vst [vmem:[#allocation1] ss:$9 sm:$0xff] %v788
    %v791 = vld [vmem:[#allocation1] sm:$0xff]
    %v792 = vld [vmem:[#allocation1 + $0x9] sm:$0xff]
    %v793 = vld [vmem:[#allocation1 + $0x12] sm:$0xff]
    %v794 = vld [vmem:[#allocation1 + $0x1b] sm:$0xff]
    %v795 = vld [vmem:[#allocation1 + $0x24] sm:$0xff]
    %v800 = vsel %vm332, %v795, 0
    %802 = vmatpush.bf16.msra.mxu0 %v267
    %803 = vmatpush.bf16.msra.mxu0 %v266
    %804 = vmatpush.bf16.msra.mxu0 %v265
    %805 = vmatpush.bf16.msra.mxu0 %v264
    %806 = vmatpush.bf16.msra.mxu0 %v263
    %807 = vmatpush.bf16.msra.mxu0 %v262
    %808 = vmatpush.bf16.msra.mxu0 %v261
    %809 = vmatpush.bf16.msra.mxu0 %v260
    %810 = vmatmul.bf16.gmra.mxu0 %v791
    %v811 = vpop.f32.mrf.mxu0
    %v812 = vadd.f32 %v103, %v811
    %v813 = vpop.f32.mrf.mxu0
    %814 = vdwg.mxu0
    %815 = vmatpush.bf16.msra.mxu0 %v275
    %816 = vmatpush.bf16.msra.mxu0 %v274
    %817 = vmatpush.bf16.msra.mxu0 %v273
    %818 = vmatpush.bf16.msra.mxu0 %v272
    %819 = vmatpush.bf16.msra.mxu0 %v271
    %820 = vmatpush.bf16.msra.mxu0 %v270
    %821 = vmatpush.bf16.msra.mxu0 %v269
    %822 = vmatpush.bf16.msra.mxu0 %v268
    %823 = vmatmul.bf16.gmra.mxu0 %v792
    %v824 = vpop.f32.mrf.mxu0
    %v825 = vadd.f32 %v812, %v824
    %v826 = vpop.f32.mrf.mxu0
    %827 = vdwg.mxu0
    %828 = vmatpush.bf16.msra.mxu0 %v283
    %829 = vmatpush.bf16.msra.mxu0 %v282
    %830 = vmatpush.bf16.msra.mxu0 %v281
    %831 = vmatpush.bf16.msra.mxu0 %v280
    %832 = vmatpush.bf16.msra.mxu0 %v279
    %833 = vmatpush.bf16.msra.mxu0 %v278
    %834 = vmatpush.bf16.msra.mxu0 %v277
    %835 = vmatpush.bf16.msra.mxu0 %v276
    %836 = vmatmul.bf16.gmra.mxu0 %v793
    %v837 = vpop.f32.mrf.mxu0
    %v838 = vadd.f32 %v825, %v837
    %v839 = vpop.f32.mrf.mxu0
    %840 = vdwg.mxu0
    %841 = vmatpush.bf16.msra.mxu0 %v291
    %842 = vmatpush.bf16.msra.mxu0 %v290
    %843 = vmatpush.bf16.msra.mxu0 %v289
    %844 = vmatpush.bf16.msra.mxu0 %v288
    %845 = vmatpush.bf16.msra.mxu0 %v287
    %846 = vmatpush.bf16.msra.mxu0 %v286
    %847 = vmatpush.bf16.msra.mxu0 %v285
    %848 = vmatpush.bf16.msra.mxu0 %v284
    %849 = vmatmul.bf16.gmra.mxu0 %v794
    %v850 = vpop.f32.mrf.mxu0
    %v851 = vadd.f32 %v838, %v850
    %v852 = vpop.f32.mrf.mxu0
    %853 = vdwg.mxu0
    %854 = vmatpush.bf16.msra.mxu0 0
    %855 = vmatpush.bf16.msra.mxu0 0
    %856 = vmatpush.bf16.msra.mxu0 0
    %857 = vmatpush.bf16.msra.mxu0 0
    %858 = vmatpush.bf16.msra.mxu0 %v295
    %859 = vmatpush.bf16.msra.mxu0 %v294
    %860 = vmatpush.bf16.msra.mxu0 %v293
    %861 = vmatpush.bf16.msra.mxu0 %v292
    %862 = vmatmul.bf16.gmra.mxu0 %v800
    %v863 = vpop.f32.mrf.mxu0
    %v864 = vadd.f32 %v851, %v863
    %v865 = vpop.f32.mrf.mxu0
    %866 = vdwg.mxu0
    %v867 = vmax.f32 %v864, 0.0
    %v868 = vpack.c.bf16 %v867, %v867
    %s869 = scalar_lea.vmem %s3, 256
    %v870 = vld [vmem:[%s869] sm:$0xff]
    %v871 = vld [vmem:[%s869 + $0x8] sm:$0xff]
    %v872 = vld [vmem:[%s869 + $0x10] sm:$0xff]
    %v873 = vld [vmem:[%s869 + $0x18] sm:$0xff]
    %v874 = vld [vmem:[%s869 + $0x20] sm:$0xff]
    %v875 = vld [vmem:[%s869 + $0x28] sm:$0xff]
    %v876 = vld [vmem:[%s869 + $0x30] sm:$0xff]
    %v877 = vld [vmem:[%s869 + $0x38] sm:$0xff]
    %v878 = vld [vmem:[%s869 + $0x40] sm:$0xff]
    %v879 = vld [vmem:[%s869 + $0x48] sm:$0xff]
    %v880 = vld [vmem:[%s869 + $0x50] sm:$0xff]
    %v881 = vld [vmem:[%s869 + $0x58] sm:$0xff]
    %v882 = vld [vmem:[%s869 + $0x60] sm:$0xff]
    %v883 = vld [vmem:[%s869 + $0x68] sm:$0xff]
    %v884 = vld [vmem:[%s869 + $0x70] sm:$0xff]
    %v885 = vld [vmem:[%s869 + $0x78] sm:$0xff]
    %v902 = vunpack.c.l.b16 %v870
    %v903 = vunpack.c.h.b16 %v870
    %v904 = vunpack.c.l.b16 %v871
    %v905 = vunpack.c.h.b16 %v871
    %v906 = vunpack.c.l.b16 %v872
    %v907 = vunpack.c.h.b16 %v872
    %v908 = vunpack.c.l.b16 %v873
    %v909 = vunpack.c.h.b16 %v873
    %v910 = vunpack.c.l.b16 %v874
    %v911 = vunpack.c.h.b16 %v874
    %v912 = vunpack.c.l.b16 %v875
    %v913 = vunpack.c.h.b16 %v875
    %v914 = vunpack.c.l.b16 %v876
    %v915 = vunpack.c.h.b16 %v876
    %v916 = vunpack.c.l.b16 %v877
    %v917 = vunpack.c.h.b16 %v877
    %v918 = vunpack.c.l.b16 %v878
    %v919 = vunpack.c.h.b16 %v878
    %v920 = vunpack.c.l.b16 %v879
    %v921 = vunpack.c.h.b16 %v879
    %v922 = vunpack.c.l.b16 %v880
    %v923 = vunpack.c.h.b16 %v880
    %v924 = vunpack.c.l.b16 %v881
    %v925 = vunpack.c.h.b16 %v881
    %v926 = vunpack.c.l.b16 %v882
    %v927 = vunpack.c.h.b16 %v882
    %v928 = vunpack.c.l.b16 %v883
    %v929 = vunpack.c.h.b16 %v883
    %v930 = vunpack.c.l.b16 %v884
    %v931 = vunpack.c.h.b16 %v884
    %v932 = vunpack.c.l.b16 %v885
    %v933 = vunpack.c.h.b16 %v885
    %v934 = vpack.c.b16 %v906, %v902
    %v935 = vpack.c.b16 %v907, %v903
    %v936 = vpack.c.b16 %v908, %v904
    %v937 = vpack.c.b16 %v909, %v905
    %v938 = vpack.c.b16 %v914, %v910
    %v939 = vpack.c.b16 %v915, %v911
    %v940 = vpack.c.b16 %v916, %v912
    %v941 = vpack.c.b16 %v917, %v913
    %v942 = vpack.c.b16 %v922, %v918
    %v943 = vpack.c.b16 %v923, %v919
    %v944 = vpack.c.b16 %v924, %v920
    %v945 = vpack.c.b16 %v925, %v921
    %v946 = vpack.c.b16 %v930, %v926
    %v947 = vpack.c.b16 %v931, %v927
    %v948 = vpack.c.b16 %v932, %v928
    %v949 = vpack.c.b16 %v933, %v929
    %v967 = vsel %vm332, %v868, 0
    %969 = vmatpush.bf16.msra.mxu0 0
    %970 = vmatpush.bf16.msra.mxu0 0
    %971 = vmatpush.bf16.msra.mxu0 0
    %972 = vmatpush.bf16.msra.mxu0 0
    %973 = vmatpush.bf16.msra.mxu0 %v946
    %974 = vmatpush.bf16.msra.mxu0 %v942
    %975 = vmatpush.bf16.msra.mxu0 %v938
    %976 = vmatpush.bf16.msra.mxu0 %v934
    %977 = vmatmul.bf16.gmra.mxu0 %v967
    %v978 = vpop.f32.mrf.mxu0
    %v979 = vadd.f32 0.0, %v978
    %v980 = vpop.f32.mrf.mxu0
    %981 = vdwg.mxu0
    %982 = vmatpush.bf16.msra.mxu0 0
    %983 = vmatpush.bf16.msra.mxu0 0
    %984 = vmatpush.bf16.msra.mxu0 0
    %985 = vmatpush.bf16.msra.mxu0 0
    %986 = vmatpush.bf16.msra.mxu0 %v947
    %987 = vmatpush.bf16.msra.mxu0 %v943
    %988 = vmatpush.bf16.msra.mxu0 %v939
    %989 = vmatpush.bf16.msra.mxu0 %v935
    %990 = vmatmul.bf16.gmra.mxu0 %v967
    %v991 = vpop.f32.mrf.mxu0
    %v992 = vadd.f32 0.0, %v991
    %v993 = vpop.f32.mrf.mxu0
    %994 = vdwg.mxu0
    %995 = vmatpush.bf16.msra.mxu0 0
    %996 = vmatpush.bf16.msra.mxu0 0
    %997 = vmatpush.bf16.msra.mxu0 0
    %998 = vmatpush.bf16.msra.mxu0 0
    %999 = vmatpush.bf16.msra.mxu0 %v948
    %1000 = vmatpush.bf16.msra.mxu0 %v944
    %1001 = vmatpush.bf16.msra.mxu0 %v940
    %1002 = vmatpush.bf16.msra.mxu0 %v936
    %1003 = vmatmul.bf16.gmra.mxu0 %v967
    %v1004 = vpop.f32.mrf.mxu0
    %v1005 = vadd.f32 0.0, %v1004
    %v1006 = vpop.f32.mrf.mxu0
    %1007 = vdwg.mxu0
    %1008 = vmatpush.bf16.msra.mxu0 0
    %1009 = vmatpush.bf16.msra.mxu0 0
    %1010 = vmatpush.bf16.msra.mxu0 0
    %1011 = vmatpush.bf16.msra.mxu0 0
    %1012 = vmatpush.bf16.msra.mxu0 %v949
    %1013 = vmatpush.bf16.msra.mxu0 %v945
    %1014 = vmatpush.bf16.msra.mxu0 %v941
    %1015 = vmatpush.bf16.msra.mxu0 %v937
    %1016 = vmatmul.bf16.gmra.mxu0 %v967
    %v1017 = vpop.f32.mrf.mxu0
    %v1018 = vadd.f32 0.0, %v1017
    %v1019 = vpop.f32.mrf.mxu0
    %1020 = vdwg.mxu0
    %v1021 = vadd.f32 %v745, %v979
    %v1022 = vadd.f32 %v758, %v992
    %v1023 = vadd.f32 %v771, %v1005
    %v1024 = vadd.f32 %v784, %v1018
    %s1025 = scalar_lea.vmem %s0, 15
    %v1026 = vld [vmem:[%s1025] sm:$0x1f]
    %1028 = vst [vmem:[#allocation1] ss:$9 sm:$0xff] %v1026
    %v1029 = vld [vmem:[#allocation1] sm:$0xff]
    %v1030 = vld [vmem:[#allocation1 + $0x9] sm:$0xff]
    %v1031 = vld [vmem:[#allocation1 + $0x12] sm:$0xff]
    %v1032 = vld [vmem:[#allocation1 + $0x1b] sm:$0xff]
    %v1033 = vld [vmem:[#allocation1 + $0x24] sm:$0xff]
    %v1038 = vsel %vm332, %v1033, 0
    %1040 = vmatpush.bf16.msra.mxu0 %v267
    %1041 = vmatpush.bf16.msra.mxu0 %v266
    %1042 = vmatpush.bf16.msra.mxu0 %v265
    %1043 = vmatpush.bf16.msra.mxu0 %v264
    %1044 = vmatpush.bf16.msra.mxu0 %v263
    %1045 = vmatpush.bf16.msra.mxu0 %v262
    %1046 = vmatpush.bf16.msra.mxu0 %v261
    %1047 = vmatpush.bf16.msra.mxu0 %v260
    %1048 = vmatmul.bf16.gmra.mxu0 %v1029
    %v1049 = vpop.f32.mrf.mxu0
    %v1050 = vadd.f32 %v103, %v1049
    %v1051 = vpop.f32.mrf.mxu0
    %1052 = vdwg.mxu0
    %1053 = vmatpush.bf16.msra.mxu0 %v275
    %1054 = vmatpush.bf16.msra.mxu0 %v274
    %1055 = vmatpush.bf16.msra.mxu0 %v273
    %1056 = vmatpush.bf16.msra.mxu0 %v272
    %1057 = vmatpush.bf16.msra.mxu0 %v271
    %1058 = vmatpush.bf16.msra.mxu0 %v270
    %1059 = vmatpush.bf16.msra.mxu0 %v269
    %1060 = vmatpush.bf16.msra.mxu0 %v268
    %1061 = vmatmul.bf16.gmra.mxu0 %v1030
    %v1062 = vpop.f32.mrf.mxu0
    %v1063 = vadd.f32 %v1050, %v1062
    %v1064 = vpop.f32.mrf.mxu0
    %1065 = vdwg.mxu0
    %1066 = vmatpush.bf16.msra.mxu0 %v283
    %1067 = vmatpush.bf16.msra.mxu0 %v282
    %1068 = vmatpush.bf16.msra.mxu0 %v281
    %1069 = vmatpush.bf16.msra.mxu0 %v280
    %1070 = vmatpush.bf16.msra.mxu0 %v279
    %1071 = vmatpush.bf16.msra.mxu0 %v278
    %1072 = vmatpush.bf16.msra.mxu0 %v277
    %1073 = vmatpush.bf16.msra.mxu0 %v276
    %1074 = vmatmul.bf16.gmra.mxu0 %v1031
    %v1075 = vpop.f32.mrf.mxu0
    %v1076 = vadd.f32 %v1063, %v1075
    %v1077 = vpop.f32.mrf.mxu0
    %1078 = vdwg.mxu0
    %1079 = vmatpush.bf16.msra.mxu0 %v291
    %1080 = vmatpush.bf16.msra.mxu0 %v290
    %1081 = vmatpush.bf16.msra.mxu0 %v289
    %1082 = vmatpush.bf16.msra.mxu0 %v288
    %1083 = vmatpush.bf16.msra.mxu0 %v287
    %1084 = vmatpush.bf16.msra.mxu0 %v286
    %1085 = vmatpush.bf16.msra.mxu0 %v285
    %1086 = vmatpush.bf16.msra.mxu0 %v284
    %1087 = vmatmul.bf16.gmra.mxu0 %v1032
    %v1088 = vpop.f32.mrf.mxu0
    %v1089 = vadd.f32 %v1076, %v1088
    %v1090 = vpop.f32.mrf.mxu0
    %1091 = vdwg.mxu0
    %1092 = vmatpush.bf16.msra.mxu0 0
    %1093 = vmatpush.bf16.msra.mxu0 0
    %1094 = vmatpush.bf16.msra.mxu0 0
    %1095 = vmatpush.bf16.msra.mxu0 0
    %1096 = vmatpush.bf16.msra.mxu0 %v295
    %1097 = vmatpush.bf16.msra.mxu0 %v294
    %1098 = vmatpush.bf16.msra.mxu0 %v293
    %1099 = vmatpush.bf16.msra.mxu0 %v292
    %1100 = vmatmul.bf16.gmra.mxu0 %v1038
    %v1101 = vpop.f32.mrf.mxu0
    %v1102 = vadd.f32 %v1089, %v1101
    %v1103 = vpop.f32.mrf.mxu0
    %1104 = vdwg.mxu0
    %v1105 = vmax.f32 %v1102, 0.0
    %v1106 = vpack.c.bf16 %v1105, %v1105
    %s1107 = scalar_lea.vmem %s3, 384
    %v1108 = vld [vmem:[%s1107] sm:$0xff]
    %v1109 = vld [vmem:[%s1107 + $0x8] sm:$0xff]
    %v1110 = vld [vmem:[%s1107 + $0x10] sm:$0xff]
    %v1111 = vld [vmem:[%s1107 + $0x18] sm:$0xff]
    %v1112 = vld [vmem:[%s1107 + $0x20] sm:$0xff]
    %v1113 = vld [vmem:[%s1107 + $0x28] sm:$0xff]
    %v1114 = vld [vmem:[%s1107 + $0x30] sm:$0xff]
    %v1115 = vld [vmem:[%s1107 + $0x38] sm:$0xff]
    %v1116 = vld [vmem:[%s1107 + $0x40] sm:$0xff]
    %v1117 = vld [vmem:[%s1107 + $0x48] sm:$0xff]
    %v1118 = vld [vmem:[%s1107 + $0x50] sm:$0xff]
    %v1119 = vld [vmem:[%s1107 + $0x58] sm:$0xff]
    %v1120 = vld [vmem:[%s1107 + $0x60] sm:$0xff]
    %v1121 = vld [vmem:[%s1107 + $0x68] sm:$0xff]
    %v1122 = vld [vmem:[%s1107 + $0x70] sm:$0xff]
    %v1123 = vld [vmem:[%s1107 + $0x78] sm:$0xff]
    %v1140 = vunpack.c.l.b16 %v1108
    %v1141 = vunpack.c.h.b16 %v1108
    %v1142 = vunpack.c.l.b16 %v1109
    %v1143 = vunpack.c.h.b16 %v1109
    %v1144 = vunpack.c.l.b16 %v1110
    %v1145 = vunpack.c.h.b16 %v1110
    %v1146 = vunpack.c.l.b16 %v1111
    %v1147 = vunpack.c.h.b16 %v1111
    %v1148 = vunpack.c.l.b16 %v1112
    %v1149 = vunpack.c.h.b16 %v1112
    %v1150 = vunpack.c.l.b16 %v1113
    %v1151 = vunpack.c.h.b16 %v1113
    %v1152 = vunpack.c.l.b16 %v1114
    %v1153 = vunpack.c.h.b16 %v1114
    %v1154 = vunpack.c.l.b16 %v1115
    %v1155 = vunpack.c.h.b16 %v1115
    %v1156 = vunpack.c.l.b16 %v1116
    %v1157 = vunpack.c.h.b16 %v1116
    %v1158 = vunpack.c.l.b16 %v1117
    %v1159 = vunpack.c.h.b16 %v1117
    %v1160 = vunpack.c.l.b16 %v1118
    %v1161 = vunpack.c.h.b16 %v1118
    %v1162 = vunpack.c.l.b16 %v1119
    %v1163 = vunpack.c.h.b16 %v1119
    %v1164 = vunpack.c.l.b16 %v1120
    %v1165 = vunpack.c.h.b16 %v1120
    %v1166 = vunpack.c.l.b16 %v1121
    %v1167 = vunpack.c.h.b16 %v1121
    %v1168 = vunpack.c.l.b16 %v1122
    %v1169 = vunpack.c.h.b16 %v1122
    %v1170 = vunpack.c.l.b16 %v1123
    %v1171 = vunpack.c.h.b16 %v1123
    %v1172 = vpack.c.b16 %v1144, %v1140
    %v1173 = vpack.c.b16 %v1145, %v1141
    %v1174 = vpack.c.b16 %v1146, %v1142
    %v1175 = vpack.c.b16 %v1147, %v1143
    %v1176 = vpack.c.b16 %v1152, %v1148
    %v1177 = vpack.c.b16 %v1153, %v1149
    %v1178 = vpack.c.b16 %v1154, %v1150
    %v1179 = vpack.c.b16 %v1155, %v1151
    %v1180 = vpack.c.b16 %v1160, %v1156
    %v1181 = vpack.c.b16 %v1161, %v1157
    %v1182 = vpack.c.b16 %v1162, %v1158
    %v1183 = vpack.c.b16 %v1163, %v1159
    %v1184 = vpack.c.b16 %v1168, %v1164
    %v1185 = vpack.c.b16 %v1169, %v1165
    %v1186 = vpack.c.b16 %v1170, %v1166
    %v1187 = vpack.c.b16 %v1171, %v1167
    %v1205 = vsel %vm332, %v1106, 0
    %1207 = vmatpush.bf16.msra.mxu0 0
    %1208 = vmatpush.bf16.msra.mxu0 0
    %1209 = vmatpush.bf16.msra.mxu0 0
    %1210 = vmatpush.bf16.msra.mxu0 0
    %1211 = vmatpush.bf16.msra.mxu0 %v1184
    %1212 = vmatpush.bf16.msra.mxu0 %v1180
    %1213 = vmatpush.bf16.msra.mxu0 %v1176
    %1214 = vmatpush.bf16.msra.mxu0 %v1172
    %1215 = vmatmul.bf16.gmra.mxu0 %v1205
    %v1216 = vpop.f32.mrf.mxu0
    %v1217 = vadd.f32 0.0, %v1216
    %v1218 = vpop.f32.mrf.mxu0
    %1219 = vdwg.mxu0
    %1220 = vmatpush.bf16.msra.mxu0 0
    %1221 = vmatpush.bf16.msra.mxu0 0
    %1222 = vmatpush.bf16.msra.mxu0 0
    %1223 = vmatpush.bf16.msra.mxu0 0
    %1224 = vmatpush.bf16.msra.mxu0 %v1185
    %1225 = vmatpush.bf16.msra.mxu0 %v1181
    %1226 = vmatpush.bf16.msra.mxu0 %v1177
    %1227 = vmatpush.bf16.msra.mxu0 %v1173
    %1228 = vmatmul.bf16.gmra.mxu0 %v1205
    %v1229 = vpop.f32.mrf.mxu0
    %v1230 = vadd.f32 0.0, %v1229
    %v1231 = vpop.f32.mrf.mxu0
    %1232 = vdwg.mxu0
    %1233 = vmatpush.bf16.msra.mxu0 0
    %1234 = vmatpush.bf16.msra.mxu0 0
    %1235 = vmatpush.bf16.msra.mxu0 0
    %1236 = vmatpush.bf16.msra.mxu0 0
    %1237 = vmatpush.bf16.msra.mxu0 %v1186
    %1238 = vmatpush.bf16.msra.mxu0 %v1182
    %1239 = vmatpush.bf16.msra.mxu0 %v1178
    %1240 = vmatpush.bf16.msra.mxu0 %v1174
    %1241 = vmatmul.bf16.gmra.mxu0 %v1205
    %v1242 = vpop.f32.mrf.mxu0
    %v1243 = vadd.f32 0.0, %v1242
    %v1244 = vpop.f32.mrf.mxu0
    %1245 = vdwg.mxu0
    %1246 = vmatpush.bf16.msra.mxu0 0
    %1247 = vmatpush.bf16.msra.mxu0 0
    %1248 = vmatpush.bf16.msra.mxu0 0
    %1249 = vmatpush.bf16.msra.mxu0 0
    %1250 = vmatpush.bf16.msra.mxu0 %v1187
    %1251 = vmatpush.bf16.msra.mxu0 %v1183
    %1252 = vmatpush.bf16.msra.mxu0 %v1179
    %1253 = vmatpush.bf16.msra.mxu0 %v1175
    %1254 = vmatmul.bf16.gmra.mxu0 %v1205
    %v1255 = vpop.f32.mrf.mxu0
    %v1256 = vadd.f32 0.0, %v1255
    %v1257 = vpop.f32.mrf.mxu0
    %1258 = vdwg.mxu0
    %v1259 = vadd.f32 %v1021, %v1217
    %v1260 = vadd.f32 %v1022, %v1230
    %v1261 = vadd.f32 %v1023, %v1243
    %v1262 = vadd.f32 %v1024, %v1256
    %v1263 = vld [vmem:[%s4] sm:$0xf]
    %v1265 = vperm.slane %v1263, 0
    %v1266 = vperm.slane %v1263, 1
    %v1267 = vperm.slane %v1263, 2
    %v1268 = vperm.slane %v1263, 3
    %v1273 = vadd.f32 %v1259, %v1265
    %v1274 = vadd.f32 %v1260, %v1266
    %v1275 = vadd.f32 %v1261, %v1267
    %v1276 = vadd.f32 %v1262, %v1268
    %v1277 = vmax.f32 %v1273, 0.0
    %v1278 = vmax.f32 %v1274, 0.0
    %v1279 = vmax.f32 %v1275, 0.0
    %v1280 = vmax.f32 %v1276, 0.0
    %v1281 = vpack.c.bf16 %v1277, %v1277
    %v1282 = vpack.c.bf16 %v1278, %v1278
    %v1283 = vpack.c.bf16 %v1279, %v1279
    %v1284 = vpack.c.bf16 %v1280, %v1280
    %v1285 = vld [vmem:[%s5] sm:$0xf]
    %v1286 = vld [vmem:[%s5 + $0x4] sm:$0xf]
    %v1287 = vld [vmem:[%s5 + $0x8] sm:$0xf]
    %v1288 = vld [vmem:[%s5 + $0xc] sm:$0xf]
    %v1289 = vld [vmem:[%s5 + $0x10] sm:$0xf]
    %v1290 = vld [vmem:[%s5 + $0x14] sm:$0xf]
    %v1291 = vld [vmem:[%s5 + $0x18] sm:$0xf]
    %v1292 = vld [vmem:[%s5 + $0x1c] sm:$0xf]
    %v1293 = vld [vmem:[%s5 + $0x20] sm:$0xf]
    %v1294 = vld [vmem:[%s5 + $0x24] sm:$0xf]
    %v1295 = vld [vmem:[%s5 + $0x28] sm:$0xf]
    %v1296 = vld [vmem:[%s5 + $0x2c] sm:$0xf]
    %v1297 = vld [vmem:[%s5 + $0x30] sm:$0xf]
    %v1298 = vld [vmem:[%s5 + $0x34] sm:$0xf]
    %v1299 = vld [vmem:[%s5 + $0x38] sm:$0xf]
    %v1300 = vld [vmem:[%s5 + $0x3c] sm:$0xf]
    %v1301 = vld [vmem:[%s5 + $0x40] sm:$0xf]
    %v1302 = vld [vmem:[%s5 + $0x44] sm:$0xf]
    %v1303 = vld [vmem:[%s5 + $0x48] sm:$0xf]
    %v1304 = vld [vmem:[%s5 + $0x4c] sm:$0xf]
    %v1305 = vld [vmem:[%s5 + $0x50] sm:$0xf]
    %v1306 = vld [vmem:[%s5 + $0x54] sm:$0xf]
    %v1307 = vld [vmem:[%s5 + $0x58] sm:$0xf]
    %v1308 = vld [vmem:[%s5 + $0x5c] sm:$0xf]
    %v1309 = vld [vmem:[%s5 + $0x60] sm:$0xf]
    %v1310 = vld [vmem:[%s5 + $0x64] sm:$0xf]
    %v1311 = vld [vmem:[%s5 + $0x68] sm:$0xf]
    %v1312 = vld [vmem:[%s5 + $0x6c] sm:$0xf]
    %v1313 = vld [vmem:[%s5 + $0x70] sm:$0xf]
    %v1314 = vld [vmem:[%s5 + $0x74] sm:$0xf]
    %v1315 = vld [vmem:[%s5 + $0x78] sm:$0xf]
    %v1316 = vld [vmem:[%s5 + $0x7c] sm:$0xf]
    %v1317 = vld [vmem:[%s5 + $0x80] sm:$0xf]
    %v1318 = vld [vmem:[%s5 + $0x84] sm:$0xf]
    %v1319 = vld [vmem:[%s5 + $0x88] sm:$0xf]
    %v1320 = vld [vmem:[%s5 + $0x8c] sm:$0xf]
    %v1321 = vld [vmem:[%s5 + $0x90] sm:$0xf]
    %v1322 = vld [vmem:[%s5 + $0x94] sm:$0xf]
    %v1323 = vld [vmem:[%s5 + $0x98] sm:$0xf]
    %v1324 = vld [vmem:[%s5 + $0x9c] sm:$0xf]
    %v1325 = vld [vmem:[%s5 + $0xa0] sm:$0xf]
    %v1326 = vld [vmem:[%s5 + $0xa4] sm:$0xf]
    %v1327 = vld [vmem:[%s5 + $0xa8] sm:$0xf]
    %v1328 = vld [vmem:[%s5 + $0xac] sm:$0xf]
    %v1329 = vld [vmem:[%s5 + $0xb0] sm:$0xf]
    %v1330 = vld [vmem:[%s5 + $0xb4] sm:$0xf]
    %v1331 = vld [vmem:[%s5 + $0xb8] sm:$0xf]
    %v1332 = vld [vmem:[%s5 + $0xbc] sm:$0xf]
    %v1333 = vld [vmem:[%s5 + $0xc0] sm:$0xf]
    %v1334 = vld [vmem:[%s5 + $0xc4] sm:$0xf]
    %v1335 = vld [vmem:[%s5 + $0xc8] sm:$0xf]
    %v1336 = vld [vmem:[%s5 + $0xcc] sm:$0xf]
    %v1337 = vld [vmem:[%s5 + $0xd0] sm:$0xf]
    %v1338 = vld [vmem:[%s5 + $0xd4] sm:$0xf]
    %v1339 = vld [vmem:[%s5 + $0xd8] sm:$0xf]
    %v1340 = vld [vmem:[%s5 + $0xdc] sm:$0xf]
    %v1341 = vld [vmem:[%s5 + $0xe0] sm:$0xf]
    %v1342 = vld [vmem:[%s5 + $0xe4] sm:$0xf]
    %v1343 = vld [vmem:[%s5 + $0xe8] sm:$0xf]
    %v1344 = vld [vmem:[%s5 + $0xec] sm:$0xf]
    %v1345 = vld [vmem:[%s5 + $0xf0] sm:$0xf]
    %v1346 = vld [vmem:[%s5 + $0xf4] sm:$0xf]
    %v1347 = vld [vmem:[%s5 + $0xf8] sm:$0xf]
    %v1348 = vld [vmem:[%s5 + $0xfc] sm:$0xf]
    %v1349 = vld [vmem:[%s6] sm:$0x1]
    %v1351 = vperm.slane %v1349, 0
    %v1417 = vunpack.c.l.b16 %v1285
    %v1418 = vunpack.c.l.b16 %v1286
    %v1419 = vunpack.c.l.b16 %v1287
    %v1420 = vunpack.c.l.b16 %v1288
    %v1421 = vunpack.c.l.b16 %v1289
    %v1422 = vunpack.c.l.b16 %v1290
    %v1423 = vunpack.c.l.b16 %v1291
    %v1424 = vunpack.c.l.b16 %v1292
    %v1425 = vunpack.c.l.b16 %v1293
    %v1426 = vunpack.c.l.b16 %v1294
    %v1427 = vunpack.c.l.b16 %v1295
    %v1428 = vunpack.c.l.b16 %v1296
    %v1429 = vunpack.c.l.b16 %v1297
    %v1430 = vunpack.c.l.b16 %v1298
    %v1431 = vunpack.c.l.b16 %v1299
    %v1432 = vunpack.c.l.b16 %v1300
    %v1433 = vunpack.c.l.b16 %v1301
    %v1434 = vunpack.c.l.b16 %v1302
    %v1435 = vunpack.c.l.b16 %v1303
    %v1436 = vunpack.c.l.b16 %v1304
    %v1437 = vunpack.c.l.b16 %v1305
    %v1438 = vunpack.c.l.b16 %v1306
    %v1439 = vunpack.c.l.b16 %v1307
    %v1440 = vunpack.c.l.b16 %v1308
    %v1441 = vunpack.c.l.b16 %v1309
    %v1442 = vunpack.c.l.b16 %v1310
    %v1443 = vunpack.c.l.b16 %v1311
    %v1444 = vunpack.c.l.b16 %v1312
    %v1445 = vunpack.c.l.b16 %v1313
    %v1446 = vunpack.c.l.b16 %v1314
    %v1447 = vunpack.c.l.b16 %v1315
    %v1448 = vunpack.c.l.b16 %v1316
    %v1449 = vunpack.c.l.b16 %v1317
    %v1450 = vunpack.c.l.b16 %v1318
    %v1451 = vunpack.c.l.b16 %v1319
    %v1452 = vunpack.c.l.b16 %v1320
    %v1453 = vunpack.c.l.b16 %v1321
    %v1454 = vunpack.c.l.b16 %v1322
    %v1455 = vunpack.c.l.b16 %v1323
    %v1456 = vunpack.c.l.b16 %v1324
    %v1457 = vunpack.c.l.b16 %v1325
    %v1458 = vunpack.c.l.b16 %v1326
    %v1459 = vunpack.c.l.b16 %v1327
    %v1460 = vunpack.c.l.b16 %v1328
    %v1461 = vunpack.c.l.b16 %v1329
    %v1462 = vunpack.c.l.b16 %v1330
    %v1463 = vunpack.c.l.b16 %v1331
    %v1464 = vunpack.c.l.b16 %v1332
    %v1465 = vunpack.c.l.b16 %v1333
    %v1466 = vunpack.c.l.b16 %v1334
    %v1467 = vunpack.c.l.b16 %v1335
    %v1468 = vunpack.c.l.b16 %v1336
    %v1469 = vunpack.c.l.b16 %v1337
    %v1470 = vunpack.c.l.b16 %v1338
    %v1471 = vunpack.c.l.b16 %v1339
    %v1472 = vunpack.c.l.b16 %v1340
    %v1473 = vunpack.c.l.b16 %v1341
    %v1474 = vunpack.c.l.b16 %v1342
    %v1475 = vunpack.c.l.b16 %v1343
    %v1476 = vunpack.c.l.b16 %v1344
    %v1477 = vunpack.c.l.b16 %v1345
    %v1478 = vunpack.c.l.b16 %v1346
    %v1479 = vunpack.c.l.b16 %v1347
    %v1480 = vunpack.c.l.b16 %v1348
    %v1481 = vpack.c.b16 %v1418, %v1417
    %v1482 = vpack.c.b16 %v1420, %v1419
    %v1483 = vpack.c.b16 %v1422, %v1421
    %v1484 = vpack.c.b16 %v1424, %v1423
    %v1485 = vpack.c.b16 %v1426, %v1425
    %v1486 = vpack.c.b16 %v1428, %v1427
    %v1487 = vpack.c.b16 %v1430, %v1429
    %v1488 = vpack.c.b16 %v1432, %v1431
    %v1489 = vpack.c.b16 %v1434, %v1433
    %v1490 = vpack.c.b16 %v1436, %v1435
    %v1491 = vpack.c.b16 %v1438, %v1437
    %v1492 = vpack.c.b16 %v1440, %v1439
    %v1493 = vpack.c.b16 %v1442, %v1441
    %v1494 = vpack.c.b16 %v1444, %v1443
    %v1495 = vpack.c.b16 %v1446, %v1445
    %v1496 = vpack.c.b16 %v1448, %v1447
    %v1497 = vpack.c.b16 %v1450, %v1449
    %v1498 = vpack.c.b16 %v1452, %v1451
    %v1499 = vpack.c.b16 %v1454, %v1453
    %v1500 = vpack.c.b16 %v1456, %v1455
    %v1501 = vpack.c.b16 %v1458, %v1457
    %v1502 = vpack.c.b16 %v1460, %v1459
    %v1503 = vpack.c.b16 %v1462, %v1461
    %v1504 = vpack.c.b16 %v1464, %v1463
    %v1505 = vpack.c.b16 %v1466, %v1465
    %v1506 = vpack.c.b16 %v1468, %v1467
    %v1507 = vpack.c.b16 %v1470, %v1469
    %v1508 = vpack.c.b16 %v1472, %v1471
    %v1509 = vpack.c.b16 %v1474, %v1473
    %v1510 = vpack.c.b16 %v1476, %v1475
    %v1511 = vpack.c.b16 %v1478, %v1477
    %v1512 = vpack.c.b16 %v1480, %v1479
    %1545 = vmatpush.bf16.msra.mxu0 %v1488
    %1546 = vmatpush.bf16.msra.mxu0 %v1487
    %1547 = vmatpush.bf16.msra.mxu0 %v1486
    %1548 = vmatpush.bf16.msra.mxu0 %v1485
    %1549 = vmatpush.bf16.msra.mxu0 %v1484
    %1550 = vmatpush.bf16.msra.mxu0 %v1483
    %1551 = vmatpush.bf16.msra.mxu0 %v1482
    %1552 = vmatpush.bf16.msra.mxu0 %v1481
    %1553 = vmatmul.bf16.gmra.mxu0 %v1281
    %v1554 = vpop.f32.mrf.mxu0
    %v1555 = vadd.f32 %v1351, %v1554
    %v1556 = vpop.f32.mrf.mxu0
    %1557 = vdwg.mxu0
    %1558 = vmatpush.bf16.msra.mxu0 %v1496
    %1559 = vmatpush.bf16.msra.mxu0 %v1495
    %1560 = vmatpush.bf16.msra.mxu0 %v1494
    %1561 = vmatpush.bf16.msra.mxu0 %v1493
    %1562 = vmatpush.bf16.msra.mxu0 %v1492
    %1563 = vmatpush.bf16.msra.mxu0 %v1491
    %1564 = vmatpush.bf16.msra.mxu0 %v1490
    %1565 = vmatpush.bf16.msra.mxu0 %v1489
    %1566 = vmatmul.bf16.gmra.mxu0 %v1282
    %v1567 = vpop.f32.mrf.mxu0
    %v1568 = vadd.f32 %v1555, %v1567
    %v1569 = vpop.f32.mrf.mxu0
    %1570 = vdwg.mxu0
    %1571 = vmatpush.bf16.msra.mxu0 %v1504
    %1572 = vmatpush.bf16.msra.mxu0 %v1503
    %1573 = vmatpush.bf16.msra.mxu0 %v1502
    %1574 = vmatpush.bf16.msra.mxu0 %v1501
    %1575 = vmatpush.bf16.msra.mxu0 %v1500
    %1576 = vmatpush.bf16.msra.mxu0 %v1499
    %1577 = vmatpush.bf16.msra.mxu0 %v1498
    %1578 = vmatpush.bf16.msra.mxu0 %v1497
    %1579 = vmatmul.bf16.gmra.mxu0 %v1283
    %v1580 = vpop.f32.mrf.mxu0
    %v1581 = vadd.f32 %v1568, %v1580
    %v1582 = vpop.f32.mrf.mxu0
    %1583 = vdwg.mxu0
    %1584 = vmatpush.bf16.msra.mxu0 %v1512
    %1585 = vmatpush.bf16.msra.mxu0 %v1511
    %1586 = vmatpush.bf16.msra.mxu0 %v1510
    %1587 = vmatpush.bf16.msra.mxu0 %v1509
    %1588 = vmatpush.bf16.msra.mxu0 %v1508
    %1589 = vmatpush.bf16.msra.mxu0 %v1507
    %1590 = vmatpush.bf16.msra.mxu0 %v1506
    %1591 = vmatpush.bf16.msra.mxu0 %v1505
    %1592 = vmatmul.bf16.gmra.mxu0 %v1284
    %v1593 = vpop.f32.mrf.mxu0
    %v1594 = vadd.f32 %v1581, %v1593
    %v1595 = vpop.f32.mrf.mxu0
    %1596 = vdwg.mxu0
    %1597 = vst [vmem:[#allocation2] sm:$0x3] %v1594
    // Predicated region
    $region30: #{dqn_forward.5} parent=1 // pred_check
      _
    $region31: #{dqn_forward.5} parent=1 // pred_check_branch
      %1599 = sbr.rel (0) target = $region33
    $region32: #{dqn_forward.5} parent=1 // pred_region
      %1601 = vsyncadd [#allocation3], 0
      %s1603 = sshll.u32 [#allocation2], 4
      %s1604 = int_to_ptr.vmem [resolvable:$true] %s1603
      %s1605 = sshll.u32 %s7, 4
      %s1606 = int_to_ptr.hbm [resolvable:$true] %s1605
      %1608 = dma.vmem_to_hbm [thread:$0]  %s1604, 32, %s1606, [#allocation3]
    $region33: #{dqn_forward.5} parent=1 // pred_fallthru
      _
    // Predicated region
    $region34: #{dqn_forward.5} parent=1 // pred_check
      _
    $region35: #{dqn_forward.5} parent=1 // pred_check_branch
      %1610 = sbr.rel (0) target = $region37
    $region36: #{dqn_forward.5} parent=1 // pred_region
      %1612 = dma.done [#allocation3], 32
    $region37: #{dqn_forward.5} parent=1 // pred_fallthru
      _
    %1613 = vsyncpa [#allocation3], 1

</llo_original>
